<compile_context>
chip_gen: v5e
topology: v5e:2x2
jax: 0.10.0
libtpu: 0.0.40
codegen_flags: <defaults>
</compile_context>

<pallas_src>
import jax
import jax.numpy as jnp
from jax.experimental import pallas as pl
from jax.experimental.pallas import tpu as pltpu

EPS = 1e-5


def fused_conv_bn_relu_x2_kernel(x_hbm, w1_ref, g1_ref, be1_ref,
                                 w2_hbm, g2_ref, be2_ref, mask_ref,
                                 o_ref, xp_ref, w2_vmem, sems):
    # x_hbm  : (N, H+2, W+2, C) bf16  zero-padded NHWC input (HBM, manual DMA)
    # w*_ref : (3, 3, C, C)     bf16  conv weights (HWIO); w2 arrives via DMA
    # g*/be* : (1, C)           f32   batchnorm gamma / beta
    # mask   : (N*H*(W+2), 1)   f32   1.0 on real columns, 0.0 on pad columns
    # o_ref  : (N, H, W+2, C)   f32   output in the width-padded frame
    # xp_ref : (N, H+2, W+2, C) bf16  padded activation scratch (both layers)
    # w2_vmem: (3, 3, C, C)     bf16  VMEM landing buffer for w2
    N, Hp, Wp, C = xp_ref.shape
    H, W = Hp - 2, Wp - 2
    NHWf = N * H * Wp          # rows of the width-padded output frame
    NHW = N * H * W            # BN population per channel

    # Kick off both manual DMAs immediately; w2's copy overlaps layer-1 compute.
    cp_x = pltpu.make_async_copy(x_hbm, xp_ref, sems.at[0])
    cp_w2 = pltpu.make_async_copy(w2_hbm, w2_vmem, sems.at[1])
    cp_x.start()
    cp_w2.start()

    maskf = mask_ref[...]                                    # (NHWf, 1)

    def conv_bn_relu(w_ref, gamma, beta):
        # Conv in the width-padded frame: for each dw, sum over dh of a plain
        # (NHWf, C) x (C, C) matmul on a slab-sliced (tile-aligned, free) view
        # of xp_ref; the dw offset is one +/-1 row shift of the f32 partial.
        acc = None
        for dw in range(3):
            part = None
            for dh in range(3):
                xs = xp_ref[:, dh:dh + H, :, :].reshape(NHWf, C)
                t = jnp.dot(xs, w_ref[dh, dw],
                            preferred_element_type=jnp.float32)
                part = t if part is None else part + t
            if dw != 1:
                # out[r] needs part[r + dw - 1]  ==  roll(part, 1 - dw)
                part = jnp.roll(part, 1 - dw, axis=0)
            acc = part if acc is None else acc + part         # (NHWf, C) f32

        # Training-mode BN over the NHW valid positions (two-pass variance),
        # then affine + ReLU; pad columns forced back to exactly zero.
        inv_n = 1.0 / float(NHW)
        mean = jnp.sum(acc * maskf, axis=0, keepdims=True) * inv_n     # (1, C)
        centered = (acc - mean) * maskf
        var = jnp.sum(centered * centered, axis=0, keepdims=True) * inv_n
        scale = jax.lax.rsqrt(var + EPS) * gamma
        return jnp.maximum(centered * scale + beta, 0.0) * maskf

    # ---- layer 1 (w1 was auto-copied to VMEM; x DMA must have landed) ------
    cp_x.wait()
    y1 = conv_bn_relu(w1_ref, g1_ref[...], be1_ref[...])
    # The intermediate never leaves VMEM: write it back into the interior of
    # the padded scratch (halo rows stay zero from the input DMA, halo columns
    # are zero thanks to the mask) and run layer 2 off the same buffer.
    xp_ref[:, 1:H + 1, :, :] = y1.reshape(N, H, Wp, C).astype(xp_ref.dtype)

    # ---- layer 2 (its weights were DMA'd while layer 1 was computing) ------
    cp_w2.wait()
    y2 = conv_bn_relu(w2_vmem, g2_ref[...], be2_ref[...])
    o_ref[...] = y2.reshape(N, H, Wp, C)


def forward(x_nchw, params):
    """(Conv3x3 pad=1 -> BatchNorm2d(train) -> ReLU) x 2 in one fused Pallas call."""
    (w1, _b1, g1, be1), (w2, _b2, g2, be2) = params
    N, C, H, W = x_nchw.shape
    Cout = w1.shape[-1]
    assert w1.shape == (3, 3, C, Cout) and w2.shape == (3, 3, Cout, Cout)
    assert C == Cout                       # needed for the shared padded scratch
    Hp, Wp = H + 2, W + 2

    # NCHW -> NHWC, bf16 cast and the zero padding all fuse into one XLA op.
    x_pad = jnp.pad(jnp.transpose(x_nchw, (0, 2, 3, 1)).astype(jnp.bfloat16),
                    ((0, 0), (1, 1), (1, 1), (0, 0)))
    w1b = w1.astype(jnp.bfloat16)
    w2b = w2.astype(jnp.bfloat16)
    # Conv biases are intentionally not passed: training-mode BN subtracts the
    # batch mean, which cancels a per-channel constant bias exactly.

    # 1.0 on real output columns, 0.0 on the two pad columns of the row frame.
    col = jnp.arange(Wp)
    mask = jnp.tile(((col >= 1) & (col <= W)).astype(jnp.float32), (N * H,))
    mask = mask.reshape(N * H * Wp, 1)

    vmem = pl.BlockSpec(memory_space=pltpu.MemorySpace.VMEM)
    hbm = pl.BlockSpec(memory_space=pl.ANY)

    out = pl.pallas_call(
        fused_conv_bn_relu_x2_kernel,
        out_shape=jax.ShapeDtypeStruct((N, H, Wp, Cout), jnp.float32),
        in_specs=[hbm, vmem, vmem, vmem, hbm, vmem, vmem, vmem],
        out_specs=vmem,
        scratch_shapes=[
            pltpu.VMEM((N, Hp, Wp, C), jnp.bfloat16),      # padded activations
            pltpu.VMEM((3, 3, C, Cout), jnp.bfloat16),     # w2 landing buffer
            pltpu.SemaphoreType.DMA((2,)),
        ],
        compiler_params=pltpu.CompilerParams(
            vmem_limit_bytes=48 * 1024 * 1024),
    )(x_pad, w1b,
      g1.reshape(1, Cout).astype(jnp.float32),
      be1.reshape(1, Cout).astype(jnp.float32),
      w2b,
      g2.reshape(1, Cout).astype(jnp.float32),
      be2.reshape(1, Cout).astype(jnp.float32),
      mask)

    out = out[:, :, 1:W + 1, :]                     # strip the pad columns
    return jnp.transpose(out, (0, 3, 1, 2))         # NHWC -> NCHW


def reference_forward(x_nchw, params, matmul_dtype=jnp.float32):
    """Pure-JAX reference: conv(+bias) -> training-mode BN -> ReLU, twice.

    matmul_dtype=bf16 reproduces the kernel's bf16 MXU inputs (f32 accumulate)
    so the strict comparison isolates algorithm bugs from bf16 quantization.
    """
    x = x_nchw
    for (w, b, g, be) in params:
        y = jax.lax.conv_general_dilated(
            x.astype(matmul_dtype), w.astype(matmul_dtype),
            window_strides=(1, 1), padding=((1, 1), (1, 1)),
            dimension_numbers=("NCHW", "HWIO", "NCHW"),
            preferred_element_type=jnp.float32)
        y = y + b[None, :, None, None]
        mean = jnp.mean(y, axis=(0, 2, 3), keepdims=True)
        var = jnp.mean((y - mean) ** 2, axis=(0, 2, 3), keepdims=True)
        y = (y - mean) * jax.lax.rsqrt(var + EPS)
        y = y * g[None, :, None, None] + be[None, :, None, None]
        x = jnp.maximum(y, 0.0)
    return x


if __name__ == "__main__":
    # Module is 1x512x14x14; channels scaled down to 128 for this quick check
    # (still lane-dense; the real 14x14 spatial size is kept).
    N, C, H, W = 1, 128, 14, 14

    key = jax.random.PRNGKey(0)
    ks = jax.random.split(key, 3)
    x_nchw = jax.random.normal(ks[0], (N, C, H, W), jnp.float32)

    def make_layer(k):
        kw, kb, kg, kbe = jax.random.split(k, 4)
        w = 0.05 * jax.random.normal(kw, (3, 3, C, C), jnp.float32)   # HWIO
        b = 0.05 * jax.random.normal(kb, (C,), jnp.float32)
        gamma = 1.0 + 0.1 * jax.random.normal(kg, (C,), jnp.float32)
        beta = 0.1 * jax.random.normal(kbe, (C,), jnp.float32)
        return (w, b, gamma, beta)

    params = (make_layer(ks[1]), make_layer(ks[2]))

    out = jax.block_until_ready(jax.jit(forward)(x_nchw, params))
    assert out.shape == (N, C, H, W)

    # Strict check against a reference using the same bf16 matmul inputs
    # (f32 accumulation), i.e. the same quantization as the kernel.
    ref_bf16 = reference_forward(x_nchw, params, matmul_dtype=jnp.bfloat16)
    assert jnp.allclose(out, ref_bf16, atol=5e-3, rtol=5e-3), \
        float(jnp.max(jnp.abs(out - ref_bf16)))

    # Loose sanity check against the full-f32 reference (bf16 MXU inputs only
    # introduce small quantization noise).
    ref_f32 = reference_forward(x_nchw, params, matmul_dtype=jnp.float32)
    rel = float(jnp.linalg.norm(out - ref_f32) / jnp.linalg.norm(ref_f32))
    assert rel < 0.05, rel

    print("KERNEL_OK")
</pallas_src>

<mosaic_0001>
module attributes {stable_mosaic.version = 11 : i64} {
  func.func @fused_conv_bn_relu_x2_kernel(%arg0: memref<1x16x16x128xbf16, #tpu.memory_space<any>>, %arg1: memref<3x3x128x128xbf16, #tpu.memory_space<vmem>>, %arg2: memref<1x128xf32, #tpu.memory_space<vmem>>, %arg3: memref<1x128xf32, #tpu.memory_space<vmem>>, %arg4: memref<3x3x128x128xbf16, #tpu.memory_space<any>>, %arg5: memref<1x128xf32, #tpu.memory_space<vmem>>, %arg6: memref<1x128xf32, #tpu.memory_space<vmem>>, %arg7: memref<224x1xf32, #tpu.memory_space<vmem>>, %arg8: memref<1x14x16x128xf32, #tpu.memory_space<vmem>>, %arg9: memref<1x16x16x128xbf16, #tpu.memory_space<vmem>>, %arg10: memref<3x3x128x128xbf16, #tpu.memory_space<vmem>>, %arg11: memref<2x!tpu.dma_semaphore, #tpu.memory_space<semaphore_mem>>) attributes {dimension_semantics = [], scalar_prefetch = 0 : i64, scratch_operands = 3 : i64, tpu.core_type = #tpu.core_type<tc>} {
    %c0_i32 = arith.constant 0 : i32
    %0 = tpu.memref_slice %arg11[%c0_i32] : memref<2x!tpu.dma_semaphore, #tpu.memory_space<semaphore_mem>> -> memref<1x!tpu.dma_semaphore, #tpu.memory_space<semaphore_mem>>
    %1 = tpu.memref_squeeze %0 : memref<1x!tpu.dma_semaphore, #tpu.memory_space<semaphore_mem>> -> memref<!tpu.dma_semaphore, #tpu.memory_space<semaphore_mem>>
    tpu.enqueue_dma source(%arg0 : memref<1x16x16x128xbf16, #tpu.memory_space<any>>) target(%arg9 : memref<1x16x16x128xbf16, #tpu.memory_space<vmem>>) target_semaphore(%1 : memref<!tpu.dma_semaphore, #tpu.memory_space<semaphore_mem>>)
    %c1_i32 = arith.constant 1 : i32
    %2 = tpu.memref_slice %arg11[%c1_i32] : memref<2x!tpu.dma_semaphore, #tpu.memory_space<semaphore_mem>> -> memref<1x!tpu.dma_semaphore, #tpu.memory_space<semaphore_mem>>
    %3 = tpu.memref_squeeze %2 : memref<1x!tpu.dma_semaphore, #tpu.memory_space<semaphore_mem>> -> memref<!tpu.dma_semaphore, #tpu.memory_space<semaphore_mem>>
    tpu.enqueue_dma source(%arg4 : memref<3x3x128x128xbf16, #tpu.memory_space<any>>) target(%arg10 : memref<3x3x128x128xbf16, #tpu.memory_space<vmem>>) target_semaphore(%3 : memref<!tpu.dma_semaphore, #tpu.memory_space<semaphore_mem>>)
    %c0 = arith.constant 0 : index
    %c0_0 = arith.constant 0 : index
    %4 = vector.load %arg7[%c0, %c0_0] : memref<224x1xf32, #tpu.memory_space<vmem>>, vector<224x1xf32>
    %c0_i32_1 = arith.constant 0 : i32
    %5 = tpu.memref_slice %arg11[%c0_i32_1] : memref<2x!tpu.dma_semaphore, #tpu.memory_space<semaphore_mem>> -> memref<1x!tpu.dma_semaphore, #tpu.memory_space<semaphore_mem>>
    %6 = tpu.memref_squeeze %5 : memref<1x!tpu.dma_semaphore, #tpu.memory_space<semaphore_mem>> -> memref<!tpu.dma_semaphore, #tpu.memory_space<semaphore_mem>>
    tpu.wait_dma2 semaphore(%6 : memref<!tpu.dma_semaphore, #tpu.memory_space<semaphore_mem>>) src(%arg0 : memref<1x16x16x128xbf16, #tpu.memory_space<any>>) dst(%arg9 : memref<1x16x16x128xbf16, #tpu.memory_space<vmem>>)
    %c0_2 = arith.constant 0 : index
    %c0_3 = arith.constant 0 : index
    %7 = vector.load %arg2[%c0_2, %c0_3] : memref<1x128xf32, #tpu.memory_space<vmem>>, vector<1x128xf32>
    %c0_4 = arith.constant 0 : index
    %c0_5 = arith.constant 0 : index
    %8 = vector.load %arg3[%c0_4, %c0_5] : memref<1x128xf32, #tpu.memory_space<vmem>>, vector<1x128xf32>
    %c0_6 = arith.constant 0 : index
    %c0_7 = arith.constant 0 : index
    %c0_8 = arith.constant 0 : index
    %c0_9 = arith.constant 0 : index
    %9 = vector.load %arg9[%c0_6, %c0_7, %c0_8, %c0_9] : memref<1x16x16x128xbf16, #tpu.memory_space<vmem>>, vector<1x14x16x128xbf16>
    %10 = vector.shape_cast %9 : vector<1x14x16x128xbf16> to vector<224x128xbf16>
    %c0_10 = arith.constant 0 : index
    %c0_11 = arith.constant 0 : index
    %c0_12 = arith.constant 0 : index
    %c0_13 = arith.constant 0 : index
    %11 = vector.load %arg1[%c0_10, %c0_11, %c0_12, %c0_13] : memref<3x3x128x128xbf16, #tpu.memory_space<vmem>>, vector<1x1x128x128xbf16>
    %12 = vector.shape_cast %11 : vector<1x1x128x128xbf16> to vector<128x128xbf16>
    %cst = arith.constant dense<0.000000e+00> : vector<224x128xf32>
    %13 = tpu.matmul %10, %12, %cst {dimension_numbers = #tpu.dot_dimension_numbers<[1], [0], [0], [1], [0, 0, 1, 1], [], []>} : vector<224x128xbf16>, vector<128x128xbf16>, vector<224x128xf32> -> vector<224x128xf32>
    %c0_14 = arith.constant 0 : index
    %c1 = arith.constant 1 : index
    %c0_15 = arith.constant 0 : index
    %c0_16 = arith.constant 0 : index
    %14 = vector.load %arg9[%c0_14, %c1, %c0_15, %c0_16] : memref<1x16x16x128xbf16, #tpu.memory_space<vmem>>, vector<1x14x16x128xbf16>
    %15 = vector.shape_cast %14 : vector<1x14x16x128xbf16> to vector<224x128xbf16>
    %c1_17 = arith.constant 1 : index
    %c0_18 = arith.constant 0 : index
    %c0_19 = arith.constant 0 : index
    %c0_20 = arith.constant 0 : index
    %16 = vector.load %arg1[%c1_17, %c0_18, %c0_19, %c0_20] : memref<3x3x128x128xbf16, #tpu.memory_space<vmem>>, vector<1x1x128x128xbf16>
    %17 = vector.shape_cast %16 : vector<1x1x128x128xbf16> to vector<128x128xbf16>
    %cst_21 = arith.constant dense<0.000000e+00> : vector<224x128xf32>
    %18 = tpu.matmul %15, %17, %cst_21 {dimension_numbers = #tpu.dot_dimension_numbers<[1], [0], [0], [1], [0, 0, 1, 1], [], []>} : vector<224x128xbf16>, vector<128x128xbf16>, vector<224x128xf32> -> vector<224x128xf32>
    %19 = arith.addf %13, %18 : vector<224x128xf32>
    %c0_22 = arith.constant 0 : index
    %c2 = arith.constant 2 : index
    %c0_23 = arith.constant 0 : index
    %c0_24 = arith.constant 0 : index
    %20 = vector.load %arg9[%c0_22, %c2, %c0_23, %c0_24] : memref<1x16x16x128xbf16, #tpu.memory_space<vmem>>, vector<1x14x16x128xbf16>
    %21 = vector.shape_cast %20 : vector<1x14x16x128xbf16> to vector<224x128xbf16>
    %c2_25 = arith.constant 2 : index
    %c0_26 = arith.constant 0 : index
    %c0_27 = arith.constant 0 : index
    %c0_28 = arith.constant 0 : index
    %22 = vector.load %arg1[%c2_25, %c0_26, %c0_27, %c0_28] : memref<3x3x128x128xbf16, #tpu.memory_space<vmem>>, vector<1x1x128x128xbf16>
    %23 = vector.shape_cast %22 : vector<1x1x128x128xbf16> to vector<128x128xbf16>
    %cst_29 = arith.constant dense<0.000000e+00> : vector<224x128xf32>
    %24 = tpu.matmul %21, %23, %cst_29 {dimension_numbers = #tpu.dot_dimension_numbers<[1], [0], [0], [1], [0, 0, 1, 1], [], []>} : vector<224x128xbf16>, vector<128x128xbf16>, vector<224x128xf32> -> vector<224x128xf32>
    %25 = arith.addf %19, %24 : vector<224x128xf32>
    %26 = vector.extract_strided_slice %25 {offsets = [223, 0], sizes = [1, 128], strides = [1, 1]} : vector<224x128xf32> to vector<1x128xf32>
    %27 = vector.extract_strided_slice %25 {offsets = [0, 0], sizes = [223, 128], strides = [1, 1]} : vector<224x128xf32> to vector<223x128xf32>
    %28 = tpu.concatenate %26, %27 in 0 : vector<1x128xf32>, vector<223x128xf32> -> vector<224x128xf32>
    %c0_30 = arith.constant 0 : index
    %c0_31 = arith.constant 0 : index
    %c0_32 = arith.constant 0 : index
    %c0_33 = arith.constant 0 : index
    %29 = vector.load %arg9[%c0_30, %c0_31, %c0_32, %c0_33] : memref<1x16x16x128xbf16, #tpu.memory_space<vmem>>, vector<1x14x16x128xbf16>
    %30 = vector.shape_cast %29 : vector<1x14x16x128xbf16> to vector<224x128xbf16>
    %c0_34 = arith.constant 0 : index
    %c1_35 = arith.constant 1 : index
    %c0_36 = arith.constant 0 : index
    %c0_37 = arith.constant 0 : index
    %31 = vector.load %arg1[%c0_34, %c1_35, %c0_36, %c0_37] : memref<3x3x128x128xbf16, #tpu.memory_space<vmem>>, vector<1x1x128x128xbf16>
    %32 = vector.shape_cast %31 : vector<1x1x128x128xbf16> to vector<128x128xbf16>
    %cst_38 = arith.constant dense<0.000000e+00> : vector<224x128xf32>
    %33 = tpu.matmul %30, %32, %cst_38 {dimension_numbers = #tpu.dot_dimension_numbers<[1], [0], [0], [1], [0, 0, 1, 1], [], []>} : vector<224x128xbf16>, vector<128x128xbf16>, vector<224x128xf32> -> vector<224x128xf32>
    %c0_39 = arith.constant 0 : index
    %c1_40 = arith.constant 1 : index
    %c0_41 = arith.constant 0 : index
    %c0_42 = arith.constant 0 : index
    %34 = vector.load %arg9[%c0_39, %c1_40, %c0_41, %c0_42] : memref<1x16x16x128xbf16, #tpu.memory_space<vmem>>, vector<1x14x16x128xbf16>
    %35 = vector.shape_cast %34 : vector<1x14x16x128xbf16> to vector<224x128xbf16>
    %c1_43 = arith.constant 1 : index
    %c1_44 = arith.constant 1 : index
    %c0_45 = arith.constant 0 : index
    %c0_46 = arith.constant 0 : index
    %36 = vector.load %arg1[%c1_43, %c1_44, %c0_45, %c0_46] : memref<3x3x128x128xbf16, #tpu.memory_space<vmem>>, vector<1x1x128x128xbf16>
    %37 = vector.shape_cast %36 : vector<1x1x128x128xbf16> to vector<128x128xbf16>
    %cst_47 = arith.constant dense<0.000000e+00> : vector<224x128xf32>
    %38 = tpu.matmul %35, %37, %cst_47 {dimension_numbers = #tpu.dot_dimension_numbers<[1], [0], [0], [1], [0, 0, 1, 1], [], []>} : vector<224x128xbf16>, vector<128x128xbf16>, vector<224x128xf32> -> vector<224x128xf32>
    %39 = arith.addf %33, %38 : vector<224x128xf32>
    %c0_48 = arith.constant 0 : index
    %c2_49 = arith.constant 2 : index
    %c0_50 = arith.constant 0 : index
    %c0_51 = arith.constant 0 : index
    %40 = vector.load %arg9[%c0_48, %c2_49, %c0_50, %c0_51] : memref<1x16x16x128xbf16, #tpu.memory_space<vmem>>, vector<1x14x16x128xbf16>
    %41 = vector.shape_cast %40 : vector<1x14x16x128xbf16> to vector<224x128xbf16>
    %c2_52 = arith.constant 2 : index
    %c1_53 = arith.constant 1 : index
    %c0_54 = arith.constant 0 : index
    %c0_55 = arith.constant 0 : index
    %42 = vector.load %arg1[%c2_52, %c1_53, %c0_54, %c0_55] : memref<3x3x128x128xbf16, #tpu.memory_space<vmem>>, vector<1x1x128x128xbf16>
    %43 = vector.shape_cast %42 : vector<1x1x128x128xbf16> to vector<128x128xbf16>
    %cst_56 = arith.constant dense<0.000000e+00> : vector<224x128xf32>
    %44 = tpu.matmul %41, %43, %cst_56 {dimension_numbers = #tpu.dot_dimension_numbers<[1], [0], [0], [1], [0, 0, 1, 1], [], []>} : vector<224x128xbf16>, vector<128x128xbf16>, vector<224x128xf32> -> vector<224x128xf32>
    %45 = arith.addf %39, %44 : vector<224x128xf32>
    %46 = arith.addf %28, %45 : vector<224x128xf32>
    %c0_57 = arith.constant 0 : index
    %c0_58 = arith.constant 0 : index
    %c0_59 = arith.constant 0 : index
    %c0_60 = arith.constant 0 : index
    %47 = vector.load %arg9[%c0_57, %c0_58, %c0_59, %c0_60] : memref<1x16x16x128xbf16, #tpu.memory_space<vmem>>, vector<1x14x16x128xbf16>
    %48 = vector.shape_cast %47 : vector<1x14x16x128xbf16> to vector<224x128xbf16>
    %c0_61 = arith.constant 0 : index
    %c2_62 = arith.constant 2 : index
    %c0_63 = arith.constant 0 : index
    %c0_64 = arith.constant 0 : index
    %49 = vector.load %arg1[%c0_61, %c2_62, %c0_63, %c0_64] : memref<3x3x128x128xbf16, #tpu.memory_space<vmem>>, vector<1x1x128x128xbf16>
    %50 = vector.shape_cast %49 : vector<1x1x128x128xbf16> to vector<128x128xbf16>
    %cst_65 = arith.constant dense<0.000000e+00> : vector<224x128xf32>
    %51 = tpu.matmul %48, %50, %cst_65 {dimension_numbers = #tpu.dot_dimension_numbers<[1], [0], [0], [1], [0, 0, 1, 1], [], []>} : vector<224x128xbf16>, vector<128x128xbf16>, vector<224x128xf32> -> vector<224x128xf32>
    %c0_66 = arith.constant 0 : index
    %c1_67 = arith.constant 1 : index
    %c0_68 = arith.constant 0 : index
    %c0_69 = arith.constant 0 : index
    %52 = vector.load %arg9[%c0_66, %c1_67, %c0_68, %c0_69] : memref<1x16x16x128xbf16, #tpu.memory_space<vmem>>, vector<1x14x16x128xbf16>
    %53 = vector.shape_cast %52 : vector<1x14x16x128xbf16> to vector<224x128xbf16>
    %c1_70 = arith.constant 1 : index
    %c2_71 = arith.constant 2 : index
    %c0_72 = arith.constant 0 : index
    %c0_73 = arith.constant 0 : index
    %54 = vector.load %arg1[%c1_70, %c2_71, %c0_72, %c0_73] : memref<3x3x128x128xbf16, #tpu.memory_space<vmem>>, vector<1x1x128x128xbf16>
    %55 = vector.shape_cast %54 : vector<1x1x128x128xbf16> to vector<128x128xbf16>
    %cst_74 = arith.constant dense<0.000000e+00> : vector<224x128xf32>
    %56 = tpu.matmul %53, %55, %cst_74 {dimension_numbers = #tpu.dot_dimension_numbers<[1], [0], [0], [1], [0, 0, 1, 1], [], []>} : vector<224x128xbf16>, vector<128x128xbf16>, vector<224x128xf32> -> vector<224x128xf32>
    %57 = arith.addf %51, %56 : vector<224x128xf32>
    %c0_75 = arith.constant 0 : index
    %c2_76 = arith.constant 2 : index
    %c0_77 = arith.constant 0 : index
    %c0_78 = arith.constant 0 : index
    %58 = vector.load %arg9[%c0_75, %c2_76, %c0_77, %c0_78] : memref<1x16x16x128xbf16, #tpu.memory_space<vmem>>, vector<1x14x16x128xbf16>
    %59 = vector.shape_cast %58 : vector<1x14x16x128xbf16> to vector<224x128xbf16>
    %c2_79 = arith.constant 2 : index
    %c2_80 = arith.constant 2 : index
    %c0_81 = arith.constant 0 : index
    %c0_82 = arith.constant 0 : index
    %60 = vector.load %arg1[%c2_79, %c2_80, %c0_81, %c0_82] : memref<3x3x128x128xbf16, #tpu.memory_space<vmem>>, vector<1x1x128x128xbf16>
    %61 = vector.shape_cast %60 : vector<1x1x128x128xbf16> to vector<128x128xbf16>
    %cst_83 = arith.constant dense<0.000000e+00> : vector<224x128xf32>
    %62 = tpu.matmul %59, %61, %cst_83 {dimension_numbers = #tpu.dot_dimension_numbers<[1], [0], [0], [1], [0, 0, 1, 1], [], []>} : vector<224x128xbf16>, vector<128x128xbf16>, vector<224x128xf32> -> vector<224x128xf32>
    %63 = arith.addf %57, %62 : vector<224x128xf32>
    %64 = vector.extract_strided_slice %63 {offsets = [1, 0], sizes = [223, 128], strides = [1, 1]} : vector<224x128xf32> to vector<223x128xf32>
    %65 = vector.extract_strided_slice %63 {offsets = [0, 0], sizes = [1, 128], strides = [1, 1]} : vector<224x128xf32> to vector<1x128xf32>
    %66 = tpu.concatenate %64, %65 in 0 : vector<223x128xf32>, vector<1x128xf32> -> vector<224x128xf32>
    %67 = arith.addf %46, %66 : vector<224x128xf32>
    %68 = vector.broadcast %4 : vector<224x1xf32> to vector<224x128xf32>
    %69 = arith.mulf %67, %68 : vector<224x128xf32>
    %cst_84 = arith.constant dense<0.000000e+00> : vector<128xf32>
    %70 = vector.multi_reduction <add>, %69, %cst_84 [0] : vector<224x128xf32> to vector<128xf32>
    %71 = vector.shape_cast %70 : vector<128xf32> to vector<1x128xf32>
    %cst_85 = arith.constant 0.00510204071 : f32
    %72 = vector.broadcast %cst_85 : f32 to vector<1x128xf32>
    %73 = arith.mulf %71, %72 : vector<1x128xf32>
    %74 = vector.broadcast %73 : vector<1x128xf32> to vector<224x128xf32>
    %75 = arith.subf %67, %74 : vector<224x128xf32>
    %76 = vector.broadcast %4 : vector<224x1xf32> to vector<224x128xf32>
    %77 = arith.mulf %75, %76 : vector<224x128xf32>
    %78 = arith.mulf %77, %77 : vector<224x128xf32>
    %cst_86 = arith.constant dense<0.000000e+00> : vector<128xf32>
    %79 = vector.multi_reduction <add>, %78, %cst_86 [0] : vector<224x128xf32> to vector<128xf32>
    %80 = vector.shape_cast %79 : vector<128xf32> to vector<1x128xf32>
    %cst_87 = arith.constant 0.00510204071 : f32
    %81 = vector.broadcast %cst_87 : f32 to vector<1x128xf32>
    %82 = arith.mulf %80, %81 : vector<1x128xf32>
    %cst_88 = arith.constant 9.99999974E-6 : f32
    %83 = vector.broadcast %cst_88 : f32 to vector<1x128xf32>
    %84 = arith.addf %82, %83 : vector<1x128xf32>
    %85 = math.rsqrt %84 : vector<1x128xf32>
    %86 = arith.mulf %85, %7 : vector<1x128xf32>
    %87 = vector.broadcast %86 : vector<1x128xf32> to vector<224x128xf32>
    %88 = arith.mulf %77, %87 : vector<224x128xf32>
    %89 = vector.broadcast %8 : vector<1x128xf32> to vector<224x128xf32>
    %90 = arith.addf %88, %89 : vector<224x128xf32>
    %cst_89 = arith.constant 0.000000e+00 : f32
    %91 = vector.broadcast %cst_89 : f32 to vector<224x128xf32>
    %92 = arith.maximumf %90, %91 : vector<224x128xf32>
    %93 = vector.broadcast %4 : vector<224x1xf32> to vector<224x128xf32>
    %94 = arith.mulf %92, %93 : vector<224x128xf32>
    %95 = vector.shape_cast %94 : vector<224x128xf32> to vector<1x14x16x128xf32>
    %96 = arith.truncf %95 : vector<1x14x16x128xf32> to vector<1x14x16x128xbf16>
    %c0_90 = arith.constant 0 : index
    %c1_91 = arith.constant 1 : index
    %c0_92 = arith.constant 0 : index
    %c0_93 = arith.constant 0 : index
    %97 = vector.load %arg9[%c0_90, %c1_91, %c0_92, %c0_93] : memref<1x16x16x128xbf16, #tpu.memory_space<vmem>>, vector<1x14x16x128xbf16>
    tpu.vector_store %arg9[%c0_90, %c1_91, %c0_92, %c0_93], %96 {strides = array<i32>} : memref<1x16x16x128xbf16, #tpu.memory_space<vmem>>, vector<1x14x16x128xbf16>,
    %c1_i32_94 = arith.constant 1 : i32
    %98 = tpu.memref_slice %arg11[%c1_i32_94] : memref<2x!tpu.dma_semaphore, #tpu.memory_space<semaphore_mem>> -> memref<1x!tpu.dma_semaphore, #tpu.memory_space<semaphore_mem>>
    %99 = tpu.memref_squeeze %98 : memref<1x!tpu.dma_semaphore, #tpu.memory_space<semaphore_mem>> -> memref<!tpu.dma_semaphore, #tpu.memory_space<semaphore_mem>>
    tpu.wait_dma2 semaphore(%99 : memref<!tpu.dma_semaphore, #tpu.memory_space<semaphore_mem>>) src(%arg4 : memref<3x3x128x128xbf16, #tpu.memory_space<any>>) dst(%arg10 : memref<3x3x128x128xbf16, #tpu.memory_space<vmem>>)
    %c0_95 = arith.constant 0 : index
    %c0_96 = arith.constant 0 : index
    %100 = vector.load %arg5[%c0_95, %c0_96] : memref<1x128xf32, #tpu.memory_space<vmem>>, vector<1x128xf32>
    %c0_97 = arith.constant 0 : index
    %c0_98 = arith.constant 0 : index
    %101 = vector.load %arg6[%c0_97, %c0_98] : memref<1x128xf32, #tpu.memory_space<vmem>>, vector<1x128xf32>
    %c0_99 = arith.constant 0 : index
    %c0_100 = arith.constant 0 : index
    %c0_101 = arith.constant 0 : index
    %c0_102 = arith.constant 0 : index
    %102 = vector.load %arg9[%c0_99, %c0_100, %c0_101, %c0_102] : memref<1x16x16x128xbf16, #tpu.memory_space<vmem>>, vector<1x14x16x128xbf16>
    %103 = vector.shape_cast %102 : vector<1x14x16x128xbf16> to vector<224x128xbf16>
    %c0_103 = arith.constant 0 : index
    %c0_104 = arith.constant 0 : index
    %c0_105 = arith.constant 0 : index
    %c0_106 = arith.constant 0 : index
    %104 = vector.load %arg10[%c0_103, %c0_104, %c0_105, %c0_106] : memref<3x3x128x128xbf16, #tpu.memory_space<vmem>>, vector<1x1x128x128xbf16>
    %105 = vector.shape_cast %104 : vector<1x1x128x128xbf16> to vector<128x128xbf16>
    %cst_107 = arith.constant dense<0.000000e+00> : vector<224x128xf32>
    %106 = tpu.matmul %103, %105, %cst_107 {dimension_numbers = #tpu.dot_dimension_numbers<[1], [0], [0], [1], [0, 0, 1, 1], [], []>} : vector<224x128xbf16>, vector<128x128xbf16>, vector<224x128xf32> -> vector<224x128xf32>
    %c0_108 = arith.constant 0 : index
    %c1_109 = arith.constant 1 : index
    %c0_110 = arith.constant 0 : index
    %c0_111 = arith.constant 0 : index
    %107 = vector.load %arg9[%c0_108, %c1_109, %c0_110, %c0_111] : memref<1x16x16x128xbf16, #tpu.memory_space<vmem>>, vector<1x14x16x128xbf16>
    %108 = vector.shape_cast %107 : vector<1x14x16x128xbf16> to vector<224x128xbf16>
    %c1_112 = arith.constant 1 : index
    %c0_113 = arith.constant 0 : index
    %c0_114 = arith.constant 0 : index
    %c0_115 = arith.constant 0 : index
    %109 = vector.load %arg10[%c1_112, %c0_113, %c0_114, %c0_115] : memref<3x3x128x128xbf16, #tpu.memory_space<vmem>>, vector<1x1x128x128xbf16>
    %110 = vector.shape_cast %109 : vector<1x1x128x128xbf16> to vector<128x128xbf16>
    %cst_116 = arith.constant dense<0.000000e+00> : vector<224x128xf32>
    %111 = tpu.matmul %108, %110, %cst_116 {dimension_numbers = #tpu.dot_dimension_numbers<[1], [0], [0], [1], [0, 0, 1, 1], [], []>} : vector<224x128xbf16>, vector<128x128xbf16>, vector<224x128xf32> -> vector<224x128xf32>
    %112 = arith.addf %106, %111 : vector<224x128xf32>
    %c0_117 = arith.constant 0 : index
    %c2_118 = arith.constant 2 : index
    %c0_119 = arith.constant 0 : index
    %c0_120 = arith.constant 0 : index
    %113 = vector.load %arg9[%c0_117, %c2_118, %c0_119, %c0_120] : memref<1x16x16x128xbf16, #tpu.memory_space<vmem>>, vector<1x14x16x128xbf16>
    %114 = vector.shape_cast %113 : vector<1x14x16x128xbf16> to vector<224x128xbf16>
    %c2_121 = arith.constant 2 : index
    %c0_122 = arith.constant 0 : index
    %c0_123 = arith.constant 0 : index
    %c0_124 = arith.constant 0 : index
    %115 = vector.load %arg10[%c2_121, %c0_122, %c0_123, %c0_124] : memref<3x3x128x128xbf16, #tpu.memory_space<vmem>>, vector<1x1x128x128xbf16>
    %116 = vector.shape_cast %115 : vector<1x1x128x128xbf16> to vector<128x128xbf16>
    %cst_125 = arith.constant dense<0.000000e+00> : vector<224x128xf32>
    %117 = tpu.matmul %114, %116, %cst_125 {dimension_numbers = #tpu.dot_dimension_numbers<[1], [0], [0], [1], [0, 0, 1, 1], [], []>} : vector<224x128xbf16>, vector<128x128xbf16>, vector<224x128xf32> -> vector<224x128xf32>
    %118 = arith.addf %112, %117 : vector<224x128xf32>
    %119 = vector.extract_strided_slice %118 {offsets = [223, 0], sizes = [1, 128], strides = [1, 1]} : vector<224x128xf32> to vector<1x128xf32>
    %120 = vector.extract_strided_slice %118 {offsets = [0, 0], sizes = [223, 128], strides = [1, 1]} : vector<224x128xf32> to vector<223x128xf32>
    %121 = tpu.concatenate %119, %120 in 0 : vector<1x128xf32>, vector<223x128xf32> -> vector<224x128xf32>
    %c0_126 = arith.constant 0 : index
    %c0_127 = arith.constant 0 : index
    %c0_128 = arith.constant 0 : index
    %c0_129 = arith.constant 0 : index
    %122 = vector.load %arg9[%c0_126, %c0_127, %c0_128, %c0_129] : memref<1x16x16x128xbf16, #tpu.memory_space<vmem>>, vector<1x14x16x128xbf16>
    %123 = vector.shape_cast %122 : vector<1x14x16x128xbf16> to vector<224x128xbf16>
    %c0_130 = arith.constant 0 : index
    %c1_131 = arith.constant 1 : index
    %c0_132 = arith.constant 0 : index
    %c0_133 = arith.constant 0 : index
    %124 = vector.load %arg10[%c0_130, %c1_131, %c0_132, %c0_133] : memref<3x3x128x128xbf16, #tpu.memory_space<vmem>>, vector<1x1x128x128xbf16>
    %125 = vector.shape_cast %124 : vector<1x1x128x128xbf16> to vector<128x128xbf16>
    %cst_134 = arith.constant dense<0.000000e+00> : vector<224x128xf32>
    %126 = tpu.matmul %123, %125, %cst_134 {dimension_numbers = #tpu.dot_dimension_numbers<[1], [0], [0], [1], [0, 0, 1, 1], [], []>} : vector<224x128xbf16>, vector<128x128xbf16>, vector<224x128xf32> -> vector<224x128xf32>
    %c0_135 = arith.constant 0 : index
    %c1_136 = arith.constant 1 : index
    %c0_137 = arith.constant 0 : index
    %c0_138 = arith.constant 0 : index
    %127 = vector.load %arg9[%c0_135, %c1_136, %c0_137, %c0_138] : memref<1x16x16x128xbf16, #tpu.memory_space<vmem>>, vector<1x14x16x128xbf16>
    %128 = vector.shape_cast %127 : vector<1x14x16x128xbf16> to vector<224x128xbf16>
    %c1_139 = arith.constant 1 : index
    %c1_140 = arith.constant 1 : index
    %c0_141 = arith.constant 0 : index
    %c0_142 = arith.constant 0 : index
    %129 = vector.load %arg10[%c1_139, %c1_140, %c0_141, %c0_142] : memref<3x3x128x128xbf16, #tpu.memory_space<vmem>>, vector<1x1x128x128xbf16>
    %130 = vector.shape_cast %129 : vector<1x1x128x128xbf16> to vector<128x128xbf16>
    %cst_143 = arith.constant dense<0.000000e+00> : vector<224x128xf32>
    %131 = tpu.matmul %128, %130, %cst_143 {dimension_numbers = #tpu.dot_dimension_numbers<[1], [0], [0], [1], [0, 0, 1, 1], [], []>} : vector<224x128xbf16>, vector<128x128xbf16>, vector<224x128xf32> -> vector<224x128xf32>
    %132 = arith.addf %126, %131 : vector<224x128xf32>
    %c0_144 = arith.constant 0 : index
    %c2_145 = arith.constant 2 : index
    %c0_146 = arith.constant 0 : index
    %c0_147 = arith.constant 0 : index
    %133 = vector.load %arg9[%c0_144, %c2_145, %c0_146, %c0_147] : memref<1x16x16x128xbf16, #tpu.memory_space<vmem>>, vector<1x14x16x128xbf16>
    %134 = vector.shape_cast %133 : vector<1x14x16x128xbf16> to vector<224x128xbf16>
    %c2_148 = arith.constant 2 : index
    %c1_149 = arith.constant 1 : index
    %c0_150 = arith.constant 0 : index
    %c0_151 = arith.constant 0 : index
    %135 = vector.load %arg10[%c2_148, %c1_149, %c0_150, %c0_151] : memref<3x3x128x128xbf16, #tpu.memory_space<vmem>>, vector<1x1x128x128xbf16>
    %136 = vector.shape_cast %135 : vector<1x1x128x128xbf16> to vector<128x128xbf16>
    %cst_152 = arith.constant dense<0.000000e+00> : vector<224x128xf32>
    %137 = tpu.matmul %134, %136, %cst_152 {dimension_numbers = #tpu.dot_dimension_numbers<[1], [0], [0], [1], [0, 0, 1, 1], [], []>} : vector<224x128xbf16>, vector<128x128xbf16>, vector<224x128xf32> -> vector<224x128xf32>
    %138 = arith.addf %132, %137 : vector<224x128xf32>
    %139 = arith.addf %121, %138 : vector<224x128xf32>
    %c0_153 = arith.constant 0 : index
    %c0_154 = arith.constant 0 : index
    %c0_155 = arith.constant 0 : index
    %c0_156 = arith.constant 0 : index
    %140 = vector.load %arg9[%c0_153, %c0_154, %c0_155, %c0_156] : memref<1x16x16x128xbf16, #tpu.memory_space<vmem>>, vector<1x14x16x128xbf16>
    %141 = vector.shape_cast %140 : vector<1x14x16x128xbf16> to vector<224x128xbf16>
    %c0_157 = arith.constant 0 : index
    %c2_158 = arith.constant 2 : index
    %c0_159 = arith.constant 0 : index
    %c0_160 = arith.constant 0 : index
    %142 = vector.load %arg10[%c0_157, %c2_158, %c0_159, %c0_160] : memref<3x3x128x128xbf16, #tpu.memory_space<vmem>>, vector<1x1x128x128xbf16>
    %143 = vector.shape_cast %142 : vector<1x1x128x128xbf16> to vector<128x128xbf16>
    %cst_161 = arith.constant dense<0.000000e+00> : vector<224x128xf32>
    %144 = tpu.matmul %141, %143, %cst_161 {dimension_numbers = #tpu.dot_dimension_numbers<[1], [0], [0], [1], [0, 0, 1, 1], [], []>} : vector<224x128xbf16>, vector<128x128xbf16>, vector<224x128xf32> -> vector<224x128xf32>
    %c0_162 = arith.constant 0 : index
    %c1_163 = arith.constant 1 : index
    %c0_164 = arith.constant 0 : index
    %c0_165 = arith.constant 0 : index
    %145 = vector.load %arg9[%c0_162, %c1_163, %c0_164, %c0_165] : memref<1x16x16x128xbf16, #tpu.memory_space<vmem>>, vector<1x14x16x128xbf16>
    %146 = vector.shape_cast %145 : vector<1x14x16x128xbf16> to vector<224x128xbf16>
    %c1_166 = arith.constant 1 : index
    %c2_167 = arith.constant 2 : index
    %c0_168 = arith.constant 0 : index
    %c0_169 = arith.constant 0 : index
    %147 = vector.load %arg10[%c1_166, %c2_167, %c0_168, %c0_169] : memref<3x3x128x128xbf16, #tpu.memory_space<vmem>>, vector<1x1x128x128xbf16>
    %148 = vector.shape_cast %147 : vector<1x1x128x128xbf16> to vector<128x128xbf16>
    %cst_170 = arith.constant dense<0.000000e+00> : vector<224x128xf32>
    %149 = tpu.matmul %146, %148, %cst_170 {dimension_numbers = #tpu.dot_dimension_numbers<[1], [0], [0], [1], [0, 0, 1, 1], [], []>} : vector<224x128xbf16>, vector<128x128xbf16>, vector<224x128xf32> -> vector<224x128xf32>
    %150 = arith.addf %144, %149 : vector<224x128xf32>
    %c0_171 = arith.constant 0 : index
    %c2_172 = arith.constant 2 : index
    %c0_173 = arith.constant 0 : index
    %c0_174 = arith.constant 0 : index
    %151 = vector.load %arg9[%c0_171, %c2_172, %c0_173, %c0_174] : memref<1x16x16x128xbf16, #tpu.memory_space<vmem>>, vector<1x14x16x128xbf16>
    %152 = vector.shape_cast %151 : vector<1x14x16x128xbf16> to vector<224x128xbf16>
    %c2_175 = arith.constant 2 : index
    %c2_176 = arith.constant 2 : index
    %c0_177 = arith.constant 0 : index
    %c0_178 = arith.constant 0 : index
    %153 = vector.load %arg10[%c2_175, %c2_176, %c0_177, %c0_178] : memref<3x3x128x128xbf16, #tpu.memory_space<vmem>>, vector<1x1x128x128xbf16>
    %154 = vector.shape_cast %153 : vector<1x1x128x128xbf16> to vector<128x128xbf16>
    %cst_179 = arith.constant dense<0.000000e+00> : vector<224x128xf32>
    %155 = tpu.matmul %152, %154, %cst_179 {dimension_numbers = #tpu.dot_dimension_numbers<[1], [0], [0], [1], [0, 0, 1, 1], [], []>} : vector<224x128xbf16>, vector<128x128xbf16>, vector<224x128xf32> -> vector<224x128xf32>
    %156 = arith.addf %150, %155 : vector<224x128xf32>
    %157 = vector.extract_strided_slice %156 {offsets = [1, 0], sizes = [223, 128], strides = [1, 1]} : vector<224x128xf32> to vector<223x128xf32>
    %158 = vector.extract_strided_slice %156 {offsets = [0, 0], sizes = [1, 128], strides = [1, 1]} : vector<224x128xf32> to vector<1x128xf32>
    %159 = tpu.concatenate %157, %158 in 0 : vector<223x128xf32>, vector<1x128xf32> -> vector<224x128xf32>
    %160 = arith.addf %139, %159 : vector<224x128xf32>
    %161 = vector.broadcast %4 : vector<224x1xf32> to vector<224x128xf32>
    %162 = arith.mulf %160, %161 : vector<224x128xf32>
    %cst_180 = arith.constant dense<0.000000e+00> : vector<128xf32>
    %163 = vector.multi_reduction <add>, %162, %cst_180 [0] : vector<224x128xf32> to vector<128xf32>
    %164 = vector.shape_cast %163 : vector<128xf32> to vector<1x128xf32>
    %cst_181 = arith.constant 0.00510204071 : f32
    %165 = vector.broadcast %cst_181 : f32 to vector<1x128xf32>
    %166 = arith.mulf %164, %165 : vector<1x128xf32>
    %167 = vector.broadcast %166 : vector<1x128xf32> to vector<224x128xf32>
    %168 = arith.subf %160, %167 : vector<224x128xf32>
    %169 = vector.broadcast %4 : vector<224x1xf32> to vector<224x128xf32>
    %170 = arith.mulf %168, %169 : vector<224x128xf32>
    %171 = arith.mulf %170, %170 : vector<224x128xf32>
    %cst_182 = arith.constant dense<0.000000e+00> : vector<128xf32>
    %172 = vector.multi_reduction <add>, %171, %cst_182 [0] : vector<224x128xf32> to vector<128xf32>
    %173 = vector.shape_cast %172 : vector<128xf32> to vector<1x128xf32>
    %cst_183 = arith.constant 0.00510204071 : f32
    %174 = vector.broadcast %cst_183 : f32 to vector<1x128xf32>
    %175 = arith.mulf %173, %174 : vector<1x128xf32>
    %cst_184 = arith.constant 9.99999974E-6 : f32
    %176 = vector.broadcast %cst_184 : f32 to vector<1x128xf32>
    %177 = arith.addf %175, %176 : vector<1x128xf32>
    %178 = math.rsqrt %177 : vector<1x128xf32>
    %179 = arith.mulf %178, %100 : vector<1x128xf32>
    %180 = vector.broadcast %179 : vector<1x128xf32> to vector<224x128xf32>
    %181 = arith.mulf %170, %180 : vector<224x128xf32>
    %182 = vector.broadcast %101 : vector<1x128xf32> to vector<224x128xf32>
    %183 = arith.addf %181, %182 : vector<224x128xf32>
    %cst_185 = arith.constant 0.000000e+00 : f32
    %184 = vector.broadcast %cst_185 : f32 to vector<224x128xf32>
    %185 = arith.maximumf %183, %184 : vector<224x128xf32>
    %186 = vector.broadcast %4 : vector<224x1xf32> to vector<224x128xf32>
    %187 = arith.mulf %185, %186 : vector<224x128xf32>
    %188 = vector.shape_cast %187 : vector<224x128xf32> to vector<1x14x16x128xf32>
    %c0_186 = arith.constant 0 : index
    %c0_187 = arith.constant 0 : index
    %c0_188 = arith.constant 0 : index
    %c0_189 = arith.constant 0 : index
    %189 = vector.load %arg8[%c0_186, %c0_187, %c0_188, %c0_189] : memref<1x14x16x128xf32, #tpu.memory_space<vmem>>, vector<1x14x16x128xf32>
    tpu.vector_store %arg8[%c0_186, %c0_187, %c0_188, %c0_189], %188 {strides = array<i32>} : memref<1x14x16x128xf32, #tpu.memory_space<vmem>>, vector<1x14x16x128xf32>,
    return
  }
}

</mosaic_0001>

<llo_original>
// kernel: tile.8
$region0: #{tile.8}
  #allocation0 [shape = 's32[1]{0}', space=sflag, size = 0x4, scoped, tag = 'scoped memory for tile.8']
  %s0 = inlined_call_operand.vmem [shape: f32[16], index: 0, kind: input, shape index: {}]
  %s1 = inlined_call_operand.vmem [shape: f32[14,16], index: 1, kind: output, shape index: {}]
  // Predicated region
  $region2: #{tile.8} parent=0 // pred_check
    _
  $region3: #{tile.8} parent=0 // pred_check_branch
    %3 = sbr.rel (0) target = $region5
  $region4: #{tile.8} parent=0 // pred_region
    _
  $region5: #{tile.8} parent=0 // pred_fallthru
    _
  %v4 = vld [vmem:[%s0] ss:$0 sm:$0xff]
  %5 = vst [vmem:[%s1] sm:$0xff] %v4
  %s6 = scalar_lea.vmem %s1, 8
  %7 = vst [vmem:[%s6] sm:$0xff] %v4

// kernel: tile.0
$region0: #{tile.0}
  %s0 = inlined_call_operand.vmem [shape: f32[14,16], index: 0, kind: input, shape index: {}]
  %s1 = inlined_call_operand.vmem [shape: f32[224,1], index: 1, kind: output, shape index: {}]
  %v2 = vld [vmem:[%s0] sm:$0xff]
  %vm3 = vcmask 7168
  %4 = vst.msk [vmem:[%s1] ss:$16 sm:$0x3] %vm3, %v2
  %5 = vst.msk [vmem:[%s1] ss:$16 sm:$0xc] %vm3, %v2
  %6 = vst.msk [vmem:[%s1] ss:$16 sm:$0x30] %vm3, %v2
  %7 = vst.msk [vmem:[%s1] ss:$16 sm:$0xc0] %vm3, %v2
  %s8 = scalar_lea.vmem %s0, 8
  %v9 = vld [vmem:[%s8] sm:$0x3f]
  %vm10 = vcmask 7168
  %s11 = scalar_lea.vmem %s1, 128
  %12 = vst.msk [vmem:[%s11] ss:$16 sm:$0x3] %vm10, %v9
  %s13 = scalar_lea.vmem %s1, 128
  %14 = vst.msk [vmem:[%s13] ss:$16 sm:$0xc] %vm10, %v9
  %s15 = scalar_lea.vmem %s1, 128
  %16 = vst.msk [vmem:[%s15] ss:$16 sm:$0x30] %vm10, %v9
  %v17 = vld [vmem:[%s0] sm:$0xff]
  %18 = vrot.lane.b32.xlu0 %v17, 127
  %v19 = vpop.permute.xlu0 %18
  %vm20 = vcmask 7168
  %s21 = scalar_lea.vmem %s1, 1
  %22 = vst.msk [vmem:[%s21] ss:$16 sm:$0x3] %vm20, %v19
  %s23 = scalar_lea.vmem %s1, 1
  %24 = vst.msk [vmem:[%s23] ss:$16 sm:$0xc] %vm20, %v19
  %s25 = scalar_lea.vmem %s1, 1
  %26 = vst.msk [vmem:[%s25] ss:$16 sm:$0x30] %vm20, %v19
  %s27 = scalar_lea.vmem %s1, 1
  %28 = vst.msk [vmem:[%s27] ss:$16 sm:$0xc0] %vm20, %v19
  %s29 = scalar_lea.vmem %s0, 8
  %v30 = vld [vmem:[%s29] sm:$0x3f]
  %31 = vrot.lane.b32.xlu0 %v30, 127
  %v32 = vpop.permute.xlu0 %31
  %vm33 = vcmask 7168
  %s34 = scalar_lea.vmem %s1, 129
  %35 = vst.msk [vmem:[%s34] ss:$16 sm:$0x3] %vm33, %v32
  %s36 = scalar_lea.vmem %s1, 129
  %37 = vst.msk [vmem:[%s36] ss:$16 sm:$0xc] %vm33, %v32
  %s38 = scalar_lea.vmem %s1, 129
  %39 = vst.msk [vmem:[%s38] ss:$16 sm:$0x30] %vm33, %v32
  %v40 = vld [vmem:[%s0] sm:$0xff]
  %41 = vrot.lane.b32.xlu0 %v40, 126
  %v42 = vpop.permute.xlu0 %41
  %vm43 = vcmask 7168
  %s44 = scalar_lea.vmem %s1, 2
  %45 = vst.msk [vmem:[%s44] ss:$16 sm:$0x3] %vm43, %v42
  %s46 = scalar_lea.vmem %s1, 2
  %47 = vst.msk [vmem:[%s46] ss:$16 sm:$0xc] %vm43, %v42
  %s48 = scalar_lea.vmem %s1, 2
  %49 = vst.msk [vmem:[%s48] ss:$16 sm:$0x30] %vm43, %v42
  %s50 = scalar_lea.vmem %s1, 2
  %51 = vst.msk [vmem:[%s50] ss:$16 sm:$0xc0] %vm43, %v42
  %s52 = scalar_lea.vmem %s0, 8
  %v53 = vld [vmem:[%s52] sm:$0x3f]
  %54 = vrot.lane.b32.xlu0 %v53, 126
  %v55 = vpop.permute.xlu0 %54
  %vm56 = vcmask 7168
  %s57 = scalar_lea.vmem %s1, 130
  %58 = vst.msk [vmem:[%s57] ss:$16 sm:$0x3] %vm56, %v55
  %s59 = scalar_lea.vmem %s1, 130
  %60 = vst.msk [vmem:[%s59] ss:$16 sm:$0xc] %vm56, %v55
  %s61 = scalar_lea.vmem %s1, 130
  %62 = vst.msk [vmem:[%s61] ss:$16 sm:$0x30] %vm56, %v55
  %v63 = vld [vmem:[%s0] sm:$0xff]
  %64 = vrot.lane.b32.xlu0 %v63, 125
  %v65 = vpop.permute.xlu0 %64
  %vm66 = vcmask 7168
  %s67 = scalar_lea.vmem %s1, 3
  %68 = vst.msk [vmem:[%s67] ss:$16 sm:$0x3] %vm66, %v65
  %s69 = scalar_lea.vmem %s1, 3
  %70 = vst.msk [vmem:[%s69] ss:$16 sm:$0xc] %vm66, %v65
  %s71 = scalar_lea.vmem %s1, 3
  %72 = vst.msk [vmem:[%s71] ss:$16 sm:$0x30] %vm66, %v65
  %s73 = scalar_lea.vmem %s1, 3
  %74 = vst.msk [vmem:[%s73] ss:$16 sm:$0xc0] %vm66, %v65
  %s75 = scalar_lea.vmem %s0, 8
  %v76 = vld [vmem:[%s75] sm:$0x3f]
  %77 = vrot.lane.b32.xlu0 %v76, 125
  %v78 = vpop.permute.xlu0 %77
  %vm79 = vcmask 7168
  %s80 = scalar_lea.vmem %s1, 131
  %81 = vst.msk [vmem:[%s80] ss:$16 sm:$0x3] %vm79, %v78
  %s82 = scalar_lea.vmem %s1, 131
  %83 = vst.msk [vmem:[%s82] ss:$16 sm:$0xc] %vm79, %v78
  %s84 = scalar_lea.vmem %s1, 131
  %85 = vst.msk [vmem:[%s84] ss:$16 sm:$0x30] %vm79, %v78
  %v86 = vld [vmem:[%s0] sm:$0xff]
  %87 = vrot.lane.b32.xlu0 %v86, 124
  %v88 = vpop.permute.xlu0 %87
  %vm89 = vcmask 7168
  %s90 = scalar_lea.vmem %s1, 4
  %91 = vst.msk [vmem:[%s90] ss:$16 sm:$0x3] %vm89, %v88
  %s92 = scalar_lea.vmem %s1, 4
  %93 = vst.msk [vmem:[%s92] ss:$16 sm:$0xc] %vm89, %v88
  %s94 = scalar_lea.vmem %s1, 4
  %95 = vst.msk [vmem:[%s94] ss:$16 sm:$0x30] %vm89, %v88
  %s96 = scalar_lea.vmem %s1, 4
  %97 = vst.msk [vmem:[%s96] ss:$16 sm:$0xc0] %vm89, %v88
  %s98 = scalar_lea.vmem %s0, 8
  %v99 = vld [vmem:[%s98] sm:$0x3f]
  %100 = vrot.lane.b32.xlu0 %v99, 124
  %v101 = vpop.permute.xlu0 %100
  %vm102 = vcmask 7168
  %s103 = scalar_lea.vmem %s1, 132
  %104 = vst.msk [vmem:[%s103] ss:$16 sm:$0x3] %vm102, %v101
  %s105 = scalar_lea.vmem %s1, 132
  %106 = vst.msk [vmem:[%s105] ss:$16 sm:$0xc] %vm102, %v101
  %s107 = scalar_lea.vmem %s1, 132
  %108 = vst.msk [vmem:[%s107] ss:$16 sm:$0x30] %vm102, %v101
  %v109 = vld [vmem:[%s0] sm:$0xff]
  %110 = vrot.lane.b32.xlu0 %v109, 123
  %v111 = vpop.permute.xlu0 %110
  %vm112 = vcmask 7168
  %s113 = scalar_lea.vmem %s1, 5
  %114 = vst.msk [vmem:[%s113] ss:$16 sm:$0x3] %vm112, %v111
  %s115 = scalar_lea.vmem %s1, 5
  %116 = vst.msk [vmem:[%s115] ss:$16 sm:$0xc] %vm112, %v111
  %s117 = scalar_lea.vmem %s1, 5
  %118 = vst.msk [vmem:[%s117] ss:$16 sm:$0x30] %vm112, %v111
  %s119 = scalar_lea.vmem %s1, 5
  %120 = vst.msk [vmem:[%s119] ss:$16 sm:$0xc0] %vm112, %v111
  %s121 = scalar_lea.vmem %s0, 8
  %v122 = vld [vmem:[%s121] sm:$0x3f]
  %123 = vrot.lane.b32.xlu0 %v122, 123
  %v124 = vpop.permute.xlu0 %123
  %vm125 = vcmask 7168
  %s126 = scalar_lea.vmem %s1, 133
  %127 = vst.msk [vmem:[%s126] ss:$16 sm:$0x3] %vm125, %v124
  %s128 = scalar_lea.vmem %s1, 133
  %129 = vst.msk [vmem:[%s128] ss:$16 sm:$0xc] %vm125, %v124
  %s130 = scalar_lea.vmem %s1, 133
  %131 = vst.msk [vmem:[%s130] ss:$16 sm:$0x30] %vm125, %v124
  %v132 = vld [vmem:[%s0] sm:$0xff]
  %133 = vrot.lane.b32.xlu0 %v132, 122
  %v134 = vpop.permute.xlu0 %133
  %vm135 = vcmask 7168
  %s136 = scalar_lea.vmem %s1, 6
  %137 = vst.msk [vmem:[%s136] ss:$16 sm:$0x3] %vm135, %v134
  %s138 = scalar_lea.vmem %s1, 6
  %139 = vst.msk [vmem:[%s138] ss:$16 sm:$0xc] %vm135, %v134
  %s140 = scalar_lea.vmem %s1, 6
  %141 = vst.msk [vmem:[%s140] ss:$16 sm:$0x30] %vm135, %v134
  %s142 = scalar_lea.vmem %s1, 6
  %143 = vst.msk [vmem:[%s142] ss:$16 sm:$0xc0] %vm135, %v134
  %s144 = scalar_lea.vmem %s0, 8
  %v145 = vld [vmem:[%s144] sm:$0x3f]
  %146 = vrot.lane.b32.xlu0 %v145, 122
  %v147 = vpop.permute.xlu0 %146
  %vm148 = vcmask 7168
  %s149 = scalar_lea.vmem %s1, 134
  %150 = vst.msk [vmem:[%s149] ss:$16 sm:$0x3] %vm148, %v147
  %s151 = scalar_lea.vmem %s1, 134
  %152 = vst.msk [vmem:[%s151] ss:$16 sm:$0xc] %vm148, %v147
  %s153 = scalar_lea.vmem %s1, 134
  %154 = vst.msk [vmem:[%s153] ss:$16 sm:$0x30] %vm148, %v147
  %v155 = vld [vmem:[%s0] sm:$0xff]
  %156 = vrot.lane.b32.xlu0 %v155, 121
  %v157 = vpop.permute.xlu0 %156
  %vm158 = vcmask 7168
  %s159 = scalar_lea.vmem %s1, 7
  %160 = vst.msk [vmem:[%s159] ss:$16 sm:$0x3] %vm158, %v157
  %s161 = scalar_lea.vmem %s1, 7
  %162 = vst.msk [vmem:[%s161] ss:$16 sm:$0xc] %vm158, %v157
  %s163 = scalar_lea.vmem %s1, 7
  %164 = vst.msk [vmem:[%s163] ss:$16 sm:$0x30] %vm158, %v157
  %s165 = scalar_lea.vmem %s1, 7
  %166 = vst.msk [vmem:[%s165] ss:$16 sm:$0xc0] %vm158, %v157
  %s167 = scalar_lea.vmem %s0, 8
  %v168 = vld [vmem:[%s167] sm:$0x3f]
  %169 = vrot.lane.b32.xlu0 %v168, 121
  %v170 = vpop.permute.xlu0 %169
  %vm171 = vcmask 7168
  %s172 = scalar_lea.vmem %s1, 135
  %173 = vst.msk [vmem:[%s172] ss:$16 sm:$0x3] %vm171, %v170
  %s174 = scalar_lea.vmem %s1, 135
  %175 = vst.msk [vmem:[%s174] ss:$16 sm:$0xc] %vm171, %v170
  %s176 = scalar_lea.vmem %s1, 135
  %177 = vst.msk [vmem:[%s176] ss:$16 sm:$0x30] %vm171, %v170
  %v178 = vld [vmem:[%s0] sm:$0xff]
  %179 = vrot.lane.b32.xlu0 %v178, 120
  %v180 = vpop.permute.xlu0 %179
  %vm181 = vcmask 7168
  %s182 = scalar_lea.vmem %s1, 8
  %183 = vst.msk [vmem:[%s182] ss:$16 sm:$0x3] %vm181, %v180
  %s184 = scalar_lea.vmem %s1, 8
  %185 = vst.msk [vmem:[%s184] ss:$16 sm:$0xc] %vm181, %v180
  %s186 = scalar_lea.vmem %s1, 8
  %187 = vst.msk [vmem:[%s186] ss:$16 sm:$0x30] %vm181, %v180
  %s188 = scalar_lea.vmem %s1, 8
  %189 = vst.msk [vmem:[%s188] ss:$16 sm:$0xc0] %vm181, %v180
  %s190 = scalar_lea.vmem %s0, 8
  %v191 = vld [vmem:[%s190] sm:$0x3f]
  %192 = vrot.lane.b32.xlu0 %v191, 120
  %v193 = vpop.permute.xlu0 %192
  %vm194 = vcmask 7168
  %s195 = scalar_lea.vmem %s1, 136
  %196 = vst.msk [vmem:[%s195] ss:$16 sm:$0x3] %vm194, %v193
  %s197 = scalar_lea.vmem %s1, 136
  %198 = vst.msk [vmem:[%s197] ss:$16 sm:$0xc] %vm194, %v193
  %s199 = scalar_lea.vmem %s1, 136
  %200 = vst.msk [vmem:[%s199] ss:$16 sm:$0x30] %vm194, %v193
  %v201 = vld [vmem:[%s0] sm:$0xff]
  %202 = vrot.lane.b32.xlu0 %v201, 119
  %v203 = vpop.permute.xlu0 %202
  %vm204 = vcmask 7168
  %s205 = scalar_lea.vmem %s1, 9
  %206 = vst.msk [vmem:[%s205] ss:$16 sm:$0x3] %vm204, %v203
  %s207 = scalar_lea.vmem %s1, 9
  %208 = vst.msk [vmem:[%s207] ss:$16 sm:$0xc] %vm204, %v203
  %s209 = scalar_lea.vmem %s1, 9
  %210 = vst.msk [vmem:[%s209] ss:$16 sm:$0x30] %vm204, %v203
  %s211 = scalar_lea.vmem %s1, 9
  %212 = vst.msk [vmem:[%s211] ss:$16 sm:$0xc0] %vm204, %v203
  %s213 = scalar_lea.vmem %s0, 8
  %v214 = vld [vmem:[%s213] sm:$0x3f]
  %215 = vrot.lane.b32.xlu0 %v214, 119
  %v216 = vpop.permute.xlu0 %215
  %vm217 = vcmask 7168
  %s218 = scalar_lea.vmem %s1, 137
  %219 = vst.msk [vmem:[%s218] ss:$16 sm:$0x3] %vm217, %v216
  %s220 = scalar_lea.vmem %s1, 137
  %221 = vst.msk [vmem:[%s220] ss:$16 sm:$0xc] %vm217, %v216
  %s222 = scalar_lea.vmem %s1, 137
  %223 = vst.msk [vmem:[%s222] ss:$16 sm:$0x30] %vm217, %v216
  %v224 = vld [vmem:[%s0] sm:$0xff]
  %225 = vrot.lane.b32.xlu0 %v224, 118
  %v226 = vpop.permute.xlu0 %225
  %vm227 = vcmask 7168
  %s228 = scalar_lea.vmem %s1, 10
  %229 = vst.msk [vmem:[%s228] ss:$16 sm:$0x3] %vm227, %v226
  %s230 = scalar_lea.vmem %s1, 10
  %231 = vst.msk [vmem:[%s230] ss:$16 sm:$0xc] %vm227, %v226
  %s232 = scalar_lea.vmem %s1, 10
  %233 = vst.msk [vmem:[%s232] ss:$16 sm:$0x30] %vm227, %v226
  %s234 = scalar_lea.vmem %s1, 10
  %235 = vst.msk [vmem:[%s234] ss:$16 sm:$0xc0] %vm227, %v226
  %s236 = scalar_lea.vmem %s0, 8
  %v237 = vld [vmem:[%s236] sm:$0x3f]
  %238 = vrot.lane.b32.xlu0 %v237, 118
  %v239 = vpop.permute.xlu0 %238
  %vm240 = vcmask 7168
  %s241 = scalar_lea.vmem %s1, 138
  %242 = vst.msk [vmem:[%s241] ss:$16 sm:$0x3] %vm240, %v239
  %s243 = scalar_lea.vmem %s1, 138
  %244 = vst.msk [vmem:[%s243] ss:$16 sm:$0xc] %vm240, %v239
  %s245 = scalar_lea.vmem %s1, 138
  %246 = vst.msk [vmem:[%s245] ss:$16 sm:$0x30] %vm240, %v239
  %v247 = vld [vmem:[%s0] sm:$0xff]
  %248 = vrot.lane.b32.xlu0 %v247, 117
  %v249 = vpop.permute.xlu0 %248
  %vm250 = vcmask 7168
  %s251 = scalar_lea.vmem %s1, 11
  %252 = vst.msk [vmem:[%s251] ss:$16 sm:$0x3] %vm250, %v249
  %s253 = scalar_lea.vmem %s1, 11
  %254 = vst.msk [vmem:[%s253] ss:$16 sm:$0xc] %vm250, %v249
  %s255 = scalar_lea.vmem %s1, 11
  %256 = vst.msk [vmem:[%s255] ss:$16 sm:$0x30] %vm250, %v249
  %s257 = scalar_lea.vmem %s1, 11
  %258 = vst.msk [vmem:[%s257] ss:$16 sm:$0xc0] %vm250, %v249
  %s259 = scalar_lea.vmem %s0, 8
  %v260 = vld [vmem:[%s259] sm:$0x3f]
  %261 = vrot.lane.b32.xlu0 %v260, 117
  %v262 = vpop.permute.xlu0 %261
  %vm263 = vcmask 7168
  %s264 = scalar_lea.vmem %s1, 139
  %265 = vst.msk [vmem:[%s264] ss:$16 sm:$0x3] %vm263, %v262
  %s266 = scalar_lea.vmem %s1, 139
  %267 = vst.msk [vmem:[%s266] ss:$16 sm:$0xc] %vm263, %v262
  %s268 = scalar_lea.vmem %s1, 139
  %269 = vst.msk [vmem:[%s268] ss:$16 sm:$0x30] %vm263, %v262
  %v270 = vld [vmem:[%s0] sm:$0xff]
  %271 = vrot.lane.b32.xlu0 %v270, 116
  %v272 = vpop.permute.xlu0 %271
  %vm273 = vcmask 7168
  %s274 = scalar_lea.vmem %s1, 12
  %275 = vst.msk [vmem:[%s274] ss:$16 sm:$0x3] %vm273, %v272
  %s276 = scalar_lea.vmem %s1, 12
  %277 = vst.msk [vmem:[%s276] ss:$16 sm:$0xc] %vm273, %v272
  %s278 = scalar_lea.vmem %s1, 12
  %279 = vst.msk [vmem:[%s278] ss:$16 sm:$0x30] %vm273, %v272
  %s280 = scalar_lea.vmem %s1, 12
  %281 = vst.msk [vmem:[%s280] ss:$16 sm:$0xc0] %vm273, %v272
  %s282 = scalar_lea.vmem %s0, 8
  %v283 = vld [vmem:[%s282] sm:$0x3f]
  %284 = vrot.lane.b32.xlu0 %v283, 116
  %v285 = vpop.permute.xlu0 %284
  %vm286 = vcmask 7168
  %s287 = scalar_lea.vmem %s1, 140
  %288 = vst.msk [vmem:[%s287] ss:$16 sm:$0x3] %vm286, %v285
  %s289 = scalar_lea.vmem %s1, 140
  %290 = vst.msk [vmem:[%s289] ss:$16 sm:$0xc] %vm286, %v285
  %s291 = scalar_lea.vmem %s1, 140
  %292 = vst.msk [vmem:[%s291] ss:$16 sm:$0x30] %vm286, %v285
  %v293 = vld [vmem:[%s0] sm:$0xff]
  %294 = vrot.lane.b32.xlu0 %v293, 115
  %v295 = vpop.permute.xlu0 %294
  %vm296 = vcmask 7168
  %s297 = scalar_lea.vmem %s1, 13
  %298 = vst.msk [vmem:[%s297] ss:$16 sm:$0x3] %vm296, %v295
  %s299 = scalar_lea.vmem %s1, 13
  %300 = vst.msk [vmem:[%s299] ss:$16 sm:$0xc] %vm296, %v295
  %s301 = scalar_lea.vmem %s1, 13
  %302 = vst.msk [vmem:[%s301] ss:$16 sm:$0x30] %vm296, %v295
  %s303 = scalar_lea.vmem %s1, 13
  %304 = vst.msk [vmem:[%s303] ss:$16 sm:$0xc0] %vm296, %v295
  %s305 = scalar_lea.vmem %s0, 8
  %v306 = vld [vmem:[%s305] sm:$0x3f]
  %307 = vrot.lane.b32.xlu0 %v306, 115
  %v308 = vpop.permute.xlu0 %307
  %vm309 = vcmask 7168
  %s310 = scalar_lea.vmem %s1, 141
  %311 = vst.msk [vmem:[%s310] ss:$16 sm:$0x3] %vm309, %v308
  %s312 = scalar_lea.vmem %s1, 141
  %313 = vst.msk [vmem:[%s312] ss:$16 sm:$0xc] %vm309, %v308
  %s314 = scalar_lea.vmem %s1, 141
  %315 = vst.msk [vmem:[%s314] ss:$16 sm:$0x30] %vm309, %v308
  %v316 = vld [vmem:[%s0] sm:$0xff]
  %317 = vrot.lane.b32.xlu0 %v316, 114
  %v318 = vpop.permute.xlu0 %317
  %vm319 = vcmask 7168
  %s320 = scalar_lea.vmem %s1, 14
  %321 = vst.msk [vmem:[%s320] ss:$16 sm:$0x3] %vm319, %v318
  %s322 = scalar_lea.vmem %s1, 14
  %323 = vst.msk [vmem:[%s322] ss:$16 sm:$0xc] %vm319, %v318
  %s324 = scalar_lea.vmem %s1, 14
  %325 = vst.msk [vmem:[%s324] ss:$16 sm:$0x30] %vm319, %v318
  %s326 = scalar_lea.vmem %s1, 14
  %327 = vst.msk [vmem:[%s326] ss:$16 sm:$0xc0] %vm319, %v318
  %s328 = scalar_lea.vmem %s0, 8
  %v329 = vld [vmem:[%s328] sm:$0x3f]
  %330 = vrot.lane.b32.xlu0 %v329, 114
  %v331 = vpop.permute.xlu0 %330
  %vm332 = vcmask 7168
  %s333 = scalar_lea.vmem %s1, 142
  %334 = vst.msk [vmem:[%s333] ss:$16 sm:$0x3] %vm332, %v331
  %s335 = scalar_lea.vmem %s1, 142
  %336 = vst.msk [vmem:[%s335] ss:$16 sm:$0xc] %vm332, %v331
  %s337 = scalar_lea.vmem %s1, 142
  %338 = vst.msk [vmem:[%s337] ss:$16 sm:$0x30] %vm332, %v331
  %v339 = vld [vmem:[%s0] sm:$0xff]
  %340 = vrot.lane.b32.xlu0 %v339, 113
  %v341 = vpop.permute.xlu0 %340
  %vm342 = vcmask 7168
  %s343 = scalar_lea.vmem %s1, 15
  %344 = vst.msk [vmem:[%s343] ss:$16 sm:$0x3] %vm342, %v341
  %s345 = scalar_lea.vmem %s1, 15
  %346 = vst.msk [vmem:[%s345] ss:$16 sm:$0xc] %vm342, %v341
  %s347 = scalar_lea.vmem %s1, 15
  %348 = vst.msk [vmem:[%s347] ss:$16 sm:$0x30] %vm342, %v341
  %s349 = scalar_lea.vmem %s1, 15
  %350 = vst.msk [vmem:[%s349] ss:$16 sm:$0xc0] %vm342, %v341
  %s351 = scalar_lea.vmem %s0, 8
  %v352 = vld [vmem:[%s351] sm:$0x3f]
  %353 = vrot.lane.b32.xlu0 %v352, 113
  %v354 = vpop.permute.xlu0 %353
  %vm355 = vcmask 7168
  %s356 = scalar_lea.vmem %s1, 143
  %357 = vst.msk [vmem:[%s356] ss:$16 sm:$0x3] %vm355, %v354
  %s358 = scalar_lea.vmem %s1, 143
  %359 = vst.msk [vmem:[%s358] ss:$16 sm:$0xc] %vm355, %v354
  %s360 = scalar_lea.vmem %s1, 143
  %361 = vst.msk [vmem:[%s360] ss:$16 sm:$0x30] %vm355, %v354

// kernel: forward.1
$region0: #{forward.1}
  #allocation0 [shape = 'u32[]', space=smem, size = 0x4, offset = 0x4, fixed_abs, tag = 'smem constant byte address 0x4 - core index']
  #allocation1 [shape = 'u32[72,128]{1,0:T(1,128)}', space=vmem, size = 0x9000, scoped, tag = 'internal scratch']
  #allocation2 [shape = 'bf16[1,16,16,128]{3,2,1,0:T(8,128)(2,1)}', space=vmem, size = 0x10000, scoped, tag = 'scratch operand']
  #allocation3 [shape = 'bf16[3,3,128,128]{3,2,1,0:T(8,128)(2,1)}', space=vmem, size = 0x48000, scoped, tag = 'scratch operand']
  #allocation4 [shape = 's32[2]{0}', space=sflag, size = 0x8, scoped, tag = 'scratch operand']
  #allocation5 [shape = 's32[]', space=sflag, size = 0x4, offset = 0, fixed_abs, tag = 'sflag constant byte address 0x0 - dummy sync flag']
  #allocation6 [shape = 's32[]', space=sflag, size = 0x4, offset = 0, fixed_abs, tag = 'sflag constant byte address 0x0 - dummy sync flag']
  %s0 = inlined_call_operand.vmem [shape: bf16[1,16,16,128], index: 0, kind: input, shape index: {}]
  %s1 = inlined_call_operand.vmem [shape: bf16[3,3,128,128], index: 1, kind: input, shape index: {}]
  %s2 = inlined_call_operand.vmem [shape: f32[1,128], index: 2, kind: input, shape index: {}]
  %s3 = inlined_call_operand.vmem [shape: f32[1,128], index: 3, kind: input, shape index: {}]
  %s4 = inlined_call_operand.vmem [shape: bf16[3,3,128,128], index: 4, kind: input, shape index: {}]
  %s5 = inlined_call_operand.vmem [shape: f32[1,128], index: 5, kind: input, shape index: {}]
  %s6 = inlined_call_operand.vmem [shape: f32[1,128], index: 6, kind: input, shape index: {}]
  %s7 = inlined_call_operand.vmem [shape: f32[224,1], index: 7, kind: input, shape index: {}]
  %s8 = inlined_call_operand.vmem [shape: f32[1,14,16,128], index: 8, kind: output, shape index: {}]
  %s9 = sld [smem:[#allocation0]]
  $region72: #{forward.1} parent=0
    _
  %s11 = ssub.s32 1, %s9
  %s12 = scalar_select 0, %s11, %s9
  // Predicated region
  $region2: #{forward.1} parent=0 // pred_check
    _
  $region3: #{forward.1} parent=0 // pred_check_branch
    %14 = sbr.rel (0) target = $region5
  $region4: #{forward.1} parent=0 // pred_region
    _
  $region5: #{forward.1} parent=0 // pred_fallthru
    _
  // Predicated region
  $region6: #{forward.1} parent=0 // pred_check
    _
  $region7: #{forward.1} parent=0 // pred_check_branch
    %16 = sbr.rel (0) target = $region9
  $region8: #{forward.1} parent=0 // pred_region
    _
  $region9: #{forward.1} parent=0 // pred_fallthru
    _
  // Predicated region
  $region10: #{forward.1} parent=0 // pred_check
    _
  $region11: #{forward.1} parent=0 // pred_check_branch
    %18 = sbr.rel (0) target = $region13
  $region12: #{forward.1} parent=0 // pred_region
    _
  $region13: #{forward.1} parent=0 // pred_fallthru
    _
  // Predicated region
  $region14: #{forward.1} parent=0 // pred_check
    _
  $region15: #{forward.1} parent=0 // pred_check_branch
    %20 = sbr.rel (0) target = $region17
  $region16: #{forward.1} parent=0 // pred_region
    _
  $region17: #{forward.1} parent=0 // pred_fallthru
    _
  // Predicated region
  $region18: #{forward.1} parent=0 // pred_check
    _
  $region19: #{forward.1} parent=0 // pred_check_branch
    %22 = sbr.rel (0) target = $region21
  $region20: #{forward.1} parent=0 // pred_region
    _
  $region21: #{forward.1} parent=0 // pred_fallthru
    _
  // Predicated region
  $region22: #{forward.1} parent=0 // pred_check
    _
  $region23: #{forward.1} parent=0 // pred_check_branch
    %24 = sbr.rel (0) target = $region25
  $region24: #{forward.1} parent=0 // pred_region
    _
  $region25: #{forward.1} parent=0 // pred_fallthru
    _
  // Predicated region
  $region26: #{forward.1} parent=0 // pred_check
    _
  $region27: #{forward.1} parent=0 // pred_check_branch
    %26 = sbr.rel (0) target = $region29
  $region28: #{forward.1} parent=0 // pred_region
    loop: start=0, step=1, limit=1
    $region30: #{forward.1} parent=28 // loop_pre_header
      _
    $region31: #{forward.1} parent=28 // loop_header
      %s28 = sphi 0, %s32
      %p29 = scmp.ge.s32.totalorder %s28, 1
      %s33 = sphi %s0, %s0
      %s34 = sphi [#allocation2], [#allocation2]
    $region32: #{forward.1} parent=28 // loop_header_branch
      %31 = sbr.rel (%p29) target = $region36
    $region33: #{forward.1} parent=28 // loop_body
      %v35 = vld [vmem:[%s33] sm:$0xff]
      %36 = vst [vmem:[%s34] sm:$0xff] %v35
      %v37 = vld [vmem:[%s33 + $0x8] sm:$0xff]
      %38 = vst [vmem:[%s34 + $0x8] sm:$0xff] %v37
      %v39 = vld [vmem:[%s33 + $0x10] sm:$0xff]
      %40 = vst [vmem:[%s34 + $0x10] sm:$0xff] %v39
      %v41 = vld [vmem:[%s33 + $0x18] sm:$0xff]
      %42 = vst [vmem:[%s34 + $0x18] sm:$0xff] %v41
      %v43 = vld [vmem:[%s33 + $0x20] sm:$0xff]
      %44 = vst [vmem:[%s34 + $0x20] sm:$0xff] %v43
      %v45 = vld [vmem:[%s33 + $0x28] sm:$0xff]
      %46 = vst [vmem:[%s34 + $0x28] sm:$0xff] %v45
      %v47 = vld [vmem:[%s33 + $0x30] sm:$0xff]
      %48 = vst [vmem:[%s34 + $0x30] sm:$0xff] %v47
      %v49 = vld [vmem:[%s33 + $0x38] sm:$0xff]
      %50 = vst [vmem:[%s34 + $0x38] sm:$0xff] %v49
      %v51 = vld [vmem:[%s33 + $0x40] sm:$0xff]
      %52 = vst [vmem:[%s34 + $0x40] sm:$0xff] %v51
      %v53 = vld [vmem:[%s33 + $0x48] sm:$0xff]
      %54 = vst [vmem:[%s34 + $0x48] sm:$0xff] %v53
      %v55 = vld [vmem:[%s33 + $0x50] sm:$0xff]
      %56 = vst [vmem:[%s34 + $0x50] sm:$0xff] %v55
      %v57 = vld [vmem:[%s33 + $0x58] sm:$0xff]
      %58 = vst [vmem:[%s34 + $0x58] sm:$0xff] %v57
      %v59 = vld [vmem:[%s33 + $0x60] sm:$0xff]
      %60 = vst [vmem:[%s34 + $0x60] sm:$0xff] %v59
      %v61 = vld [vmem:[%s33 + $0x68] sm:$0xff]
      %62 = vst [vmem:[%s34 + $0x68] sm:$0xff] %v61
      %v63 = vld [vmem:[%s33 + $0x70] sm:$0xff]
      %64 = vst [vmem:[%s34 + $0x70] sm:$0xff] %v63
      %v65 = vld [vmem:[%s33 + $0x78] sm:$0xff]
      %66 = vst [vmem:[%s34 + $0x78] sm:$0xff] %v65
    $region34: #{forward.1} parent=28 // loop_footer
      %s32 = sadd.s32 1, %s28
    $region35: #{forward.1} parent=28 // loop_footer_branch
      %27 = sbr.rel target = $region31
    $region36: #{forward.1} parent=28 // loop_exit
      _
  $region29: #{forward.1} parent=0 // pred_fallthru
    _
  // Predicated region
  $region37: #{forward.1} parent=0 // pred_check
    _
  $region38: #{forward.1} parent=0 // pred_check_branch
    %68 = sbr.rel target = $region40
  $region39: #{forward.1} parent=0 // pred_region
    _
  $region40: #{forward.1} parent=0 // pred_fallthru
    _
  // Predicated region
  $region41: #{forward.1} parent=0 // pred_check
    _
  $region42: #{forward.1} parent=0 // pred_check_branch
    %71 = sbr.rel (0) target = $region44
  $region43: #{forward.1} parent=0 // pred_region
    %72 = vsyncadd [#allocation4], 2048
  $region44: #{forward.1} parent=0 // pred_fallthru
    _
  %s73 = scalar_lea.sflag [#allocation4], 1
  // Predicated region
  $region45: #{forward.1} parent=0 // pred_check
    _
  $region46: #{forward.1} parent=0 // pred_check_branch
    %75 = sbr.rel (0) target = $region48
  $region47: #{forward.1} parent=0 // pred_region
    loop: start=0, step=1, limit=1
    $region49: #{forward.1} parent=47 // loop_pre_header
      _
    $region50: #{forward.1} parent=47 // loop_header
      %s77 = sphi 0, %s81
      %p78 = scmp.ge.s32.totalorder %s77, 1
      %s82 = sphi %s4, %s4
      %s83 = sphi [#allocation3], [#allocation3]
    $region51: #{forward.1} parent=47 // loop_header_branch
      %80 = sbr.rel (%p78) target = $region55
    $region52: #{forward.1} parent=47 // loop_body
      %v84 = vld [vmem:[%s82] sm:$0xff]
      %85 = vst [vmem:[%s83] sm:$0xff] %v84
      %v86 = vld [vmem:[%s82 + $0x8] sm:$0xff]
      %87 = vst [vmem:[%s83 + $0x8] sm:$0xff] %v86
      %v88 = vld [vmem:[%s82 + $0x10] sm:$0xff]
      %89 = vst [vmem:[%s83 + $0x10] sm:$0xff] %v88
      %v90 = vld [vmem:[%s82 + $0x18] sm:$0xff]
      %91 = vst [vmem:[%s83 + $0x18] sm:$0xff] %v90
      %v92 = vld [vmem:[%s82 + $0x20] sm:$0xff]
      %93 = vst [vmem:[%s83 + $0x20] sm:$0xff] %v92
      %v94 = vld [vmem:[%s82 + $0x28] sm:$0xff]
      %95 = vst [vmem:[%s83 + $0x28] sm:$0xff] %v94
      %v96 = vld [vmem:[%s82 + $0x30] sm:$0xff]
      %97 = vst [vmem:[%s83 + $0x30] sm:$0xff] %v96
      %v98 = vld [vmem:[%s82 + $0x38] sm:$0xff]
      %99 = vst [vmem:[%s83 + $0x38] sm:$0xff] %v98
      %v100 = vld [vmem:[%s82 + $0x40] sm:$0xff]
      %101 = vst [vmem:[%s83 + $0x40] sm:$0xff] %v100
      %v102 = vld [vmem:[%s82 + $0x48] sm:$0xff]
      %103 = vst [vmem:[%s83 + $0x48] sm:$0xff] %v102
      %v104 = vld [vmem:[%s82 + $0x50] sm:$0xff]
      %105 = vst [vmem:[%s83 + $0x50] sm:$0xff] %v104
      %v106 = vld [vmem:[%s82 + $0x58] sm:$0xff]
      %107 = vst [vmem:[%s83 + $0x58] sm:$0xff] %v106
      %v108 = vld [vmem:[%s82 + $0x60] sm:$0xff]
      %109 = vst [vmem:[%s83 + $0x60] sm:$0xff] %v108
      %v110 = vld [vmem:[%s82 + $0x68] sm:$0xff]
      %111 = vst [vmem:[%s83 + $0x68] sm:$0xff] %v110
      %v112 = vld [vmem:[%s82 + $0x70] sm:$0xff]
      %113 = vst [vmem:[%s83 + $0x70] sm:$0xff] %v112
      %v114 = vld [vmem:[%s82 + $0x78] sm:$0xff]
      %115 = vst [vmem:[%s83 + $0x78] sm:$0xff] %v114
      %v116 = vld [vmem:[%s82 + $0x80] sm:$0xff]
      %117 = vst [vmem:[%s83 + $0x80] sm:$0xff] %v116
      %v118 = vld [vmem:[%s82 + $0x88] sm:$0xff]
      %119 = vst [vmem:[%s83 + $0x88] sm:$0xff] %v118
      %v120 = vld [vmem:[%s82 + $0x90] sm:$0xff]
      %121 = vst [vmem:[%s83 + $0x90] sm:$0xff] %v120
      %v122 = vld [vmem:[%s82 + $0x98] sm:$0xff]
      %123 = vst [vmem:[%s83 + $0x98] sm:$0xff] %v122
      %v124 = vld [vmem:[%s82 + $0xa0] sm:$0xff]
      %125 = vst [vmem:[%s83 + $0xa0] sm:$0xff] %v124
      %v126 = vld [vmem:[%s82 + $0xa8] sm:$0xff]
      %127 = vst [vmem:[%s83 + $0xa8] sm:$0xff] %v126
      %v128 = vld [vmem:[%s82 + $0xb0] sm:$0xff]
      %129 = vst [vmem:[%s83 + $0xb0] sm:$0xff] %v128
      %v130 = vld [vmem:[%s82 + $0xb8] sm:$0xff]
      %131 = vst [vmem:[%s83 + $0xb8] sm:$0xff] %v130
      %v132 = vld [vmem:[%s82 + $0xc0] sm:$0xff]
      %133 = vst [vmem:[%s83 + $0xc0] sm:$0xff] %v132
      %v134 = vld [vmem:[%s82 + $0xc8] sm:$0xff]
      %135 = vst [vmem:[%s83 + $0xc8] sm:$0xff] %v134
      %v136 = vld [vmem:[%s82 + $0xd0] sm:$0xff]
      %137 = vst [vmem:[%s83 + $0xd0] sm:$0xff] %v136
      %v138 = vld [vmem:[%s82 + $0xd8] sm:$0xff]
      %139 = vst [vmem:[%s83 + $0xd8] sm:$0xff] %v138
      %v140 = vld [vmem:[%s82 + $0xe0] sm:$0xff]
      %141 = vst [vmem:[%s83 + $0xe0] sm:$0xff] %v140
      %v142 = vld [vmem:[%s82 + $0xe8] sm:$0xff]
      %143 = vst [vmem:[%s83 + $0xe8] sm:$0xff] %v142
      %v144 = vld [vmem:[%s82 + $0xf0] sm:$0xff]
      %145 = vst [vmem:[%s83 + $0xf0] sm:$0xff] %v144
      %v146 = vld [vmem:[%s82 + $0xf8] sm:$0xff]
      %147 = vst [vmem:[%s83 + $0xf8] sm:$0xff] %v146
      %v148 = vld [vmem:[%s82 + $0x100] sm:$0xff]
      %149 = vst [vmem:[%s83 + $0x100] sm:$0xff] %v148
      %v150 = vld [vmem:[%s82 + $0x108] sm:$0xff]
      %151 = vst [vmem:[%s83 + $0x108] sm:$0xff] %v150
      %v152 = vld [vmem:[%s82 + $0x110] sm:$0xff]
      %153 = vst [vmem:[%s83 + $0x110] sm:$0xff] %v152
      %v154 = vld [vmem:[%s82 + $0x118] sm:$0xff]
      %155 = vst [vmem:[%s83 + $0x118] sm:$0xff] %v154
      %v156 = vld [vmem:[%s82 + $0x120] sm:$0xff]
      %157 = vst [vmem:[%s83 + $0x120] sm:$0xff] %v156
      %v158 = vld [vmem:[%s82 + $0x128] sm:$0xff]
      %159 = vst [vmem:[%s83 + $0x128] sm:$0xff] %v158
      %v160 = vld [vmem:[%s82 + $0x130] sm:$0xff]
      %161 = vst [vmem:[%s83 + $0x130] sm:$0xff] %v160
      %v162 = vld [vmem:[%s82 + $0x138] sm:$0xff]
      %163 = vst [vmem:[%s83 + $0x138] sm:$0xff] %v162
      %v164 = vld [vmem:[%s82 + $0x140] sm:$0xff]
      %165 = vst [vmem:[%s83 + $0x140] sm:$0xff] %v164
      %v166 = vld [vmem:[%s82 + $0x148] sm:$0xff]
      %167 = vst [vmem:[%s83 + $0x148] sm:$0xff] %v166
      %v168 = vld [vmem:[%s82 + $0x150] sm:$0xff]
      %169 = vst [vmem:[%s83 + $0x150] sm:$0xff] %v168
      %v170 = vld [vmem:[%s82 + $0x158] sm:$0xff]
      %171 = vst [vmem:[%s83 + $0x158] sm:$0xff] %v170
      %v172 = vld [vmem:[%s82 + $0x160] sm:$0xff]
      %173 = vst [vmem:[%s83 + $0x160] sm:$0xff] %v172
      %v174 = vld [vmem:[%s82 + $0x168] sm:$0xff]
      %175 = vst [vmem:[%s83 + $0x168] sm:$0xff] %v174
      %v176 = vld [vmem:[%s82 + $0x170] sm:$0xff]
      %177 = vst [vmem:[%s83 + $0x170] sm:$0xff] %v176
      %v178 = vld [vmem:[%s82 + $0x178] sm:$0xff]
      %179 = vst [vmem:[%s83 + $0x178] sm:$0xff] %v178
      %v180 = vld [vmem:[%s82 + $0x180] sm:$0xff]
      %181 = vst [vmem:[%s83 + $0x180] sm:$0xff] %v180
      %v182 = vld [vmem:[%s82 + $0x188] sm:$0xff]
      %183 = vst [vmem:[%s83 + $0x188] sm:$0xff] %v182
      %v184 = vld [vmem:[%s82 + $0x190] sm:$0xff]
      %185 = vst [vmem:[%s83 + $0x190] sm:$0xff] %v184
      %v186 = vld [vmem:[%s82 + $0x198] sm:$0xff]
      %187 = vst [vmem:[%s83 + $0x198] sm:$0xff] %v186
      %v188 = vld [vmem:[%s82 + $0x1a0] sm:$0xff]
      %189 = vst [vmem:[%s83 + $0x1a0] sm:$0xff] %v188
      %v190 = vld [vmem:[%s82 + $0x1a8] sm:$0xff]
      %191 = vst [vmem:[%s83 + $0x1a8] sm:$0xff] %v190
      %v192 = vld [vmem:[%s82 + $0x1b0] sm:$0xff]
      %193 = vst [vmem:[%s83 + $0x1b0] sm:$0xff] %v192
      %v194 = vld [vmem:[%s82 + $0x1b8] sm:$0xff]
      %195 = vst [vmem:[%s83 + $0x1b8] sm:$0xff] %v194
      %v196 = vld [vmem:[%s82 + $0x1c0] sm:$0xff]
      %197 = vst [vmem:[%s83 + $0x1c0] sm:$0xff] %v196
      %v198 = vld [vmem:[%s82 + $0x1c8] sm:$0xff]
      %199 = vst [vmem:[%s83 + $0x1c8] sm:$0xff] %v198
      %v200 = vld [vmem:[%s82 + $0x1d0] sm:$0xff]
      %201 = vst [vmem:[%s83 + $0x1d0] sm:$0xff] %v200
      %v202 = vld [vmem:[%s82 + $0x1d8] sm:$0xff]
      %203 = vst [vmem:[%s83 + $0x1d8] sm:$0xff] %v202
      %v204 = vld [vmem:[%s82 + $0x1e0] sm:$0xff]
      %205 = vst [vmem:[%s83 + $0x1e0] sm:$0xff] %v204
      %v206 = vld [vmem:[%s82 + $0x1e8] sm:$0xff]
      %207 = vst [vmem:[%s83 + $0x1e8] sm:$0xff] %v206
      %v208 = vld [vmem:[%s82 + $0x1f0] sm:$0xff]
      %209 = vst [vmem:[%s83 + $0x1f0] sm:$0xff] %v208
      %v210 = vld [vmem:[%s82 + $0x1f8] sm:$0xff]
      %211 = vst [vmem:[%s83 + $0x1f8] sm:$0xff] %v210
      %v212 = vld [vmem:[%s82 + $0x200] sm:$0xff]
      %213 = vst [vmem:[%s83 + $0x200] sm:$0xff] %v212
      %v214 = vld [vmem:[%s82 + $0x208] sm:$0xff]
      %215 = vst [vmem:[%s83 + $0x208] sm:$0xff] %v214
      %v216 = vld [vmem:[%s82 + $0x210] sm:$0xff]
      %217 = vst [vmem:[%s83 + $0x210] sm:$0xff] %v216
      %v218 = vld [vmem:[%s82 + $0x218] sm:$0xff]
      %219 = vst [vmem:[%s83 + $0x218] sm:$0xff] %v218
      %v220 = vld [vmem:[%s82 + $0x220] sm:$0xff]
      %221 = vst [vmem:[%s83 + $0x220] sm:$0xff] %v220
      %v222 = vld [vmem:[%s82 + $0x228] sm:$0xff]
      %223 = vst [vmem:[%s83 + $0x228] sm:$0xff] %v222
      %v224 = vld [vmem:[%s82 + $0x230] sm:$0xff]
      %225 = vst [vmem:[%s83 + $0x230] sm:$0xff] %v224
      %v226 = vld [vmem:[%s82 + $0x238] sm:$0xff]
      %227 = vst [vmem:[%s83 + $0x238] sm:$0xff] %v226
    $region53: #{forward.1} parent=47 // loop_footer
      %s81 = sadd.s32 1, %s77
    $region54: #{forward.1} parent=47 // loop_footer_branch
      %76 = sbr.rel target = $region50
    $region55: #{forward.1} parent=47 // loop_exit
      _
  $region48: #{forward.1} parent=0 // pred_fallthru
    _
  // Predicated region
  $region56: #{forward.1} parent=0 // pred_check
    _
  $region57: #{forward.1} parent=0 // pred_check_branch
    %229 = sbr.rel target = $region59
  $region58: #{forward.1} parent=0 // pred_region
    _
  $region59: #{forward.1} parent=0 // pred_fallthru
    _
  // Predicated region
  $region60: #{forward.1} parent=0 // pred_check
    _
  $region61: #{forward.1} parent=0 // pred_check_branch
    %232 = sbr.rel (0) target = $region63
  $region62: #{forward.1} parent=0 // pred_region
    %233 = vsyncadd %s73, 9216
  $region63: #{forward.1} parent=0 // pred_fallthru
    _
  %v234 = vld [vmem:[%s7] sm:$0xff]
  %v235 = vld [vmem:[%s7 + $0x8] sm:$0xff]
  %v236 = vld [vmem:[%s7 + $0x10] sm:$0xff]
  %v237 = vld [vmem:[%s7 + $0x18] sm:$0xff]
  %v238 = vld [vmem:[%s7 + $0x20] sm:$0xff]
  %v239 = vld [vmem:[%s7 + $0x28] sm:$0xff]
  %v240 = vld [vmem:[%s7 + $0x30] sm:$0xff]
  %v241 = vld [vmem:[%s7 + $0x38] sm:$0xff]
  %v242 = vld [vmem:[%s7 + $0x40] sm:$0xff]
  %v243 = vld [vmem:[%s7 + $0x48] sm:$0xff]
  %v244 = vld [vmem:[%s7 + $0x50] sm:$0xff]
  %v245 = vld [vmem:[%s7 + $0x58] sm:$0xff]
  %v246 = vld [vmem:[%s7 + $0x60] sm:$0xff]
  %v247 = vld [vmem:[%s7 + $0x68] sm:$0xff]
  %v248 = vld [vmem:[%s7 + $0x70] sm:$0xff]
  %v249 = vld [vmem:[%s7 + $0x78] sm:$0xff]
  %v250 = vld [vmem:[%s7 + $0x80] sm:$0xff]
  %v251 = vld [vmem:[%s7 + $0x88] sm:$0xff]
  %v252 = vld [vmem:[%s7 + $0x90] sm:$0xff]
  %v253 = vld [vmem:[%s7 + $0x98] sm:$0xff]
  %v254 = vld [vmem:[%s7 + $0xa0] sm:$0xff]
  %v255 = vld [vmem:[%s7 + $0xa8] sm:$0xff]
  %v256 = vld [vmem:[%s7 + $0xb0] sm:$0xff]
  %v257 = vld [vmem:[%s7 + $0xb8] sm:$0xff]
  %v258 = vld [vmem:[%s7 + $0xc0] sm:$0xff]
  %v259 = vld [vmem:[%s7 + $0xc8] sm:$0xff]
  %v260 = vld [vmem:[%s7 + $0xd0] sm:$0xff]
  %v261 = vld [vmem:[%s7 + $0xd8] sm:$0xff]
  %s262 = smul.u32 4, 1
  %s263 = smul.u32 %s262, 16
  %s264 = smul.u32 %s263, 2
  %s265 = smul.u32 %s264, 1
  %s266 = sshll.u32 %s265, 4
  %267 = dma.done [#allocation4], %s266
  %v268 = vld [vmem:[%s2] sm:$0x1]
  %v269 = vld [vmem:[%s3] sm:$0x1]
  %v270 = vld [vmem:[#allocation2] sm:$0xf]
  %v271 = vld [vmem:[#allocation2 + $0x4] sm:$0xf]
  %v272 = vld [vmem:[#allocation2 + $0x8] sm:$0xf]
  %v273 = vld [vmem:[#allocation2 + $0xc] sm:$0xf]
  %v274 = vld [vmem:[#allocation2 + $0x10] sm:$0xf]
  %v275 = vld [vmem:[#allocation2 + $0x14] sm:$0xf]
  %v276 = vld [vmem:[#allocation2 + $0x18] sm:$0xf]
  %v277 = vld [vmem:[#allocation2 + $0x1c] sm:$0xf]
  %v278 = vld [vmem:[#allocation2 + $0x20] sm:$0xf]
  %v279 = vld [vmem:[#allocation2 + $0x24] sm:$0xf]
  %v280 = vld [vmem:[#allocation2 + $0x28] sm:$0xf]
  %v281 = vld [vmem:[#allocation2 + $0x2c] sm:$0xf]
  %v282 = vld [vmem:[#allocation2 + $0x30] sm:$0xf]
  %v283 = vld [vmem:[#allocation2 + $0x34] sm:$0xf]
  %v284 = vld [vmem:[#allocation2 + $0x38] sm:$0xf]
  %v285 = vld [vmem:[#allocation2 + $0x3c] sm:$0xf]
  %v286 = vld [vmem:[#allocation2 + $0x40] sm:$0xf]
  %v287 = vld [vmem:[#allocation2 + $0x44] sm:$0xf]
  %v288 = vld [vmem:[#allocation2 + $0x48] sm:$0xf]
  %v289 = vld [vmem:[#allocation2 + $0x4c] sm:$0xf]
  %v290 = vld [vmem:[#allocation2 + $0x50] sm:$0xf]
  %v291 = vld [vmem:[#allocation2 + $0x54] sm:$0xf]
  %v292 = vld [vmem:[#allocation2 + $0x58] sm:$0xf]
  %v293 = vld [vmem:[#allocation2 + $0x5c] sm:$0xf]
  %v294 = vld [vmem:[#allocation2 + $0x60] sm:$0xf]
  %v295 = vld [vmem:[#allocation2 + $0x64] sm:$0xf]
  %v296 = vld [vmem:[#allocation2 + $0x68] sm:$0xf]
  %v297 = vld [vmem:[#allocation2 + $0x6c] sm:$0xf]
  %v298 = vld [vmem:[%s1] sm:$0xf]
  %v299 = vld [vmem:[%s1 + $0x4] sm:$0xf]
  %v300 = vld [vmem:[%s1 + $0x8] sm:$0xf]
  %v301 = vld [vmem:[%s1 + $0xc] sm:$0xf]
  %v302 = vld [vmem:[%s1 + $0x10] sm:$0xf]
  %v303 = vld [vmem:[%s1 + $0x14] sm:$0xf]
  %v304 = vld [vmem:[%s1 + $0x18] sm:$0xf]
  %v305 = vld [vmem:[%s1 + $0x1c] sm:$0xf]
  %v306 = vld [vmem:[%s1 + $0x20] sm:$0xf]
  %v307 = vld [vmem:[%s1 + $0x24] sm:$0xf]
  %v308 = vld [vmem:[%s1 + $0x28] sm:$0xf]
  %v309 = vld [vmem:[%s1 + $0x2c] sm:$0xf]
  %v310 = vld [vmem:[%s1 + $0x30] sm:$0xf]
  %v311 = vld [vmem:[%s1 + $0x34] sm:$0xf]
  %v312 = vld [vmem:[%s1 + $0x38] sm:$0xf]
  %v313 = vld [vmem:[%s1 + $0x3c] sm:$0xf]
  %s314 = scalar_lea.vmem [#allocation2], 8
  %v315 = vld [vmem:[%s314] sm:$0xf]
  %v316 = vld [vmem:[%s314 + $0x4] sm:$0xf]
  %v317 = vld [vmem:[%s314 + $0x8] sm:$0xf]
  %v318 = vld [vmem:[%s314 + $0xc] sm:$0xf]
  %v319 = vld [vmem:[%s314 + $0x10] sm:$0xf]
  %v320 = vld [vmem:[%s314 + $0x14] sm:$0xf]
  %v321 = vld [vmem:[%s314 + $0x18] sm:$0xf]
  %v322 = vld [vmem:[%s314 + $0x1c] sm:$0xf]
  %v323 = vld [vmem:[%s314 + $0x20] sm:$0xf]
  %v324 = vld [vmem:[%s314 + $0x24] sm:$0xf]
  %v325 = vld [vmem:[%s314 + $0x28] sm:$0xf]
  %v326 = vld [vmem:[%s314 + $0x2c] sm:$0xf]
  %v327 = vld [vmem:[%s314 + $0x30] sm:$0xf]
  %v328 = vld [vmem:[%s314 + $0x34] sm:$0xf]
  %v329 = vld [vmem:[%s314 + $0x38] sm:$0xf]
  %v330 = vld [vmem:[%s314 + $0x3c] sm:$0xf]
  %v331 = vld [vmem:[%s314 + $0x40] sm:$0xf]
  %v332 = vld [vmem:[%s314 + $0x44] sm:$0xf]
  %v333 = vld [vmem:[%s314 + $0x48] sm:$0xf]
  %v334 = vld [vmem:[%s314 + $0x4c] sm:$0xf]
  %v335 = vld [vmem:[%s314 + $0x50] sm:$0xf]
  %v336 = vld [vmem:[%s314 + $0x54] sm:$0xf]
  %v337 = vld [vmem:[%s314 + $0x58] sm:$0xf]
  %v338 = vld [vmem:[%s314 + $0x5c] sm:$0xf]
  %v339 = vld [vmem:[%s314 + $0x60] sm:$0xf]
  %v340 = vld [vmem:[%s314 + $0x64] sm:$0xf]
  %v341 = vld [vmem:[%s314 + $0x68] sm:$0xf]
  %v342 = vld [vmem:[%s314 + $0x6c] sm:$0xf]
  %s343 = scalar_lea.vmem %s1, 192
  %v344 = vld [vmem:[%s343] sm:$0xf]
  %v345 = vld [vmem:[%s343 + $0x4] sm:$0xf]
  %v346 = vld [vmem:[%s343 + $0x8] sm:$0xf]
  %v347 = vld [vmem:[%s343 + $0xc] sm:$0xf]
  %v348 = vld [vmem:[%s343 + $0x10] sm:$0xf]
  %v349 = vld [vmem:[%s343 + $0x14] sm:$0xf]
  %v350 = vld [vmem:[%s343 + $0x18] sm:$0xf]
  %v351 = vld [vmem:[%s343 + $0x1c] sm:$0xf]
  %v352 = vld [vmem:[%s343 + $0x20] sm:$0xf]
  %v353 = vld [vmem:[%s343 + $0x24] sm:$0xf]
  %v354 = vld [vmem:[%s343 + $0x28] sm:$0xf]
  %v355 = vld [vmem:[%s343 + $0x2c] sm:$0xf]
  %v356 = vld [vmem:[%s343 + $0x30] sm:$0xf]
  %v357 = vld [vmem:[%s343 + $0x34] sm:$0xf]
  %v358 = vld [vmem:[%s343 + $0x38] sm:$0xf]
  %v359 = vld [vmem:[%s343 + $0x3c] sm:$0xf]
  %v388 = vunpack.c.l.b16 %v315
  %v389 = vunpack.c.l.b16 %v316
  %v390 = vunpack.c.l.b16 %v317
  %v391 = vunpack.c.l.b16 %v318
  %v392 = vunpack.c.l.b16 %v319
  %v393 = vunpack.c.l.b16 %v320
  %v394 = vunpack.c.l.b16 %v321
  %v395 = vunpack.c.l.b16 %v322
  %v396 = vunpack.c.l.b16 %v323
  %v397 = vunpack.c.l.b16 %v324
  %v398 = vunpack.c.l.b16 %v325
  %v399 = vunpack.c.l.b16 %v326
  %v400 = vunpack.c.l.b16 %v327
  %v401 = vunpack.c.l.b16 %v328
  %v402 = vunpack.c.l.b16 %v329
  %v403 = vunpack.c.l.b16 %v330
  %v404 = vunpack.c.l.b16 %v331
  %v405 = vunpack.c.l.b16 %v332
  %v406 = vunpack.c.l.b16 %v333
  %v407 = vunpack.c.l.b16 %v334
  %v408 = vunpack.c.l.b16 %v335
  %v409 = vunpack.c.l.b16 %v336
  %v410 = vunpack.c.l.b16 %v337
  %v411 = vunpack.c.l.b16 %v338
  %v412 = vunpack.c.l.b16 %v339
  %v413 = vunpack.c.l.b16 %v340
  %v414 = vunpack.c.l.b16 %v341
  %v415 = vunpack.c.l.b16 %v342
  %v416 = vpack.c.b16 %v389, %v388
  %v417 = vpack.c.b16 %v391, %v390
  %v418 = vpack.c.b16 %v393, %v392
  %v419 = vpack.c.b16 %v395, %v394
  %v420 = vpack.c.b16 %v397, %v396
  %v421 = vpack.c.b16 %v399, %v398
  %v422 = vpack.c.b16 %v401, %v400
  %v423 = vpack.c.b16 %v403, %v402
  %v424 = vpack.c.b16 %v405, %v404
  %v425 = vpack.c.b16 %v407, %v406
  %v426 = vpack.c.b16 %v409, %v408
  %v427 = vpack.c.b16 %v411, %v410
  %v428 = vpack.c.b16 %v413, %v412
  %v429 = vpack.c.b16 %v415, %v414
  %v460 = vunpack.c.l.b16 %v344
  %v461 = vunpack.c.l.b16 %v345
  %v462 = vunpack.c.l.b16 %v346
  %v463 = vunpack.c.l.b16 %v347
  %v464 = vunpack.c.l.b16 %v348
  %v465 = vunpack.c.l.b16 %v349
  %v466 = vunpack.c.l.b16 %v350
  %v467 = vunpack.c.l.b16 %v351
  %v468 = vunpack.c.l.b16 %v352
  %v469 = vunpack.c.l.b16 %v353
  %v470 = vunpack.c.l.b16 %v354
  %v471 = vunpack.c.l.b16 %v355
  %v472 = vunpack.c.l.b16 %v356
  %v473 = vunpack.c.l.b16 %v357
  %v474 = vunpack.c.l.b16 %v358
  %v475 = vunpack.c.l.b16 %v359
  %v476 = vpack.c.b16 %v461, %v460
  %v477 = vpack.c.b16 %v463, %v462
  %v478 = vpack.c.b16 %v465, %v464
  %v479 = vpack.c.b16 %v467, %v466
  %v480 = vpack.c.b16 %v469, %v468
  %v481 = vpack.c.b16 %v471, %v470
  %v482 = vpack.c.b16 %v473, %v472
  %v483 = vpack.c.b16 %v475, %v474
  %492 = vmatpush.bf16.msra.mxu0 %v483
  %493 = vmatpush.bf16.msra.mxu0 %v482
  %494 = vmatpush.bf16.msra.mxu0 %v481
  %495 = vmatpush.bf16.msra.mxu0 %v480
  %496 = vmatpush.bf16.msra.mxu0 %v479
  %497 = vmatpush.bf16.msra.mxu0 %v478
  %498 = vmatpush.bf16.msra.mxu0 %v477
  %499 = vmatpush.bf16.msra.mxu0 %v476
  %500 = vmatmul.bf16.gmra.mxu0 %v416
  %v501 = vpop.f32.mrf.mxu0
  %v502 = vadd.f32 0.0, %v501
  %v503 = vpop.f32.mrf.mxu0
  %v504 = vadd.f32 0.0, %v503
  %505 = vmatmul.bf16.gmra.mxu0 %v417
  %v506 = vpop.f32.mrf.mxu0
  %v507 = vadd.f32 0.0, %v506
  %v508 = vpop.f32.mrf.mxu0
  %v509 = vadd.f32 0.0, %v508
  %510 = vmatmul.bf16.gmra.mxu0 %v418
  %v511 = vpop.f32.mrf.mxu0
  %v512 = vadd.f32 0.0, %v511
  %v513 = vpop.f32.mrf.mxu0
  %v514 = vadd.f32 0.0, %v513
  %515 = vmatmul.bf16.gmra.mxu0 %v419
  %v516 = vpop.f32.mrf.mxu0
  %v517 = vadd.f32 0.0, %v516
  %v518 = vpop.f32.mrf.mxu0
  %v519 = vadd.f32 0.0, %v518
  %520 = vmatmul.bf16.gmra.mxu0 %v420
  %v521 = vpop.f32.mrf.mxu0
  %v522 = vadd.f32 0.0, %v521
  %v523 = vpop.f32.mrf.mxu0
  %v524 = vadd.f32 0.0, %v523
  %525 = vmatmul.bf16.gmra.mxu0 %v421
  %v526 = vpop.f32.mrf.mxu0
  %v527 = vadd.f32 0.0, %v526
  %v528 = vpop.f32.mrf.mxu0
  %v529 = vadd.f32 0.0, %v528
  %530 = vmatmul.bf16.gmra.mxu0 %v422
  %v531 = vpop.f32.mrf.mxu0
  %v532 = vadd.f32 0.0, %v531
  %v533 = vpop.f32.mrf.mxu0
  %v534 = vadd.f32 0.0, %v533
  %535 = vmatmul.bf16.gmra.mxu0 %v423
  %v536 = vpop.f32.mrf.mxu0
  %v537 = vadd.f32 0.0, %v536
  %v538 = vpop.f32.mrf.mxu0
  %v539 = vadd.f32 0.0, %v538
  %540 = vmatmul.bf16.gmra.mxu0 %v424
  %v541 = vpop.f32.mrf.mxu0
  %v542 = vadd.f32 0.0, %v541
  %v543 = vpop.f32.mrf.mxu0
  %v544 = vadd.f32 0.0, %v543
  %545 = vmatmul.bf16.gmra.mxu0 %v425
  %v546 = vpop.f32.mrf.mxu0
  %v547 = vadd.f32 0.0, %v546
  %v548 = vpop.f32.mrf.mxu0
  %v549 = vadd.f32 0.0, %v548
  %550 = vmatmul.bf16.gmra.mxu0 %v426
  %v551 = vpop.f32.mrf.mxu0
  %v552 = vadd.f32 0.0, %v551
  %v553 = vpop.f32.mrf.mxu0
  %v554 = vadd.f32 0.0, %v553
  %555 = vmatmul.bf16.gmra.mxu0 %v427
  %v556 = vpop.f32.mrf.mxu0
  %v557 = vadd.f32 0.0, %v556
  %v558 = vpop.f32.mrf.mxu0
  %v559 = vadd.f32 0.0, %v558
  %560 = vmatmul.bf16.gmra.mxu0 %v428
  %v561 = vpop.f32.mrf.mxu0
  %v562 = vadd.f32 0.0, %v561
  %v563 = vpop.f32.mrf.mxu0
  %v564 = vadd.f32 0.0, %v563
  %565 = vmatmul.bf16.gmra.mxu0 %v429
  %v566 = vpop.f32.mrf.mxu0
  %v567 = vadd.f32 0.0, %v566
  %v568 = vpop.f32.mrf.mxu0
  %v569 = vadd.f32 0.0, %v568
  %570 = vdwg.mxu0
  %v599 = vunpack.c.l.b16 %v270
  %v600 = vunpack.c.l.b16 %v271
  %v601 = vunpack.c.l.b16 %v272
  %v602 = vunpack.c.l.b16 %v273
  %v603 = vunpack.c.l.b16 %v274
  %v604 = vunpack.c.l.b16 %v275
  %v605 = vunpack.c.l.b16 %v276
  %v606 = vunpack.c.l.b16 %v277
  %v607 = vunpack.c.l.b16 %v278
  %v608 = vunpack.c.l.b16 %v279
  %v609 = vunpack.c.l.b16 %v280
  %v610 = vunpack.c.l.b16 %v281
  %v611 = vunpack.c.l.b16 %v282
  %v612 = vunpack.c.l.b16 %v283
  %v613 = vunpack.c.l.b16 %v284
  %v614 = vunpack.c.l.b16 %v285
  %v615 = vunpack.c.l.b16 %v286
  %v616 = vunpack.c.l.b16 %v287
  %v617 = vunpack.c.l.b16 %v288
  %v618 = vunpack.c.l.b16 %v289
  %v619 = vunpack.c.l.b16 %v290
  %v620 = vunpack.c.l.b16 %v291
  %v621 = vunpack.c.l.b16 %v292
  %v622 = vunpack.c.l.b16 %v293
  %v623 = vunpack.c.l.b16 %v294
  %v624 = vunpack.c.l.b16 %v295
  %v625 = vunpack.c.l.b16 %v296
  %v626 = vunpack.c.l.b16 %v297
  %v627 = vpack.c.b16 %v600, %v599
  %v628 = vpack.c.b16 %v602, %v601
  %v629 = vpack.c.b16 %v604, %v603
  %v630 = vpack.c.b16 %v606, %v605
  %v631 = vpack.c.b16 %v608, %v607
  %v632 = vpack.c.b16 %v610, %v609
  %v633 = vpack.c.b16 %v612, %v611
  %v634 = vpack.c.b16 %v614, %v613
  %v635 = vpack.c.b16 %v616, %v615
  %v636 = vpack.c.b16 %v618, %v617
  %v637 = vpack.c.b16 %v620, %v619
  %v638 = vpack.c.b16 %v622, %v621
  %v639 = vpack.c.b16 %v624, %v623
  %v640 = vpack.c.b16 %v626, %v625
  %v671 = vunpack.c.l.b16 %v298
  %v672 = vunpack.c.l.b16 %v299
  %v673 = vunpack.c.l.b16 %v300
  %v674 = vunpack.c.l.b16 %v301
  %v675 = vunpack.c.l.b16 %v302
  %v676 = vunpack.c.l.b16 %v303
  %v677 = vunpack.c.l.b16 %v304
  %v678 = vunpack.c.l.b16 %v305
  %v679 = vunpack.c.l.b16 %v306
  %v680 = vunpack.c.l.b16 %v307
  %v681 = vunpack.c.l.b16 %v308
  %v682 = vunpack.c.l.b16 %v309
  %v683 = vunpack.c.l.b16 %v310
  %v684 = vunpack.c.l.b16 %v311
  %v685 = vunpack.c.l.b16 %v312
  %v686 = vunpack.c.l.b16 %v313
  %v687 = vpack.c.b16 %v672, %v671
  %v688 = vpack.c.b16 %v674, %v673
  %v689 = vpack.c.b16 %v676, %v675
  %v690 = vpack.c.b16 %v678, %v677
  %v691 = vpack.c.b16 %v680, %v679
  %v692 = vpack.c.b16 %v682, %v681
  %v693 = vpack.c.b16 %v684, %v683
  %v694 = vpack.c.b16 %v686, %v685
  %703 = vmatpush.bf16.msra.mxu0 %v694
  %704 = vmatpush.bf16.msra.mxu0 %v693
  %705 = vmatpush.bf16.msra.mxu0 %v692
  %706 = vmatpush.bf16.msra.mxu0 %v691
  %707 = vmatpush.bf16.msra.mxu0 %v690
  %708 = vmatpush.bf16.msra.mxu0 %v689
  %709 = vmatpush.bf16.msra.mxu0 %v688
  %710 = vmatpush.bf16.msra.mxu0 %v687
  %711 = vmatmul.bf16.gmra.mxu0 %v627
  %v712 = vpop.f32.mrf.mxu0
  %v713 = vadd.f32 %v502, %v712
  %v714 = vpop.f32.mrf.mxu0
  %v715 = vadd.f32 %v504, %v714
  %716 = vmatmul.bf16.gmra.mxu0 %v628
  %v717 = vpop.f32.mrf.mxu0
  %v718 = vadd.f32 %v507, %v717
  %v719 = vpop.f32.mrf.mxu0
  %v720 = vadd.f32 %v509, %v719
  %721 = vmatmul.bf16.gmra.mxu0 %v629
  %v722 = vpop.f32.mrf.mxu0
  %v723 = vadd.f32 %v512, %v722
  %v724 = vpop.f32.mrf.mxu0
  %v725 = vadd.f32 %v514, %v724
  %726 = vmatmul.bf16.gmra.mxu0 %v630
  %v727 = vpop.f32.mrf.mxu0
  %v728 = vadd.f32 %v517, %v727
  %v729 = vpop.f32.mrf.mxu0
  %v730 = vadd.f32 %v519, %v729
  %731 = vmatmul.bf16.gmra.mxu0 %v631
  %v732 = vpop.f32.mrf.mxu0
  %v733 = vadd.f32 %v522, %v732
  %v734 = vpop.f32.mrf.mxu0
  %v735 = vadd.f32 %v524, %v734
  %736 = vmatmul.bf16.gmra.mxu0 %v632
  %v737 = vpop.f32.mrf.mxu0
  %v738 = vadd.f32 %v527, %v737
  %v739 = vpop.f32.mrf.mxu0
  %v740 = vadd.f32 %v529, %v739
  %741 = vmatmul.bf16.gmra.mxu0 %v633
  %v742 = vpop.f32.mrf.mxu0
  %v743 = vadd.f32 %v532, %v742
  %v744 = vpop.f32.mrf.mxu0
  %v745 = vadd.f32 %v534, %v744
  %746 = vmatmul.bf16.gmra.mxu0 %v634
  %v747 = vpop.f32.mrf.mxu0
  %v748 = vadd.f32 %v537, %v747
  %v749 = vpop.f32.mrf.mxu0
  %v750 = vadd.f32 %v539, %v749
  %751 = vmatmul.bf16.gmra.mxu0 %v635
  %v752 = vpop.f32.mrf.mxu0
  %v753 = vadd.f32 %v542, %v752
  %v754 = vpop.f32.mrf.mxu0
  %v755 = vadd.f32 %v544, %v754
  %756 = vmatmul.bf16.gmra.mxu0 %v636
  %v757 = vpop.f32.mrf.mxu0
  %v758 = vadd.f32 %v547, %v757
  %v759 = vpop.f32.mrf.mxu0
  %v760 = vadd.f32 %v549, %v759
  %761 = vmatmul.bf16.gmra.mxu0 %v637
  %v762 = vpop.f32.mrf.mxu0
  %v763 = vadd.f32 %v552, %v762
  %v764 = vpop.f32.mrf.mxu0
  %v765 = vadd.f32 %v554, %v764
  %766 = vmatmul.bf16.gmra.mxu0 %v638
  %v767 = vpop.f32.mrf.mxu0
  %v768 = vadd.f32 %v557, %v767
  %v769 = vpop.f32.mrf.mxu0
  %v770 = vadd.f32 %v559, %v769
  %771 = vmatmul.bf16.gmra.mxu0 %v639
  %v772 = vpop.f32.mrf.mxu0
  %v773 = vadd.f32 %v562, %v772
  %v774 = vpop.f32.mrf.mxu0
  %v775 = vadd.f32 %v564, %v774
  %776 = vmatmul.bf16.gmra.mxu0 %v640
  %v777 = vpop.f32.mrf.mxu0
  %v778 = vadd.f32 %v567, %v777
  %v779 = vpop.f32.mrf.mxu0
  %v780 = vadd.f32 %v569, %v779
  %781 = vdwg.mxu0
  %s782 = scalar_lea.vmem [#allocation2], 16
  %v783 = vld [vmem:[%s782] sm:$0xf]
  %v784 = vld [vmem:[%s782 + $0x4] sm:$0xf]
  %v785 = vld [vmem:[%s782 + $0x8] sm:$0xf]
  %v786 = vld [vmem:[%s782 + $0xc] sm:$0xf]
  %v787 = vld [vmem:[%s782 + $0x10] sm:$0xf]
  %v788 = vld [vmem:[%s782 + $0x14] sm:$0xf]
  %v789 = vld [vmem:[%s782 + $0x18] sm:$0xf]
  %v790 = vld [vmem:[%s782 + $0x1c] sm:$0xf]
  %v791 = vld [vmem:[%s782 + $0x20] sm:$0xf]
  %v792 = vld [vmem:[%s782 + $0x24] sm:$0xf]
  %v793 = vld [vmem:[%s782 + $0x28] sm:$0xf]
  %v794 = vld [vmem:[%s782 + $0x2c] sm:$0xf]
  %v795 = vld [vmem:[%s782 + $0x30] sm:$0xf]
  %v796 = vld [vmem:[%s782 + $0x34] sm:$0xf]
  %v797 = vld [vmem:[%s782 + $0x38] sm:$0xf]
  %v798 = vld [vmem:[%s782 + $0x3c] sm:$0xf]
  %v799 = vld [vmem:[%s782 + $0x40] sm:$0xf]
  %v800 = vld [vmem:[%s782 + $0x44] sm:$0xf]
  %v801 = vld [vmem:[%s782 + $0x48] sm:$0xf]
  %v802 = vld [vmem:[%s782 + $0x4c] sm:$0xf]
  %v803 = vld [vmem:[%s782 + $0x50] sm:$0xf]
  %v804 = vld [vmem:[%s782 + $0x54] sm:$0xf]
  %v805 = vld [vmem:[%s782 + $0x58] sm:$0xf]
  %v806 = vld [vmem:[%s782 + $0x5c] sm:$0xf]
  %v807 = vld [vmem:[%s782 + $0x60] sm:$0xf]
  %v808 = vld [vmem:[%s782 + $0x64] sm:$0xf]
  %v809 = vld [vmem:[%s782 + $0x68] sm:$0xf]
  %v810 = vld [vmem:[%s782 + $0x6c] sm:$0xf]
  %s811 = scalar_lea.vmem %s1, 384
  %v812 = vld [vmem:[%s811] sm:$0xf]
  %v813 = vld [vmem:[%s811 + $0x4] sm:$0xf]
  %v814 = vld [vmem:[%s811 + $0x8] sm:$0xf]
  %v815 = vld [vmem:[%s811 + $0xc] sm:$0xf]
  %v816 = vld [vmem:[%s811 + $0x10] sm:$0xf]
  %v817 = vld [vmem:[%s811 + $0x14] sm:$0xf]
  %v818 = vld [vmem:[%s811 + $0x18] sm:$0xf]
  %v819 = vld [vmem:[%s811 + $0x1c] sm:$0xf]
  %v820 = vld [vmem:[%s811 + $0x20] sm:$0xf]
  %v821 = vld [vmem:[%s811 + $0x24] sm:$0xf]
  %v822 = vld [vmem:[%s811 + $0x28] sm:$0xf]
  %v823 = vld [vmem:[%s811 + $0x2c] sm:$0xf]
  %v824 = vld [vmem:[%s811 + $0x30] sm:$0xf]
  %v825 = vld [vmem:[%s811 + $0x34] sm:$0xf]
  %v826 = vld [vmem:[%s811 + $0x38] sm:$0xf]
  %v827 = vld [vmem:[%s811 + $0x3c] sm:$0xf]
  %v856 = vunpack.c.l.b16 %v783
  %v857 = vunpack.c.l.b16 %v784
  %v858 = vunpack.c.l.b16 %v785
  %v859 = vunpack.c.l.b16 %v786
  %v860 = vunpack.c.l.b16 %v787
  %v861 = vunpack.c.l.b16 %v788
  %v862 = vunpack.c.l.b16 %v789
  %v863 = vunpack.c.l.b16 %v790
  %v864 = vunpack.c.l.b16 %v791
  %v865 = vunpack.c.l.b16 %v792
  %v866 = vunpack.c.l.b16 %v793
  %v867 = vunpack.c.l.b16 %v794
  %v868 = vunpack.c.l.b16 %v795
  %v869 = vunpack.c.l.b16 %v796
  %v870 = vunpack.c.l.b16 %v797
  %v871 = vunpack.c.l.b16 %v798
  %v872 = vunpack.c.l.b16 %v799
  %v873 = vunpack.c.l.b16 %v800
  %v874 = vunpack.c.l.b16 %v801
  %v875 = vunpack.c.l.b16 %v802
  %v876 = vunpack.c.l.b16 %v803
  %v877 = vunpack.c.l.b16 %v804
  %v878 = vunpack.c.l.b16 %v805
  %v879 = vunpack.c.l.b16 %v806
  %v880 = vunpack.c.l.b16 %v807
  %v881 = vunpack.c.l.b16 %v808
  %v882 = vunpack.c.l.b16 %v809
  %v883 = vunpack.c.l.b16 %v810
  %v884 = vpack.c.b16 %v857, %v856
  %v885 = vpack.c.b16 %v859, %v858
  %v886 = vpack.c.b16 %v861, %v860
  %v887 = vpack.c.b16 %v863, %v862
  %v888 = vpack.c.b16 %v865, %v864
  %v889 = vpack.c.b16 %v867, %v866
  %v890 = vpack.c.b16 %v869, %v868
  %v891 = vpack.c.b16 %v871, %v870
  %v892 = vpack.c.b16 %v873, %v872
  %v893 = vpack.c.b16 %v875, %v874
  %v894 = vpack.c.b16 %v877, %v876
  %v895 = vpack.c.b16 %v879, %v878
  %v896 = vpack.c.b16 %v881, %v880
  %v897 = vpack.c.b16 %v883, %v882
  %v928 = vunpack.c.l.b16 %v812
  %v929 = vunpack.c.l.b16 %v813
  %v930 = vunpack.c.l.b16 %v814
  %v931 = vunpack.c.l.b16 %v815
  %v932 = vunpack.c.l.b16 %v816
  %v933 = vunpack.c.l.b16 %v817
  %v934 = vunpack.c.l.b16 %v818
  %v935 = vunpack.c.l.b16 %v819
  %v936 = vunpack.c.l.b16 %v820
  %v937 = vunpack.c.l.b16 %v821
  %v938 = vunpack.c.l.b16 %v822
  %v939 = vunpack.c.l.b16 %v823
  %v940 = vunpack.c.l.b16 %v824
  %v941 = vunpack.c.l.b16 %v825
  %v942 = vunpack.c.l.b16 %v826
  %v943 = vunpack.c.l.b16 %v827
  %v944 = vpack.c.b16 %v929, %v928
  %v945 = vpack.c.b16 %v931, %v930
  %v946 = vpack.c.b16 %v933, %v932
  %v947 = vpack.c.b16 %v935, %v934
  %v948 = vpack.c.b16 %v937, %v936
  %v949 = vpack.c.b16 %v939, %v938
  %v950 = vpack.c.b16 %v941, %v940
  %v951 = vpack.c.b16 %v943, %v942
  %960 = vmatpush.bf16.msra.mxu0 %v951
  %961 = vmatpush.bf16.msra.mxu0 %v950
  %962 = vmatpush.bf16.msra.mxu0 %v949
  %963 = vmatpush.bf16.msra.mxu0 %v948
  %964 = vmatpush.bf16.msra.mxu0 %v947
  %965 = vmatpush.bf16.msra.mxu0 %v946
  %966 = vmatpush.bf16.msra.mxu0 %v945
  %967 = vmatpush.bf16.msra.mxu0 %v944
  %968 = vmatmul.bf16.gmra.mxu0 %v884
  %v969 = vpop.f32.mrf.mxu0
  %v970 = vadd.f32 0.0, %v969
  %v971 = vpop.f32.mrf.mxu0
  %v972 = vadd.f32 0.0, %v971
  %973 = vmatmul.bf16.gmra.mxu0 %v885
  %v974 = vpop.f32.mrf.mxu0
  %v975 = vadd.f32 0.0, %v974
  %v976 = vpop.f32.mrf.mxu0
  %v977 = vadd.f32 0.0, %v976
  %978 = vmatmul.bf16.gmra.mxu0 %v886
  %v979 = vpop.f32.mrf.mxu0
  %v980 = vadd.f32 0.0, %v979
  %v981 = vpop.f32.mrf.mxu0
  %v982 = vadd.f32 0.0, %v981
  %983 = vmatmul.bf16.gmra.mxu0 %v887
  %v984 = vpop.f32.mrf.mxu0
  %v985 = vadd.f32 0.0, %v984
  %v986 = vpop.f32.mrf.mxu0
  %v987 = vadd.f32 0.0, %v986
  %988 = vmatmul.bf16.gmra.mxu0 %v888
  %v989 = vpop.f32.mrf.mxu0
  %v990 = vadd.f32 0.0, %v989
  %v991 = vpop.f32.mrf.mxu0
  %v992 = vadd.f32 0.0, %v991
  %993 = vmatmul.bf16.gmra.mxu0 %v889
  %v994 = vpop.f32.mrf.mxu0
  %v995 = vadd.f32 0.0, %v994
  %v996 = vpop.f32.mrf.mxu0
  %v997 = vadd.f32 0.0, %v996
  %998 = vmatmul.bf16.gmra.mxu0 %v890
  %v999 = vpop.f32.mrf.mxu0
  %v1000 = vadd.f32 0.0, %v999
  %v1001 = vpop.f32.mrf.mxu0
  %v1002 = vadd.f32 0.0, %v1001
  %1003 = vmatmul.bf16.gmra.mxu0 %v891
  %v1004 = vpop.f32.mrf.mxu0
  %v1005 = vadd.f32 0.0, %v1004
  %v1006 = vpop.f32.mrf.mxu0
  %v1007 = vadd.f32 0.0, %v1006
  %1008 = vmatmul.bf16.gmra.mxu0 %v892
  %v1009 = vpop.f32.mrf.mxu0
  %v1010 = vadd.f32 0.0, %v1009
  %v1011 = vpop.f32.mrf.mxu0
  %v1012 = vadd.f32 0.0, %v1011
  %1013 = vmatmul.bf16.gmra.mxu0 %v893
  %v1014 = vpop.f32.mrf.mxu0
  %v1015 = vadd.f32 0.0, %v1014
  %v1016 = vpop.f32.mrf.mxu0
  %v1017 = vadd.f32 0.0, %v1016
  %1018 = vmatmul.bf16.gmra.mxu0 %v894
  %v1019 = vpop.f32.mrf.mxu0
  %v1020 = vadd.f32 0.0, %v1019
  %v1021 = vpop.f32.mrf.mxu0
  %v1022 = vadd.f32 0.0, %v1021
  %1023 = vmatmul.bf16.gmra.mxu0 %v895
  %v1024 = vpop.f32.mrf.mxu0
  %v1025 = vadd.f32 0.0, %v1024
  %v1026 = vpop.f32.mrf.mxu0
  %v1027 = vadd.f32 0.0, %v1026
  %1028 = vmatmul.bf16.gmra.mxu0 %v896
  %v1029 = vpop.f32.mrf.mxu0
  %v1030 = vadd.f32 0.0, %v1029
  %v1031 = vpop.f32.mrf.mxu0
  %v1032 = vadd.f32 0.0, %v1031
  %1033 = vmatmul.bf16.gmra.mxu0 %v897
  %v1034 = vpop.f32.mrf.mxu0
  %v1035 = vadd.f32 0.0, %v1034
  %v1036 = vpop.f32.mrf.mxu0
  %v1037 = vadd.f32 0.0, %v1036
  %1038 = vdwg.mxu0
  %v1039 = vadd.f32 %v713, %v970
  %v1040 = vadd.f32 %v715, %v972
  %v1041 = vadd.f32 %v718, %v975
  %v1042 = vadd.f32 %v720, %v977
  %v1043 = vadd.f32 %v723, %v980
  %v1044 = vadd.f32 %v725, %v982
  %v1045 = vadd.f32 %v728, %v985
  %v1046 = vadd.f32 %v730, %v987
  %v1047 = vadd.f32 %v733, %v990
  %v1048 = vadd.f32 %v735, %v992
  %v1049 = vadd.f32 %v738, %v995
  %v1050 = vadd.f32 %v740, %v997
  %v1051 = vadd.f32 %v743, %v1000
  %v1052 = vadd.f32 %v745, %v1002
  %v1053 = vadd.f32 %v748, %v1005
  %v1054 = vadd.f32 %v750, %v1007
  %v1055 = vadd.f32 %v753, %v1010
  %v1056 = vadd.f32 %v755, %v1012
  %v1057 = vadd.f32 %v758, %v1015
  %v1058 = vadd.f32 %v760, %v1017
  %v1059 = vadd.f32 %v763, %v1020
  %v1060 = vadd.f32 %v765, %v1022
  %v1061 = vadd.f32 %v768, %v1025
  %v1062 = vadd.f32 %v770, %v1027
  %v1063 = vadd.f32 %v773, %v1030
  %v1064 = vadd.f32 %v775, %v1032
  %v1065 = vadd.f32 %v778, %v1035
  %v1066 = vadd.f32 %v780, %v1037
  %v1068 = vrot.slane %v1066, 7
  %vm1097 = vcmask 1040384
  %v1098 = vrot.slane %v1039, 7
  %v1099 = vrot.slane %v1040, 7
  %v1100 = vsel %vm1097, %v1098, %v1099
  %v1101 = vrot.slane %v1041, 7
  %v1102 = vsel %vm1097, %v1099, %v1101
  %v1103 = vrot.slane %v1042, 7
  %v1104 = vsel %vm1097, %v1101, %v1103
  %v1105 = vrot.slane %v1043, 7
  %v1106 = vsel %vm1097, %v1103, %v1105
  %v1107 = vrot.slane %v1044, 7
  %v1108 = vsel %vm1097, %v1105, %v1107
  %v1109 = vrot.slane %v1045, 7
  %v1110 = vsel %vm1097, %v1107, %v1109
  %v1111 = vrot.slane %v1046, 7
  %v1112 = vsel %vm1097, %v1109, %v1111
  %v1113 = vrot.slane %v1047, 7
  %v1114 = vsel %vm1097, %v1111, %v1113
  %v1115 = vrot.slane %v1048, 7
  %v1116 = vsel %vm1097, %v1113, %v1115
  %v1117 = vrot.slane %v1049, 7
  %v1118 = vsel %vm1097, %v1115, %v1117
  %v1119 = vrot.slane %v1050, 7
  %v1120 = vsel %vm1097, %v1117, %v1119
  %v1121 = vrot.slane %v1051, 7
  %v1122 = vsel %vm1097, %v1119, %v1121
  %v1123 = vrot.slane %v1052, 7
  %v1124 = vsel %vm1097, %v1121, %v1123
  %v1125 = vrot.slane %v1053, 7
  %v1126 = vsel %vm1097, %v1123, %v1125
  %v1127 = vrot.slane %v1054, 7
  %v1128 = vsel %vm1097, %v1125, %v1127
  %v1129 = vrot.slane %v1055, 7
  %v1130 = vsel %vm1097, %v1127, %v1129
  %v1131 = vrot.slane %v1056, 7
  %v1132 = vsel %vm1097, %v1129, %v1131
  %v1133 = vrot.slane %v1057, 7
  %v1134 = vsel %vm1097, %v1131, %v1133
  %v1135 = vrot.slane %v1058, 7
  %v1136 = vsel %vm1097, %v1133, %v1135
  %v1137 = vrot.slane %v1059, 7
  %v1138 = vsel %vm1097, %v1135, %v1137
  %v1139 = vrot.slane %v1060, 7
  %v1140 = vsel %vm1097, %v1137, %v1139
  %v1141 = vrot.slane %v1061, 7
  %v1142 = vsel %vm1097, %v1139, %v1141
  %v1143 = vrot.slane %v1062, 7
  %v1144 = vsel %vm1097, %v1141, %v1143
  %v1145 = vrot.slane %v1063, 7
  %v1146 = vsel %vm1097, %v1143, %v1145
  %v1147 = vrot.slane %v1064, 7
  %v1148 = vsel %vm1097, %v1145, %v1147
  %v1149 = vrot.slane %v1065, 7
  %v1150 = vsel %vm1097, %v1147, %v1149
  %v1151 = vsel %vm1097, %v1149, %v1068
  %v1180 = vsel %vm1097, %v1068, %v1098
  %s1181 = scalar_lea.vmem %s1, 64
  %v1182 = vld [vmem:[%s1181] sm:$0xf]
  %v1183 = vld [vmem:[%s1181 + $0x4] sm:$0xf]
  %v1184 = vld [vmem:[%s1181 + $0x8] sm:$0xf]
  %v1185 = vld [vmem:[%s1181 + $0xc] sm:$0xf]
  %v1186 = vld [vmem:[%s1181 + $0x10] sm:$0xf]
  %v1187 = vld [vmem:[%s1181 + $0x14] sm:$0xf]
  %v1188 = vld [vmem:[%s1181 + $0x18] sm:$0xf]
  %v1189 = vld [vmem:[%s1181 + $0x1c] sm:$0xf]
  %v1190 = vld [vmem:[%s1181 + $0x20] sm:$0xf]
  %v1191 = vld [vmem:[%s1181 + $0x24] sm:$0xf]
  %v1192 = vld [vmem:[%s1181 + $0x28] sm:$0xf]
  %v1193 = vld [vmem:[%s1181 + $0x2c] sm:$0xf]
  %v1194 = vld [vmem:[%s1181 + $0x30] sm:$0xf]
  %v1195 = vld [vmem:[%s1181 + $0x34] sm:$0xf]
  %v1196 = vld [vmem:[%s1181 + $0x38] sm:$0xf]
  %v1197 = vld [vmem:[%s1181 + $0x3c] sm:$0xf]
  %s1198 = scalar_lea.vmem %s1, 256
  %v1199 = vld [vmem:[%s1198] sm:$0xf]
  %v1200 = vld [vmem:[%s1198 + $0x4] sm:$0xf]
  %v1201 = vld [vmem:[%s1198 + $0x8] sm:$0xf]
  %v1202 = vld [vmem:[%s1198 + $0xc] sm:$0xf]
  %v1203 = vld [vmem:[%s1198 + $0x10] sm:$0xf]
  %v1204 = vld [vmem:[%s1198 + $0x14] sm:$0xf]
  %v1205 = vld [vmem:[%s1198 + $0x18] sm:$0xf]
  %v1206 = vld [vmem:[%s1198 + $0x1c] sm:$0xf]
  %v1207 = vld [vmem:[%s1198 + $0x20] sm:$0xf]
  %v1208 = vld [vmem:[%s1198 + $0x24] sm:$0xf]
  %v1209 = vld [vmem:[%s1198 + $0x28] sm:$0xf]
  %v1210 = vld [vmem:[%s1198 + $0x2c] sm:$0xf]
  %v1211 = vld [vmem:[%s1198 + $0x30] sm:$0xf]
  %v1212 = vld [vmem:[%s1198 + $0x34] sm:$0xf]
  %v1213 = vld [vmem:[%s1198 + $0x38] sm:$0xf]
  %v1214 = vld [vmem:[%s1198 + $0x3c] sm:$0xf]
  %v1231 = vunpack.c.l.b16 %v1199
  %v1232 = vunpack.c.l.b16 %v1200
  %v1233 = vunpack.c.l.b16 %v1201
  %v1234 = vunpack.c.l.b16 %v1202
  %v1235 = vunpack.c.l.b16 %v1203
  %v1236 = vunpack.c.l.b16 %v1204
  %v1237 = vunpack.c.l.b16 %v1205
  %v1238 = vunpack.c.l.b16 %v1206
  %v1239 = vunpack.c.l.b16 %v1207
  %v1240 = vunpack.c.l.b16 %v1208
  %v1241 = vunpack.c.l.b16 %v1209
  %v1242 = vunpack.c.l.b16 %v1210
  %v1243 = vunpack.c.l.b16 %v1211
  %v1244 = vunpack.c.l.b16 %v1212
  %v1245 = vunpack.c.l.b16 %v1213
  %v1246 = vunpack.c.l.b16 %v1214
  %v1247 = vpack.c.b16 %v1232, %v1231
  %v1248 = vpack.c.b16 %v1234, %v1233
  %v1249 = vpack.c.b16 %v1236, %v1235
  %v1250 = vpack.c.b16 %v1238, %v1237
  %v1251 = vpack.c.b16 %v1240, %v1239
  %v1252 = vpack.c.b16 %v1242, %v1241
  %v1253 = vpack.c.b16 %v1244, %v1243
  %v1254 = vpack.c.b16 %v1246, %v1245
  %1263 = vmatpush.bf16.msra.mxu0 %v1254
  %1264 = vmatpush.bf16.msra.mxu0 %v1253
  %1265 = vmatpush.bf16.msra.mxu0 %v1252
  %1266 = vmatpush.bf16.msra.mxu0 %v1251
  %1267 = vmatpush.bf16.msra.mxu0 %v1250
  %1268 = vmatpush.bf16.msra.mxu0 %v1249
  %1269 = vmatpush.bf16.msra.mxu0 %v1248
  %1270 = vmatpush.bf16.msra.mxu0 %v1247
  %1271 = vmatmul.bf16.gmra.mxu0 %v416
  %v1272 = vpop.f32.mrf.mxu0
  %v1273 = vadd.f32 0.0, %v1272
  %v1274 = vpop.f32.mrf.mxu0
  %v1275 = vadd.f32 0.0, %v1274
  %1276 = vmatmul.bf16.gmra.mxu0 %v417
  %v1277 = vpop.f32.mrf.mxu0
  %v1278 = vadd.f32 0.0, %v1277
  %v1279 = vpop.f32.mrf.mxu0
  %v1280 = vadd.f32 0.0, %v1279
  %1281 = vmatmul.bf16.gmra.mxu0 %v418
  %v1282 = vpop.f32.mrf.mxu0
  %v1283 = vadd.f32 0.0, %v1282
  %v1284 = vpop.f32.mrf.mxu0
  %v1285 = vadd.f32 0.0, %v1284
  %1286 = vmatmul.bf16.gmra.mxu0 %v419
  %v1287 = vpop.f32.mrf.mxu0
  %v1288 = vadd.f32 0.0, %v1287
  %v1289 = vpop.f32.mrf.mxu0
  %v1290 = vadd.f32 0.0, %v1289
  %1291 = vmatmul.bf16.gmra.mxu0 %v420
  %v1292 = vpop.f32.mrf.mxu0
  %v1293 = vadd.f32 0.0, %v1292
  %v1294 = vpop.f32.mrf.mxu0
  %v1295 = vadd.f32 0.0, %v1294
  %1296 = vmatmul.bf16.gmra.mxu0 %v421
  %v1297 = vpop.f32.mrf.mxu0
  %v1298 = vadd.f32 0.0, %v1297
  %v1299 = vpop.f32.mrf.mxu0
  %v1300 = vadd.f32 0.0, %v1299
  %1301 = vmatmul.bf16.gmra.mxu0 %v422
  %v1302 = vpop.f32.mrf.mxu0
  %v1303 = vadd.f32 0.0, %v1302
  %v1304 = vpop.f32.mrf.mxu0
  %v1305 = vadd.f32 0.0, %v1304
  %1306 = vmatmul.bf16.gmra.mxu0 %v423
  %v1307 = vpop.f32.mrf.mxu0
  %v1308 = vadd.f32 0.0, %v1307
  %v1309 = vpop.f32.mrf.mxu0
  %v1310 = vadd.f32 0.0, %v1309
  %1311 = vmatmul.bf16.gmra.mxu0 %v424
  %v1312 = vpop.f32.mrf.mxu0
  %v1313 = vadd.f32 0.0, %v1312
  %v1314 = vpop.f32.mrf.mxu0
  %v1315 = vadd.f32 0.0, %v1314
  %1316 = vmatmul.bf16.gmra.mxu0 %v425
  %v1317 = vpop.f32.mrf.mxu0
  %v1318 = vadd.f32 0.0, %v1317
  %v1319 = vpop.f32.mrf.mxu0
  %v1320 = vadd.f32 0.0, %v1319
  %1321 = vmatmul.bf16.gmra.mxu0 %v426
  %v1322 = vpop.f32.mrf.mxu0
  %v1323 = vadd.f32 0.0, %v1322
  %v1324 = vpop.f32.mrf.mxu0
  %v1325 = vadd.f32 0.0, %v1324
  %1326 = vmatmul.bf16.gmra.mxu0 %v427
  %v1327 = vpop.f32.mrf.mxu0
  %v1328 = vadd.f32 0.0, %v1327
  %v1329 = vpop.f32.mrf.mxu0
  %v1330 = vadd.f32 0.0, %v1329
  %1331 = vmatmul.bf16.gmra.mxu0 %v428
  %v1332 = vpop.f32.mrf.mxu0
  %v1333 = vadd.f32 0.0, %v1332
  %v1334 = vpop.f32.mrf.mxu0
  %v1335 = vadd.f32 0.0, %v1334
  %1336 = vmatmul.bf16.gmra.mxu0 %v429
  %v1337 = vpop.f32.mrf.mxu0
  %v1338 = vadd.f32 0.0, %v1337
  %v1339 = vpop.f32.mrf.mxu0
  %v1340 = vadd.f32 0.0, %v1339
  %1341 = vdwg.mxu0
  %v1358 = vunpack.c.l.b16 %v1182
  %v1359 = vunpack.c.l.b16 %v1183
  %v1360 = vunpack.c.l.b16 %v1184
  %v1361 = vunpack.c.l.b16 %v1185
  %v1362 = vunpack.c.l.b16 %v1186
  %v1363 = vunpack.c.l.b16 %v1187
  %v1364 = vunpack.c.l.b16 %v1188
  %v1365 = vunpack.c.l.b16 %v1189
  %v1366 = vunpack.c.l.b16 %v1190
  %v1367 = vunpack.c.l.b16 %v1191
  %v1368 = vunpack.c.l.b16 %v1192
  %v1369 = vunpack.c.l.b16 %v1193
  %v1370 = vunpack.c.l.b16 %v1194
  %v1371 = vunpack.c.l.b16 %v1195
  %v1372 = vunpack.c.l.b16 %v1196
  %v1373 = vunpack.c.l.b16 %v1197
  %v1374 = vpack.c.b16 %v1359, %v1358
  %v1375 = vpack.c.b16 %v1361, %v1360
  %v1376 = vpack.c.b16 %v1363, %v1362
  %v1377 = vpack.c.b16 %v1365, %v1364
  %v1378 = vpack.c.b16 %v1367, %v1366
  %v1379 = vpack.c.b16 %v1369, %v1368
  %v1380 = vpack.c.b16 %v1371, %v1370
  %v1381 = vpack.c.b16 %v1373, %v1372
  %1390 = vmatpush.bf16.msra.mxu0 %v1381
  %1391 = vmatpush.bf16.msra.mxu0 %v1380
  %1392 = vmatpush.bf16.msra.mxu0 %v1379
  %1393 = vmatpush.bf16.msra.mxu0 %v1378
  %1394 = vmatpush.bf16.msra.mxu0 %v1377
  %1395 = vmatpush.bf16.msra.mxu0 %v1376
  %1396 = vmatpush.bf16.msra.mxu0 %v1375
  %1397 = vmatpush.bf16.msra.mxu0 %v1374
  %1398 = vmatmul.bf16.gmra.mxu0 %v627
  %v1399 = vpop.f32.mrf.mxu0
  %v1400 = vadd.f32 %v1273, %v1399
  %v1401 = vpop.f32.mrf.mxu0
  %v1402 = vadd.f32 %v1275, %v1401
  %1403 = vmatmul.bf16.gmra.mxu0 %v628
  %v1404 = vpop.f32.mrf.mxu0
  %v1405 = vadd.f32 %v1278, %v1404
  %v1406 = vpop.f32.mrf.mxu0
  %v1407 = vadd.f32 %v1280, %v1406
  %1408 = vmatmul.bf16.gmra.mxu0 %v629
  %v1409 = vpop.f32.mrf.mxu0
  %v1410 = vadd.f32 %v1283, %v1409
  %v1411 = vpop.f32.mrf.mxu0
  %v1412 = vadd.f32 %v1285, %v1411
  %1413 = vmatmul.bf16.gmra.mxu0 %v630
  %v1414 = vpop.f32.mrf.mxu0
  %v1415 = vadd.f32 %v1288, %v1414
  %v1416 = vpop.f32.mrf.mxu0
  %v1417 = vadd.f32 %v1290, %v1416
  %1418 = vmatmul.bf16.gmra.mxu0 %v631
  %v1419 = vpop.f32.mrf.mxu0
  %v1420 = vadd.f32 %v1293, %v1419
  %v1421 = vpop.f32.mrf.mxu0
  %v1422 = vadd.f32 %v1295, %v1421
  %1423 = vmatmul.bf16.gmra.mxu0 %v632
  %v1424 = vpop.f32.mrf.mxu0
  %v1425 = vadd.f32 %v1298, %v1424
  %v1426 = vpop.f32.mrf.mxu0
  %v1427 = vadd.f32 %v1300, %v1426
  %1428 = vmatmul.bf16.gmra.mxu0 %v633
  %v1429 = vpop.f32.mrf.mxu0
  %v1430 = vadd.f32 %v1303, %v1429
  %v1431 = vpop.f32.mrf.mxu0
  %v1432 = vadd.f32 %v1305, %v1431
  %1433 = vmatmul.bf16.gmra.mxu0 %v634
  %v1434 = vpop.f32.mrf.mxu0
  %v1435 = vadd.f32 %v1308, %v1434
  %v1436 = vpop.f32.mrf.mxu0
  %v1437 = vadd.f32 %v1310, %v1436
  %1438 = vmatmul.bf16.gmra.mxu0 %v635
  %v1439 = vpop.f32.mrf.mxu0
  %v1440 = vadd.f32 %v1313, %v1439
  %v1441 = vpop.f32.mrf.mxu0
  %v1442 = vadd.f32 %v1315, %v1441
  %1443 = vmatmul.bf16.gmra.mxu0 %v636
  %v1444 = vpop.f32.mrf.mxu0
  %v1445 = vadd.f32 %v1318, %v1444
  %v1446 = vpop.f32.mrf.mxu0
  %v1447 = vadd.f32 %v1320, %v1446
  %1448 = vmatmul.bf16.gmra.mxu0 %v637
  %v1449 = vpop.f32.mrf.mxu0
  %v1450 = vadd.f32 %v1323, %v1449
  %v1451 = vpop.f32.mrf.mxu0
  %v1452 = vadd.f32 %v1325, %v1451
  %1453 = vmatmul.bf16.gmra.mxu0 %v638
  %v1454 = vpop.f32.mrf.mxu0
  %v1455 = vadd.f32 %v1328, %v1454
  %v1456 = vpop.f32.mrf.mxu0
  %v1457 = vadd.f32 %v1330, %v1456
  %1458 = vmatmul.bf16.gmra.mxu0 %v639
  %v1459 = vpop.f32.mrf.mxu0
  %v1460 = vadd.f32 %v1333, %v1459
  %v1461 = vpop.f32.mrf.mxu0
  %v1462 = vadd.f32 %v1335, %v1461
  %1463 = vmatmul.bf16.gmra.mxu0 %v640
  %v1464 = vpop.f32.mrf.mxu0
  %v1465 = vadd.f32 %v1338, %v1464
  %v1466 = vpop.f32.mrf.mxu0
  %v1467 = vadd.f32 %v1340, %v1466
  %1468 = vdwg.mxu0
  %s1469 = scalar_lea.vmem %s1, 448
  %v1470 = vld [vmem:[%s1469] sm:$0xf]
  %v1471 = vld [vmem:[%s1469 + $0x4] sm:$0xf]
  %v1472 = vld [vmem:[%s1469 + $0x8] sm:$0xf]
  %v1473 = vld [vmem:[%s1469 + $0xc] sm:$0xf]
  %v1474 = vld [vmem:[%s1469 + $0x10] sm:$0xf]
  %v1475 = vld [vmem:[%s1469 + $0x14] sm:$0xf]
  %v1476 = vld [vmem:[%s1469 + $0x18] sm:$0xf]
  %v1477 = vld [vmem:[%s1469 + $0x1c] sm:$0xf]
  %v1478 = vld [vmem:[%s1469 + $0x20] sm:$0xf]
  %v1479 = vld [vmem:[%s1469 + $0x24] sm:$0xf]
  %v1480 = vld [vmem:[%s1469 + $0x28] sm:$0xf]
  %v1481 = vld [vmem:[%s1469 + $0x2c] sm:$0xf]
  %v1482 = vld [vmem:[%s1469 + $0x30] sm:$0xf]
  %v1483 = vld [vmem:[%s1469 + $0x34] sm:$0xf]
  %v1484 = vld [vmem:[%s1469 + $0x38] sm:$0xf]
  %v1485 = vld [vmem:[%s1469 + $0x3c] sm:$0xf]
  %v1502 = vunpack.c.l.b16 %v1470
  %v1503 = vunpack.c.l.b16 %v1471
  %v1504 = vunpack.c.l.b16 %v1472
  %v1505 = vunpack.c.l.b16 %v1473
  %v1506 = vunpack.c.l.b16 %v1474
  %v1507 = vunpack.c.l.b16 %v1475
  %v1508 = vunpack.c.l.b16 %v1476
  %v1509 = vunpack.c.l.b16 %v1477
  %v1510 = vunpack.c.l.b16 %v1478
  %v1511 = vunpack.c.l.b16 %v1479
  %v1512 = vunpack.c.l.b16 %v1480
  %v1513 = vunpack.c.l.b16 %v1481
  %v1514 = vunpack.c.l.b16 %v1482
  %v1515 = vunpack.c.l.b16 %v1483
  %v1516 = vunpack.c.l.b16 %v1484
  %v1517 = vunpack.c.l.b16 %v1485
  %v1518 = vpack.c.b16 %v1503, %v1502
  %v1519 = vpack.c.b16 %v1505, %v1504
  %v1520 = vpack.c.b16 %v1507, %v1506
  %v1521 = vpack.c.b16 %v1509, %v1508
  %v1522 = vpack.c.b16 %v1511, %v1510
  %v1523 = vpack.c.b16 %v1513, %v1512
  %v1524 = vpack.c.b16 %v1515, %v1514
  %v1525 = vpack.c.b16 %v1517, %v1516
  %1534 = vmatpush.bf16.msra.mxu0 %v1525
  %1535 = vmatpush.bf16.msra.mxu0 %v1524
  %1536 = vmatpush.bf16.msra.mxu0 %v1523
  %1537 = vmatpush.bf16.msra.mxu0 %v1522
  %1538 = vmatpush.bf16.msra.mxu0 %v1521
  %1539 = vmatpush.bf16.msra.mxu0 %v1520
  %1540 = vmatpush.bf16.msra.mxu0 %v1519
  %1541 = vmatpush.bf16.msra.mxu0 %v1518
  %1542 = vmatmul.bf16.gmra.mxu0 %v884
  %v1543 = vpop.f32.mrf.mxu0
  %v1544 = vadd.f32 0.0, %v1543
  %v1545 = vpop.f32.mrf.mxu0
  %v1546 = vadd.f32 0.0, %v1545
  %1547 = vmatmul.bf16.gmra.mxu0 %v885
  %v1548 = vpop.f32.mrf.mxu0
  %v1549 = vadd.f32 0.0, %v1548
  %v1550 = vpop.f32.mrf.mxu0
  %v1551 = vadd.f32 0.0, %v1550
  %1552 = vmatmul.bf16.gmra.mxu0 %v886
  %v1553 = vpop.f32.mrf.mxu0
  %v1554 = vadd.f32 0.0, %v1553
  %v1555 = vpop.f32.mrf.mxu0
  %v1556 = vadd.f32 0.0, %v1555
  %1557 = vmatmul.bf16.gmra.mxu0 %v887
  %v1558 = vpop.f32.mrf.mxu0
  %v1559 = vadd.f32 0.0, %v1558
  %v1560 = vpop.f32.mrf.mxu0
  %v1561 = vadd.f32 0.0, %v1560
  %1562 = vmatmul.bf16.gmra.mxu0 %v888
  %v1563 = vpop.f32.mrf.mxu0
  %v1564 = vadd.f32 0.0, %v1563
  %v1565 = vpop.f32.mrf.mxu0
  %v1566 = vadd.f32 0.0, %v1565
  %1567 = vmatmul.bf16.gmra.mxu0 %v889
  %v1568 = vpop.f32.mrf.mxu0
  %v1569 = vadd.f32 0.0, %v1568
  %v1570 = vpop.f32.mrf.mxu0
  %v1571 = vadd.f32 0.0, %v1570
  %1572 = vmatmul.bf16.gmra.mxu0 %v890
  %v1573 = vpop.f32.mrf.mxu0
  %v1574 = vadd.f32 0.0, %v1573
  %v1575 = vpop.f32.mrf.mxu0
  %v1576 = vadd.f32 0.0, %v1575
  %1577 = vmatmul.bf16.gmra.mxu0 %v891
  %v1578 = vpop.f32.mrf.mxu0
  %v1579 = vadd.f32 0.0, %v1578
  %v1580 = vpop.f32.mrf.mxu0
  %v1581 = vadd.f32 0.0, %v1580
  %1582 = vmatmul.bf16.gmra.mxu0 %v892
  %v1583 = vpop.f32.mrf.mxu0
  %v1584 = vadd.f32 0.0, %v1583
  %v1585 = vpop.f32.mrf.mxu0
  %v1586 = vadd.f32 0.0, %v1585
  %1587 = vmatmul.bf16.gmra.mxu0 %v893
  %v1588 = vpop.f32.mrf.mxu0
  %v1589 = vadd.f32 0.0, %v1588
  %v1590 = vpop.f32.mrf.mxu0
  %v1591 = vadd.f32 0.0, %v1590
  %1592 = vmatmul.bf16.gmra.mxu0 %v894
  %v1593 = vpop.f32.mrf.mxu0
  %v1594 = vadd.f32 0.0, %v1593
  %v1595 = vpop.f32.mrf.mxu0
  %v1596 = vadd.f32 0.0, %v1595
  %1597 = vmatmul.bf16.gmra.mxu0 %v895
  %v1598 = vpop.f32.mrf.mxu0
  %v1599 = vadd.f32 0.0, %v1598
  %v1600 = vpop.f32.mrf.mxu0
  %v1601 = vadd.f32 0.0, %v1600
  %1602 = vmatmul.bf16.gmra.mxu0 %v896
  %v1603 = vpop.f32.mrf.mxu0
  %v1604 = vadd.f32 0.0, %v1603
  %v1605 = vpop.f32.mrf.mxu0
  %v1606 = vadd.f32 0.0, %v1605
  %1607 = vmatmul.bf16.gmra.mxu0 %v897
  %v1608 = vpop.f32.mrf.mxu0
  %v1609 = vadd.f32 0.0, %v1608
  %v1610 = vpop.f32.mrf.mxu0
  %v1611 = vadd.f32 0.0, %v1610
  %1612 = vdwg.mxu0
  %v1613 = vadd.f32 %v1400, %v1544
  %v1614 = vadd.f32 %v1402, %v1546
  %v1615 = vadd.f32 %v1405, %v1549
  %v1616 = vadd.f32 %v1407, %v1551
  %v1617 = vadd.f32 %v1410, %v1554
  %v1618 = vadd.f32 %v1412, %v1556
  %v1619 = vadd.f32 %v1415, %v1559
  %v1620 = vadd.f32 %v1417, %v1561
  %v1621 = vadd.f32 %v1420, %v1564
  %v1622 = vadd.f32 %v1422, %v1566
  %v1623 = vadd.f32 %v1425, %v1569
  %v1624 = vadd.f32 %v1427, %v1571
  %v1625 = vadd.f32 %v1430, %v1574
  %v1626 = vadd.f32 %v1432, %v1576
  %v1627 = vadd.f32 %v1435, %v1579
  %v1628 = vadd.f32 %v1437, %v1581
  %v1629 = vadd.f32 %v1440, %v1584
  %v1630 = vadd.f32 %v1442, %v1586
  %v1631 = vadd.f32 %v1445, %v1589
  %v1632 = vadd.f32 %v1447, %v1591
  %v1633 = vadd.f32 %v1450, %v1594
  %v1634 = vadd.f32 %v1452, %v1596
  %v1635 = vadd.f32 %v1455, %v1599
  %v1636 = vadd.f32 %v1457, %v1601
  %v1637 = vadd.f32 %v1460, %v1604
  %v1638 = vadd.f32 %v1462, %v1606
  %v1639 = vadd.f32 %v1465, %v1609
  %v1640 = vadd.f32 %v1467, %v1611
  %v1641 = vadd.f32 %v1180, %v1613
  %v1642 = vadd.f32 %v1100, %v1614
  %v1643 = vadd.f32 %v1102, %v1615
  %v1644 = vadd.f32 %v1104, %v1616
  %v1645 = vadd.f32 %v1106, %v1617
  %v1646 = vadd.f32 %v1108, %v1618
  %v1647 = vadd.f32 %v1110, %v1619
  %v1648 = vadd.f32 %v1112, %v1620
  %v1649 = vadd.f32 %v1114, %v1621
  %v1650 = vadd.f32 %v1116, %v1622
  %v1651 = vadd.f32 %v1118, %v1623
  %v1652 = vadd.f32 %v1120, %v1624
  %v1653 = vadd.f32 %v1122, %v1625
  %v1654 = vadd.f32 %v1124, %v1626
  %v1655 = vadd.f32 %v1126, %v1627
  %v1656 = vadd.f32 %v1128, %v1628
  %v1657 = vadd.f32 %v1130, %v1629
  %v1658 = vadd.f32 %v1132, %v1630
  %v1659 = vadd.f32 %v1134, %v1631
  %v1660 = vadd.f32 %v1136, %v1632
  %v1661 = vadd.f32 %v1138, %v1633
  %v1662 = vadd.f32 %v1140, %v1634
  %v1663 = vadd.f32 %v1142, %v1635
  %v1664 = vadd.f32 %v1144, %v1636
  %v1665 = vadd.f32 %v1146, %v1637
  %v1666 = vadd.f32 %v1148, %v1638
  %v1667 = vadd.f32 %v1150, %v1639
  %v1668 = vadd.f32 %v1151, %v1640
  %s1669 = scalar_lea.vmem %s1, 128
  %v1670 = vld [vmem:[%s1669] sm:$0xf]
  %v1671 = vld [vmem:[%s1669 + $0x4] sm:$0xf]
  %v1672 = vld [vmem:[%s1669 + $0x8] sm:$0xf]
  %v1673 = vld [vmem:[%s1669 + $0xc] sm:$0xf]
  %v1674 = vld [vmem:[%s1669 + $0x10] sm:$0xf]
  %v1675 = vld [vmem:[%s1669 + $0x14] sm:$0xf]
  %v1676 = vld [vmem:[%s1669 + $0x18] sm:$0xf]
  %v1677 = vld [vmem:[%s1669 + $0x1c] sm:$0xf]
  %v1678 = vld [vmem:[%s1669 + $0x20] sm:$0xf]
  %v1679 = vld [vmem:[%s1669 + $0x24] sm:$0xf]
  %v1680 = vld [vmem:[%s1669 + $0x28] sm:$0xf]
  %v1681 = vld [vmem:[%s1669 + $0x2c] sm:$0xf]
  %v1682 = vld [vmem:[%s1669 + $0x30] sm:$0xf]
  %v1683 = vld [vmem:[%s1669 + $0x34] sm:$0xf]
  %v1684 = vld [vmem:[%s1669 + $0x38] sm:$0xf]
  %v1685 = vld [vmem:[%s1669 + $0x3c] sm:$0xf]
  %s1686 = scalar_lea.vmem %s1, 320
  %v1687 = vld [vmem:[%s1686] sm:$0xf]
  %v1688 = vld [vmem:[%s1686 + $0x4] sm:$0xf]
  %v1689 = vld [vmem:[%s1686 + $0x8] sm:$0xf]
  %v1690 = vld [vmem:[%s1686 + $0xc] sm:$0xf]
  %v1691 = vld [vmem:[%s1686 + $0x10] sm:$0xf]
  %v1692 = vld [vmem:[%s1686 + $0x14] sm:$0xf]
  %v1693 = vld [vmem:[%s1686 + $0x18] sm:$0xf]
  %v1694 = vld [vmem:[%s1686 + $0x1c] sm:$0xf]
  %v1695 = vld [vmem:[%s1686 + $0x20] sm:$0xf]
  %v1696 = vld [vmem:[%s1686 + $0x24] sm:$0xf]
  %v1697 = vld [vmem:[%s1686 + $0x28] sm:$0xf]
  %v1698 = vld [vmem:[%s1686 + $0x2c] sm:$0xf]
  %v1699 = vld [vmem:[%s1686 + $0x30] sm:$0xf]
  %v1700 = vld [vmem:[%s1686 + $0x34] sm:$0xf]
  %v1701 = vld [vmem:[%s1686 + $0x38] sm:$0xf]
  %v1702 = vld [vmem:[%s1686 + $0x3c] sm:$0xf]
  %v1719 = vunpack.c.l.b16 %v1687
  %v1720 = vunpack.c.l.b16 %v1688
  %v1721 = vunpack.c.l.b16 %v1689
  %v1722 = vunpack.c.l.b16 %v1690
  %v1723 = vunpack.c.l.b16 %v1691
  %v1724 = vunpack.c.l.b16 %v1692
  %v1725 = vunpack.c.l.b16 %v1693
  %v1726 = vunpack.c.l.b16 %v1694
  %v1727 = vunpack.c.l.b16 %v1695
  %v1728 = vunpack.c.l.b16 %v1696
  %v1729 = vunpack.c.l.b16 %v1697
  %v1730 = vunpack.c.l.b16 %v1698
  %v1731 = vunpack.c.l.b16 %v1699
  %v1732 = vunpack.c.l.b16 %v1700
  %v1733 = vunpack.c.l.b16 %v1701
  %v1734 = vunpack.c.l.b16 %v1702
  %v1735 = vpack.c.b16 %v1720, %v1719
  %v1736 = vpack.c.b16 %v1722, %v1721
  %v1737 = vpack.c.b16 %v1724, %v1723
  %v1738 = vpack.c.b16 %v1726, %v1725
  %v1739 = vpack.c.b16 %v1728, %v1727
  %v1740 = vpack.c.b16 %v1730, %v1729
  %v1741 = vpack.c.b16 %v1732, %v1731
  %v1742 = vpack.c.b16 %v1734, %v1733
  %1751 = vmatpush.bf16.msra.mxu0 %v1742
  %1752 = vmatpush.bf16.msra.mxu0 %v1741
  %1753 = vmatpush.bf16.msra.mxu0 %v1740
  %1754 = vmatpush.bf16.msra.mxu0 %v1739
  %1755 = vmatpush.bf16.msra.mxu0 %v1738
  %1756 = vmatpush.bf16.msra.mxu0 %v1737
  %1757 = vmatpush.bf16.msra.mxu0 %v1736
  %1758 = vmatpush.bf16.msra.mxu0 %v1735
  %1759 = vmatmul.bf16.gmra.mxu0 %v416
  %v1760 = vpop.f32.mrf.mxu0
  %v1761 = vadd.f32 0.0, %v1760
  %v1762 = vpop.f32.mrf.mxu0
  %v1763 = vadd.f32 0.0, %v1762
  %1764 = vmatmul.bf16.gmra.mxu0 %v417
  %v1765 = vpop.f32.mrf.mxu0
  %v1766 = vadd.f32 0.0, %v1765
  %v1767 = vpop.f32.mrf.mxu0
  %v1768 = vadd.f32 0.0, %v1767
  %1769 = vmatmul.bf16.gmra.mxu0 %v418
  %v1770 = vpop.f32.mrf.mxu0
  %v1771 = vadd.f32 0.0, %v1770
  %v1772 = vpop.f32.mrf.mxu0
  %v1773 = vadd.f32 0.0, %v1772
  %1774 = vmatmul.bf16.gmra.mxu0 %v419
  %v1775 = vpop.f32.mrf.mxu0
  %v1776 = vadd.f32 0.0, %v1775
  %v1777 = vpop.f32.mrf.mxu0
  %v1778 = vadd.f32 0.0, %v1777
  %1779 = vmatmul.bf16.gmra.mxu0 %v420
  %v1780 = vpop.f32.mrf.mxu0
  %v1781 = vadd.f32 0.0, %v1780
  %v1782 = vpop.f32.mrf.mxu0
  %v1783 = vadd.f32 0.0, %v1782
  %1784 = vmatmul.bf16.gmra.mxu0 %v421
  %v1785 = vpop.f32.mrf.mxu0
  %v1786 = vadd.f32 0.0, %v1785
  %v1787 = vpop.f32.mrf.mxu0
  %v1788 = vadd.f32 0.0, %v1787
  %1789 = vmatmul.bf16.gmra.mxu0 %v422
  %v1790 = vpop.f32.mrf.mxu0
  %v1791 = vadd.f32 0.0, %v1790
  %v1792 = vpop.f32.mrf.mxu0
  %v1793 = vadd.f32 0.0, %v1792
  %1794 = vmatmul.bf16.gmra.mxu0 %v423
  %v1795 = vpop.f32.mrf.mxu0
  %v1796 = vadd.f32 0.0, %v1795
  %v1797 = vpop.f32.mrf.mxu0
  %v1798 = vadd.f32 0.0, %v1797
  %1799 = vmatmul.bf16.gmra.mxu0 %v424
  %v1800 = vpop.f32.mrf.mxu0
  %v1801 = vadd.f32 0.0, %v1800
  %v1802 = vpop.f32.mrf.mxu0
  %v1803 = vadd.f32 0.0, %v1802
  %1804 = vmatmul.bf16.gmra.mxu0 %v425
  %v1805 = vpop.f32.mrf.mxu0
  %v1806 = vadd.f32 0.0, %v1805
  %v1807 = vpop.f32.mrf.mxu0
  %v1808 = vadd.f32 0.0, %v1807
  %1809 = vmatmul.bf16.gmra.mxu0 %v426
  %v1810 = vpop.f32.mrf.mxu0
  %v1811 = vadd.f32 0.0, %v1810
  %v1812 = vpop.f32.mrf.mxu0
  %v1813 = vadd.f32 0.0, %v1812
  %1814 = vmatmul.bf16.gmra.mxu0 %v427
  %v1815 = vpop.f32.mrf.mxu0
  %v1816 = vadd.f32 0.0, %v1815
  %v1817 = vpop.f32.mrf.mxu0
  %v1818 = vadd.f32 0.0, %v1817
  %1819 = vmatmul.bf16.gmra.mxu0 %v428
  %v1820 = vpop.f32.mrf.mxu0
  %v1821 = vadd.f32 0.0, %v1820
  %v1822 = vpop.f32.mrf.mxu0
  %v1823 = vadd.f32 0.0, %v1822
  %1824 = vmatmul.bf16.gmra.mxu0 %v429
  %v1825 = vpop.f32.mrf.mxu0
  %v1826 = vadd.f32 0.0, %v1825
  %v1827 = vpop.f32.mrf.mxu0
  %v1828 = vadd.f32 0.0, %v1827
  %1829 = vdwg.mxu0
  %v1846 = vunpack.c.l.b16 %v1670
  %v1847 = vunpack.c.l.b16 %v1671
  %v1848 = vunpack.c.l.b16 %v1672
  %v1849 = vunpack.c.l.b16 %v1673
  %v1850 = vunpack.c.l.b16 %v1674
  %v1851 = vunpack.c.l.b16 %v1675
  %v1852 = vunpack.c.l.b16 %v1676
  %v1853 = vunpack.c.l.b16 %v1677
  %v1854 = vunpack.c.l.b16 %v1678
  %v1855 = vunpack.c.l.b16 %v1679
  %v1856 = vunpack.c.l.b16 %v1680
  %v1857 = vunpack.c.l.b16 %v1681
  %v1858 = vunpack.c.l.b16 %v1682
  %v1859 = vunpack.c.l.b16 %v1683
  %v1860 = vunpack.c.l.b16 %v1684
  %v1861 = vunpack.c.l.b16 %v1685
  %v1862 = vpack.c.b16 %v1847, %v1846
  %v1863 = vpack.c.b16 %v1849, %v1848
  %v1864 = vpack.c.b16 %v1851, %v1850
  %v1865 = vpack.c.b16 %v1853, %v1852
  %v1866 = vpack.c.b16 %v1855, %v1854
  %v1867 = vpack.c.b16 %v1857, %v1856
  %v1868 = vpack.c.b16 %v1859, %v1858
  %v1869 = vpack.c.b16 %v1861, %v1860
  %1878 = vmatpush.bf16.msra.mxu0 %v1869
  %1879 = vmatpush.bf16.msra.mxu0 %v1868
  %1880 = vmatpush.bf16.msra.mxu0 %v1867
  %1881 = vmatpush.bf16.msra.mxu0 %v1866
  %1882 = vmatpush.bf16.msra.mxu0 %v1865
  %1883 = vmatpush.bf16.msra.mxu0 %v1864
  %1884 = vmatpush.bf16.msra.mxu0 %v1863
  %1885 = vmatpush.bf16.msra.mxu0 %v1862
  %1886 = vmatmul.bf16.gmra.mxu0 %v627
  %v1887 = vpop.f32.mrf.mxu0
  %v1888 = vadd.f32 %v1761, %v1887
  %v1889 = vpop.f32.mrf.mxu0
  %v1890 = vadd.f32 %v1763, %v1889
  %1891 = vmatmul.bf16.gmra.mxu0 %v628
  %v1892 = vpop.f32.mrf.mxu0
  %v1893 = vadd.f32 %v1766, %v1892
  %v1894 = vpop.f32.mrf.mxu0
  %v1895 = vadd.f32 %v1768, %v1894
  %1896 = vmatmul.bf16.gmra.mxu0 %v629
  %v1897 = vpop.f32.mrf.mxu0
  %v1898 = vadd.f32 %v1771, %v1897
  %v1899 = vpop.f32.mrf.mxu0
  %v1900 = vadd.f32 %v1773, %v1899
  %1901 = vmatmul.bf16.gmra.mxu0 %v630
  %v1902 = vpop.f32.mrf.mxu0
  %v1903 = vadd.f32 %v1776, %v1902
  %v1904 = vpop.f32.mrf.mxu0
  %v1905 = vadd.f32 %v1778, %v1904
  %1906 = vmatmul.bf16.gmra.mxu0 %v631
  %v1907 = vpop.f32.mrf.mxu0
  %v1908 = vadd.f32 %v1781, %v1907
  %v1909 = vpop.f32.mrf.mxu0
  %v1910 = vadd.f32 %v1783, %v1909
  %1911 = vmatmul.bf16.gmra.mxu0 %v632
  %v1912 = vpop.f32.mrf.mxu0
  %v1913 = vadd.f32 %v1786, %v1912
  %v1914 = vpop.f32.mrf.mxu0
  %v1915 = vadd.f32 %v1788, %v1914
  %1916 = vmatmul.bf16.gmra.mxu0 %v633
  %v1917 = vpop.f32.mrf.mxu0
  %v1918 = vadd.f32 %v1791, %v1917
  %v1919 = vpop.f32.mrf.mxu0
  %v1920 = vadd.f32 %v1793, %v1919
  %1921 = vmatmul.bf16.gmra.mxu0 %v634
  %v1922 = vpop.f32.mrf.mxu0
  %v1923 = vadd.f32 %v1796, %v1922
  %v1924 = vpop.f32.mrf.mxu0
  %v1925 = vadd.f32 %v1798, %v1924
  %1926 = vmatmul.bf16.gmra.mxu0 %v635
  %v1927 = vpop.f32.mrf.mxu0
  %v1928 = vadd.f32 %v1801, %v1927
  %v1929 = vpop.f32.mrf.mxu0
  %v1930 = vadd.f32 %v1803, %v1929
  %1931 = vmatmul.bf16.gmra.mxu0 %v636
  %v1932 = vpop.f32.mrf.mxu0
  %v1933 = vadd.f32 %v1806, %v1932
  %v1934 = vpop.f32.mrf.mxu0
  %v1935 = vadd.f32 %v1808, %v1934
  %1936 = vmatmul.bf16.gmra.mxu0 %v637
  %v1937 = vpop.f32.mrf.mxu0
  %v1938 = vadd.f32 %v1811, %v1937
  %v1939 = vpop.f32.mrf.mxu0
  %v1940 = vadd.f32 %v1813, %v1939
  %1941 = vmatmul.bf16.gmra.mxu0 %v638
  %v1942 = vpop.f32.mrf.mxu0
  %v1943 = vadd.f32 %v1816, %v1942
  %v1944 = vpop.f32.mrf.mxu0
  %v1945 = vadd.f32 %v1818, %v1944
  %1946 = vmatmul.bf16.gmra.mxu0 %v639
  %v1947 = vpop.f32.mrf.mxu0
  %v1948 = vadd.f32 %v1821, %v1947
  %v1949 = vpop.f32.mrf.mxu0
  %v1950 = vadd.f32 %v1823, %v1949
  %1951 = vmatmul.bf16.gmra.mxu0 %v640
  %v1952 = vpop.f32.mrf.mxu0
  %v1953 = vadd.f32 %v1826, %v1952
  %v1954 = vpop.f32.mrf.mxu0
  %v1955 = vadd.f32 %v1828, %v1954
  %1956 = vdwg.mxu0
  %s1957 = scalar_lea.vmem %s1, 512
  %v1958 = vld [vmem:[%s1957] sm:$0xf]
  %v1959 = vld [vmem:[%s1957 + $0x4] sm:$0xf]
  %v1960 = vld [vmem:[%s1957 + $0x8] sm:$0xf]
  %v1961 = vld [vmem:[%s1957 + $0xc] sm:$0xf]
  %v1962 = vld [vmem:[%s1957 + $0x10] sm:$0xf]
  %v1963 = vld [vmem:[%s1957 + $0x14] sm:$0xf]
  %v1964 = vld [vmem:[%s1957 + $0x18] sm:$0xf]
  %v1965 = vld [vmem:[%s1957 + $0x1c] sm:$0xf]
  %v1966 = vld [vmem:[%s1957 + $0x20] sm:$0xf]
  %v1967 = vld [vmem:[%s1957 + $0x24] sm:$0xf]
  %v1968 = vld [vmem:[%s1957 + $0x28] sm:$0xf]
  %v1969 = vld [vmem:[%s1957 + $0x2c] sm:$0xf]
  %v1970 = vld [vmem:[%s1957 + $0x30] sm:$0xf]
  %v1971 = vld [vmem:[%s1957 + $0x34] sm:$0xf]
  %v1972 = vld [vmem:[%s1957 + $0x38] sm:$0xf]
  %v1973 = vld [vmem:[%s1957 + $0x3c] sm:$0xf]
  %v1990 = vunpack.c.l.b16 %v1958
  %v1991 = vunpack.c.l.b16 %v1959
  %v1992 = vunpack.c.l.b16 %v1960
  %v1993 = vunpack.c.l.b16 %v1961
  %v1994 = vunpack.c.l.b16 %v1962
  %v1995 = vunpack.c.l.b16 %v1963
  %v1996 = vunpack.c.l.b16 %v1964
  %v1997 = vunpack.c.l.b16 %v1965
  %v1998 = vunpack.c.l.b16 %v1966
  %v1999 = vunpack.c.l.b16 %v1967
  %v2000 = vunpack.c.l.b16 %v1968
  %v2001 = vunpack.c.l.b16 %v1969
  %v2002 = vunpack.c.l.b16 %v1970
  %v2003 = vunpack.c.l.b16 %v1971
  %v2004 = vunpack.c.l.b16 %v1972
  %v2005 = vunpack.c.l.b16 %v1973
  %v2006 = vpack.c.b16 %v1991, %v1990
  %v2007 = vpack.c.b16 %v1993, %v1992
  %v2008 = vpack.c.b16 %v1995, %v1994
  %v2009 = vpack.c.b16 %v1997, %v1996
  %v2010 = vpack.c.b16 %v1999, %v1998
  %v2011 = vpack.c.b16 %v2001, %v2000
  %v2012 = vpack.c.b16 %v2003, %v2002
  %v2013 = vpack.c.b16 %v2005, %v2004
  %2022 = vmatpush.bf16.msra.mxu0 %v2013
  %2023 = vmatpush.bf16.msra.mxu0 %v2012
  %2024 = vmatpush.bf16.msra.mxu0 %v2011
  %2025 = vmatpush.bf16.msra.mxu0 %v2010
  %2026 = vmatpush.bf16.msra.mxu0 %v2009
  %2027 = vmatpush.bf16.msra.mxu0 %v2008
  %2028 = vmatpush.bf16.msra.mxu0 %v2007
  %2029 = vmatpush.bf16.msra.mxu0 %v2006
  %2030 = vmatmul.bf16.gmra.mxu0 %v884
  %v2031 = vpop.f32.mrf.mxu0
  %v2032 = vadd.f32 0.0, %v2031
  %v2033 = vpop.f32.mrf.mxu0
  %v2034 = vadd.f32 0.0, %v2033
  %2035 = vmatmul.bf16.gmra.mxu0 %v885
  %v2036 = vpop.f32.mrf.mxu0
  %v2037 = vadd.f32 0.0, %v2036
  %v2038 = vpop.f32.mrf.mxu0
  %v2039 = vadd.f32 0.0, %v2038
  %2040 = vmatmul.bf16.gmra.mxu0 %v886
  %v2041 = vpop.f32.mrf.mxu0
  %v2042 = vadd.f32 0.0, %v2041
  %v2043 = vpop.f32.mrf.mxu0
  %v2044 = vadd.f32 0.0, %v2043
  %2045 = vmatmul.bf16.gmra.mxu0 %v887
  %v2046 = vpop.f32.mrf.mxu0
  %v2047 = vadd.f32 0.0, %v2046
  %v2048 = vpop.f32.mrf.mxu0
  %v2049 = vadd.f32 0.0, %v2048
  %2050 = vmatmul.bf16.gmra.mxu0 %v888
  %v2051 = vpop.f32.mrf.mxu0
  %v2052 = vadd.f32 0.0, %v2051
  %v2053 = vpop.f32.mrf.mxu0
  %v2054 = vadd.f32 0.0, %v2053
  %2055 = vmatmul.bf16.gmra.mxu0 %v889
  %v2056 = vpop.f32.mrf.mxu0
  %v2057 = vadd.f32 0.0, %v2056
  %v2058 = vpop.f32.mrf.mxu0
  %v2059 = vadd.f32 0.0, %v2058
  %2060 = vmatmul.bf16.gmra.mxu0 %v890
  %v2061 = vpop.f32.mrf.mxu0
  %v2062 = vadd.f32 0.0, %v2061
  %v2063 = vpop.f32.mrf.mxu0
  %v2064 = vadd.f32 0.0, %v2063
  %2065 = vmatmul.bf16.gmra.mxu0 %v891
  %v2066 = vpop.f32.mrf.mxu0
  %v2067 = vadd.f32 0.0, %v2066
  %v2068 = vpop.f32.mrf.mxu0
  %v2069 = vadd.f32 0.0, %v2068
  %2070 = vmatmul.bf16.gmra.mxu0 %v892
  %v2071 = vpop.f32.mrf.mxu0
  %v2072 = vadd.f32 0.0, %v2071
  %v2073 = vpop.f32.mrf.mxu0
  %v2074 = vadd.f32 0.0, %v2073
  %2075 = vmatmul.bf16.gmra.mxu0 %v893
  %v2076 = vpop.f32.mrf.mxu0
  %v2077 = vadd.f32 0.0, %v2076
  %v2078 = vpop.f32.mrf.mxu0
  %v2079 = vadd.f32 0.0, %v2078
  %2080 = vmatmul.bf16.gmra.mxu0 %v894
  %v2081 = vpop.f32.mrf.mxu0
  %v2082 = vadd.f32 0.0, %v2081
  %v2083 = vpop.f32.mrf.mxu0
  %v2084 = vadd.f32 0.0, %v2083
  %2085 = vmatmul.bf16.gmra.mxu0 %v895
  %v2086 = vpop.f32.mrf.mxu0
  %v2087 = vadd.f32 0.0, %v2086
  %v2088 = vpop.f32.mrf.mxu0
  %v2089 = vadd.f32 0.0, %v2088
  %2090 = vmatmul.bf16.gmra.mxu0 %v896
  %v2091 = vpop.f32.mrf.mxu0
  %v2092 = vadd.f32 0.0, %v2091
  %v2093 = vpop.f32.mrf.mxu0
  %v2094 = vadd.f32 0.0, %v2093
  %2095 = vmatmul.bf16.gmra.mxu0 %v897
  %v2096 = vpop.f32.mrf.mxu0
  %v2097 = vadd.f32 0.0, %v2096
  %v2098 = vpop.f32.mrf.mxu0
  %v2099 = vadd.f32 0.0, %v2098
  %2100 = vdwg.mxu0
  %v2101 = vadd.f32 %v1888, %v2032
  %v2102 = vadd.f32 %v1890, %v2034
  %v2103 = vadd.f32 %v1893, %v2037
  %v2104 = vadd.f32 %v1895, %v2039
  %v2105 = vadd.f32 %v1898, %v2042
  %v2106 = vadd.f32 %v1900, %v2044
  %v2107 = vadd.f32 %v1903, %v2047
  %v2108 = vadd.f32 %v1905, %v2049
  %v2109 = vadd.f32 %v1908, %v2052
  %v2110 = vadd.f32 %v1910, %v2054
  %v2111 = vadd.f32 %v1913, %v2057
  %v2112 = vadd.f32 %v1915, %v2059
  %v2113 = vadd.f32 %v1918, %v2062
  %v2114 = vadd.f32 %v1920, %v2064
  %v2115 = vadd.f32 %v1923, %v2067
  %v2116 = vadd.f32 %v1925, %v2069
  %v2117 = vadd.f32 %v1928, %v2072
  %v2118 = vadd.f32 %v1930, %v2074
  %v2119 = vadd.f32 %v1933, %v2077
  %v2120 = vadd.f32 %v1935, %v2079
  %v2121 = vadd.f32 %v1938, %v2082
  %v2122 = vadd.f32 %v1940, %v2084
  %v2123 = vadd.f32 %v1943, %v2087
  %v2124 = vadd.f32 %v1945, %v2089
  %v2125 = vadd.f32 %v1948, %v2092
  %v2126 = vadd.f32 %v1950, %v2094
  %v2127 = vadd.f32 %v1953, %v2097
  %v2128 = vadd.f32 %v1955, %v2099
  %vm2157 = vcmask 1046528
  %v2158 = vrot.slane %v2101, 1
  %v2159 = vrot.slane %v2102, 1
  %v2160 = vsel %vm2157, %v2158, %v2159
  %v2161 = vrot.slane %v2103, 1
  %v2162 = vsel %vm2157, %v2159, %v2161
  %v2163 = vrot.slane %v2104, 1
  %v2164 = vsel %vm2157, %v2161, %v2163
  %v2165 = vrot.slane %v2105, 1
  %v2166 = vsel %vm2157, %v2163, %v2165
  %v2167 = vrot.slane %v2106, 1
  %v2168 = vsel %vm2157, %v2165, %v2167
  %v2169 = vrot.slane %v2107, 1
  %v2170 = vsel %vm2157, %v2167, %v2169
  %v2171 = vrot.slane %v2108, 1
  %v2172 = vsel %vm2157, %v2169, %v2171
  %v2173 = vrot.slane %v2109, 1
  %v2174 = vsel %vm2157, %v2171, %v2173
  %v2175 = vrot.slane %v2110, 1
  %v2176 = vsel %vm2157, %v2173, %v2175
  %v2177 = vrot.slane %v2111, 1
  %v2178 = vsel %vm2157, %v2175, %v2177
  %v2179 = vrot.slane %v2112, 1
  %v2180 = vsel %vm2157, %v2177, %v2179
  %v2181 = vrot.slane %v2113, 1
  %v2182 = vsel %vm2157, %v2179, %v2181
  %v2183 = vrot.slane %v2114, 1
  %v2184 = vsel %vm2157, %v2181, %v2183
  %v2185 = vrot.slane %v2115, 1
  %v2186 = vsel %vm2157, %v2183, %v2185
  %v2187 = vrot.slane %v2116, 1
  %v2188 = vsel %vm2157, %v2185, %v2187
  %v2189 = vrot.slane %v2117, 1
  %v2190 = vsel %vm2157, %v2187, %v2189
  %v2191 = vrot.slane %v2118, 1
  %v2192 = vsel %vm2157, %v2189, %v2191
  %v2193 = vrot.slane %v2119, 1
  %v2194 = vsel %vm2157, %v2191, %v2193
  %v2195 = vrot.slane %v2120, 1
  %v2196 = vsel %vm2157, %v2193, %v2195
  %v2197 = vrot.slane %v2121, 1
  %v2198 = vsel %vm2157, %v2195, %v2197
  %v2199 = vrot.slane %v2122, 1
  %v2200 = vsel %vm2157, %v2197, %v2199
  %v2201 = vrot.slane %v2123, 1
  %v2202 = vsel %vm2157, %v2199, %v2201
  %v2203 = vrot.slane %v2124, 1
  %v2204 = vsel %vm2157, %v2201, %v2203
  %v2205 = vrot.slane %v2125, 1
  %v2206 = vsel %vm2157, %v2203, %v2205
  %v2207 = vrot.slane %v2126, 1
  %v2208 = vsel %vm2157, %v2205, %v2207
  %v2209 = vrot.slane %v2127, 1
  %v2210 = vsel %vm2157, %v2207, %v2209
  %v2211 = vrot.slane %v2128, 1
  %v2212 = vsel %vm2157, %v2209, %v2211
  %v2242 = vsel %vm2157, %v2211, %v2158
  %v2243 = vadd.f32 %v1641, %v2160
  %v2244 = vadd.f32 %v1642, %v2162
  %v2245 = vadd.f32 %v1643, %v2164
  %v2246 = vadd.f32 %v1644, %v2166
  %v2247 = vadd.f32 %v1645, %v2168
  %v2248 = vadd.f32 %v1646, %v2170
  %v2249 = vadd.f32 %v1647, %v2172
  %v2250 = vadd.f32 %v1648, %v2174
  %v2251 = vadd.f32 %v1649, %v2176
  %v2252 = vadd.f32 %v1650, %v2178
  %v2253 = vadd.f32 %v1651, %v2180
  %v2254 = vadd.f32 %v1652, %v2182
  %v2255 = vadd.f32 %v1653, %v2184
  %v2256 = vadd.f32 %v1654, %v2186
  %v2257 = vadd.f32 %v1655, %v2188
  %v2258 = vadd.f32 %v1656, %v2190
  %v2259 = vadd.f32 %v1657, %v2192
  %v2260 = vadd.f32 %v1658, %v2194
  %v2261 = vadd.f32 %v1659, %v2196
  %v2262 = vadd.f32 %v1660, %v2198
  %v2263 = vadd.f32 %v1661, %v2200
  %v2264 = vadd.f32 %v1662, %v2202
  %v2265 = vadd.f32 %v1663, %v2204
  %v2266 = vadd.f32 %v1664, %v2206
  %v2267 = vadd.f32 %v1665, %v2208
  %v2268 = vadd.f32 %v1666, %v2210
  %v2269 = vadd.f32 %v1667, %v2212
  %v2270 = vadd.f32 %v1668, %v2242
  %2272 = vset.pattern.permute.xlu0 0
  %2273 = vperm.xlu0 %2272, %v234
  %v2274 = vpop.permute.xlu0 %2273
  %2277 = vset.pattern.permute.xlu0 0
  %2278 = vperm.xlu0 %2277, %v235
  %v2279 = vpop.permute.xlu0 %2278
  %2282 = vset.pattern.permute.xlu0 0
  %2283 = vperm.xlu0 %2282, %v236
  %v2284 = vpop.permute.xlu0 %2283
  %2287 = vset.pattern.permute.xlu0 0
  %2288 = vperm.xlu0 %2287, %v237
  %v2289 = vpop.permute.xlu0 %2288
  %2292 = vset.pattern.permute.xlu0 0
  %2293 = vperm.xlu0 %2292, %v238
  %v2294 = vpop.permute.xlu0 %2293
  %2297 = vset.pattern.permute.xlu0 0
  %2298 = vperm.xlu0 %2297, %v239
  %v2299 = vpop.permute.xlu0 %2298
  %2302 = vset.pattern.permute.xlu0 0
  %2303 = vperm.xlu0 %2302, %v240
  %v2304 = vpop.permute.xlu0 %2303
  %2307 = vset.pattern.permute.xlu0 0
  %2308 = vperm.xlu0 %2307, %v241
  %v2309 = vpop.permute.xlu0 %2308
  %2312 = vset.pattern.permute.xlu0 0
  %2313 = vperm.xlu0 %2312, %v242
  %v2314 = vpop.permute.xlu0 %2313
  %2317 = vset.pattern.permute.xlu0 0
  %2318 = vperm.xlu0 %2317, %v243
  %v2319 = vpop.permute.xlu0 %2318
  %2322 = vset.pattern.permute.xlu0 0
  %2323 = vperm.xlu0 %2322, %v244
  %v2324 = vpop.permute.xlu0 %2323
  %2327 = vset.pattern.permute.xlu0 0
  %2328 = vperm.xlu0 %2327, %v245
  %v2329 = vpop.permute.xlu0 %2328
  %2332 = vset.pattern.permute.xlu0 0
  %2333 = vperm.xlu0 %2332, %v246
  %v2334 = vpop.permute.xlu0 %2333
  %2337 = vset.pattern.permute.xlu0 0
  %2338 = vperm.xlu0 %2337, %v247
  %v2339 = vpop.permute.xlu0 %2338
  %2342 = vset.pattern.permute.xlu0 0
  %2343 = vperm.xlu0 %2342, %v248
  %v2344 = vpop.permute.xlu0 %2343
  %2347 = vset.pattern.permute.xlu0 0
  %2348 = vperm.xlu0 %2347, %v249
  %v2349 = vpop.permute.xlu0 %2348
  %2352 = vset.pattern.permute.xlu0 0
  %2353 = vperm.xlu0 %2352, %v250
  %v2354 = vpop.permute.xlu0 %2353
  %2357 = vset.pattern.permute.xlu0 0
  %2358 = vperm.xlu0 %2357, %v251
  %v2359 = vpop.permute.xlu0 %2358
  %2362 = vset.pattern.permute.xlu0 0
  %2363 = vperm.xlu0 %2362, %v252
  %v2364 = vpop.permute.xlu0 %2363
  %2367 = vset.pattern.permute.xlu0 0
  %2368 = vperm.xlu0 %2367, %v253
  %v2369 = vpop.permute.xlu0 %2368
  %2372 = vset.pattern.permute.xlu0 0
  %2373 = vperm.xlu0 %2372, %v254
  %v2374 = vpop.permute.xlu0 %2373
  %2377 = vset.pattern.permute.xlu0 0
  %2378 = vperm.xlu0 %2377, %v255
  %v2379 = vpop.permute.xlu0 %2378
  %2382 = vset.pattern.permute.xlu0 0
  %2383 = vperm.xlu0 %2382, %v256
  %v2384 = vpop.permute.xlu0 %2383
  %2387 = vset.pattern.permute.xlu0 0
  %2388 = vperm.xlu0 %2387, %v257
  %v2389 = vpop.permute.xlu0 %2388
  %2392 = vset.pattern.permute.xlu0 0
  %2393 = vperm.xlu0 %2392, %v258
  %v2394 = vpop.permute.xlu0 %2393
  %2397 = vset.pattern.permute.xlu0 0
  %2398 = vperm.xlu0 %2397, %v259
  %v2399 = vpop.permute.xlu0 %2398
  %2402 = vset.pattern.permute.xlu0 0
  %2403 = vperm.xlu0 %2402, %v260
  %v2404 = vpop.permute.xlu0 %2403
  %2407 = vset.pattern.permute.xlu0 0
  %2408 = vperm.xlu0 %2407, %v261
  %v2409 = vpop.permute.xlu0 %2408
  %v2411 = vmul.f32 %v2243, %v2274
  %v2412 = vmul.f32 %v2244, %v2279
  %v2413 = vmul.f32 %v2245, %v2284
  %v2414 = vmul.f32 %v2246, %v2289
  %v2415 = vmul.f32 %v2247, %v2294
  %v2416 = vmul.f32 %v2248, %v2299
  %v2417 = vmul.f32 %v2249, %v2304
  %v2418 = vmul.f32 %v2250, %v2309
  %v2419 = vmul.f32 %v2251, %v2314
  %v2420 = vmul.f32 %v2252, %v2319
  %v2421 = vmul.f32 %v2253, %v2324
  %v2422 = vmul.f32 %v2254, %v2329
  %v2423 = vmul.f32 %v2255, %v2334
  %v2424 = vmul.f32 %v2256, %v2339
  %v2425 = vmul.f32 %v2257, %v2344
  %v2426 = vmul.f32 %v2258, %v2349
  %v2427 = vmul.f32 %v2259, %v2354
  %v2428 = vmul.f32 %v2260, %v2359
  %v2429 = vmul.f32 %v2261, %v2364
  %v2430 = vmul.f32 %v2262, %v2369
  %v2431 = vmul.f32 %v2263, %v2374
  %v2432 = vmul.f32 %v2264, %v2379
  %v2433 = vmul.f32 %v2265, %v2384
  %v2434 = vmul.f32 %v2266, %v2389
  %v2435 = vmul.f32 %v2267, %v2394
  %v2436 = vmul.f32 %v2268, %v2399
  %v2437 = vmul.f32 %v2269, %v2404
  %v2438 = vmul.f32 %v2270, %v2409
  %v2439 = vadd.f32 %v2411, %v2412
  %v2440 = vadd.f32 %v2439, %v2413
  %v2441 = vadd.f32 %v2440, %v2414
  %v2442 = vadd.f32 %v2441, %v2415
  %v2443 = vadd.f32 %v2442, %v2416
  %v2444 = vadd.f32 %v2443, %v2417
  %v2445 = vadd.f32 %v2444, %v2418
  %v2446 = vadd.f32 %v2445, %v2419
  %v2447 = vadd.f32 %v2446, %v2420
  %v2448 = vadd.f32 %v2447, %v2421
  %v2449 = vadd.f32 %v2448, %v2422
  %v2450 = vadd.f32 %v2449, %v2423
  %v2451 = vadd.f32 %v2450, %v2424
  %v2452 = vadd.f32 %v2451, %v2425
  %v2453 = vadd.f32 %v2452, %v2426
  %v2454 = vadd.f32 %v2453, %v2427
  %v2455 = vadd.f32 %v2454, %v2428
  %v2456 = vadd.f32 %v2455, %v2429
  %v2457 = vadd.f32 %v2456, %v2430
  %v2458 = vadd.f32 %v2457, %v2431
  %v2459 = vadd.f32 %v2458, %v2432
  %v2460 = vadd.f32 %v2459, %v2433
  %v2461 = vadd.f32 %v2460, %v2434
  %v2462 = vadd.f32 %v2461, %v2435
  %v2463 = vadd.f32 %v2462, %v2436
  %v2464 = vadd.f32 %v2463, %v2437
  %v2465 = vadd.f32 %v2464, %v2438
  %v2466 = vrot.slane %v2465, 4
  %v2467 = vadd.f32 %v2465, %v2466
  %v2468 = vrot.slane %v2467, 2
  %v2469 = vadd.f32 %v2467, %v2468
  %v2470 = vrot.slane %v2469, 1
  %v2471 = vadd.f32 %v2469, %v2470
  %v2472 = vmul.f32 %v2471, 0.0051020407
  %v2473 = vsub.f32 %v2243, %v2472
  %v2474 = vsub.f32 %v2244, %v2472
  %v2475 = vsub.f32 %v2245, %v2472
  %v2476 = vsub.f32 %v2246, %v2472
  %v2477 = vsub.f32 %v2247, %v2472
  %v2478 = vsub.f32 %v2248, %v2472
  %v2479 = vsub.f32 %v2249, %v2472
  %v2480 = vsub.f32 %v2250, %v2472
  %v2481 = vsub.f32 %v2251, %v2472
  %v2482 = vsub.f32 %v2252, %v2472
  %v2483 = vsub.f32 %v2253, %v2472
  %v2484 = vsub.f32 %v2254, %v2472
  %v2485 = vsub.f32 %v2255, %v2472
  %v2486 = vsub.f32 %v2256, %v2472
  %v2487 = vsub.f32 %v2257, %v2472
  %v2488 = vsub.f32 %v2258, %v2472
  %v2489 = vsub.f32 %v2259, %v2472
  %v2490 = vsub.f32 %v2260, %v2472
  %v2491 = vsub.f32 %v2261, %v2472
  %v2492 = vsub.f32 %v2262, %v2472
  %v2493 = vsub.f32 %v2263, %v2472
  %v2494 = vsub.f32 %v2264, %v2472
  %v2495 = vsub.f32 %v2265, %v2472
  %v2496 = vsub.f32 %v2266, %v2472
  %v2497 = vsub.f32 %v2267, %v2472
  %v2498 = vsub.f32 %v2268, %v2472
  %v2499 = vsub.f32 %v2269, %v2472
  %v2500 = vsub.f32 %v2270, %v2472
  %v2501 = vmul.f32 %v2473, %v2274
  %v2502 = vmul.f32 %v2474, %v2279
  %v2503 = vmul.f32 %v2475, %v2284
  %v2504 = vmul.f32 %v2476, %v2289
  %v2505 = vmul.f32 %v2477, %v2294
  %v2506 = vmul.f32 %v2478, %v2299
  %v2507 = vmul.f32 %v2479, %v2304
  %v2508 = vmul.f32 %v2480, %v2309
  %v2509 = vmul.f32 %v2481, %v2314
  %v2510 = vmul.f32 %v2482, %v2319
  %v2511 = vmul.f32 %v2483, %v2324
  %v2512 = vmul.f32 %v2484, %v2329
  %v2513 = vmul.f32 %v2485, %v2334
  %v2514 = vmul.f32 %v2486, %v2339
  %v2515 = vmul.f32 %v2487, %v2344
  %v2516 = vmul.f32 %v2488, %v2349
  %v2517 = vmul.f32 %v2489, %v2354
  %v2518 = vmul.f32 %v2490, %v2359
  %v2519 = vmul.f32 %v2491, %v2364
  %v2520 = vmul.f32 %v2492, %v2369
  %v2521 = vmul.f32 %v2493, %v2374
  %v2522 = vmul.f32 %v2494, %v2379
  %v2523 = vmul.f32 %v2495, %v2384
  %v2524 = vmul.f32 %v2496, %v2389
  %v2525 = vmul.f32 %v2497, %v2394
  %v2526 = vmul.f32 %v2498, %v2399
  %v2527 = vmul.f32 %v2499, %v2404
  %v2528 = vmul.f32 %v2500, %v2409
  %v2529 = vmul.f32 %v2501, %v2501
  %v2530 = vmul.f32 %v2502, %v2502
  %v2531 = vmul.f32 %v2503, %v2503
  %v2532 = vmul.f32 %v2504, %v2504
  %v2533 = vmul.f32 %v2505, %v2505
  %v2534 = vmul.f32 %v2506, %v2506
  %v2535 = vmul.f32 %v2507, %v2507
  %v2536 = vmul.f32 %v2508, %v2508
  %v2537 = vmul.f32 %v2509, %v2509
  %v2538 = vmul.f32 %v2510, %v2510
  %v2539 = vmul.f32 %v2511, %v2511
  %v2540 = vmul.f32 %v2512, %v2512
  %v2541 = vmul.f32 %v2513, %v2513
  %v2542 = vmul.f32 %v2514, %v2514
  %v2543 = vmul.f32 %v2515, %v2515
  %v2544 = vmul.f32 %v2516, %v2516
  %v2545 = vmul.f32 %v2517, %v2517
  %v2546 = vmul.f32 %v2518, %v2518
  %v2547 = vmul.f32 %v2519, %v2519
  %v2548 = vmul.f32 %v2520, %v2520
  %v2549 = vmul.f32 %v2521, %v2521
  %v2550 = vmul.f32 %v2522, %v2522
  %v2551 = vmul.f32 %v2523, %v2523
  %v2552 = vmul.f32 %v2524, %v2524
  %v2553 = vmul.f32 %v2525, %v2525
  %v2554 = vmul.f32 %v2526, %v2526
  %v2555 = vmul.f32 %v2527, %v2527
  %v2556 = vmul.f32 %v2528, %v2528
  %v2557 = vadd.f32 %v2529, %v2530
  %v2558 = vadd.f32 %v2557, %v2531
  %v2559 = vadd.f32 %v2558, %v2532
  %v2560 = vadd.f32 %v2559, %v2533
  %v2561 = vadd.f32 %v2560, %v2534
  %v2562 = vadd.f32 %v2561, %v2535
  %v2563 = vadd.f32 %v2562, %v2536
  %v2564 = vadd.f32 %v2563, %v2537
  %v2565 = vadd.f32 %v2564, %v2538
  %v2566 = vadd.f32 %v2565, %v2539
  %v2567 = vadd.f32 %v2566, %v2540
  %v2568 = vadd.f32 %v2567, %v2541
  %v2569 = vadd.f32 %v2568, %v2542
  %v2570 = vadd.f32 %v2569, %v2543
  %v2571 = vadd.f32 %v2570, %v2544
  %v2572 = vadd.f32 %v2571, %v2545
  %v2573 = vadd.f32 %v2572, %v2546
  %v2574 = vadd.f32 %v2573, %v2547
  %v2575 = vadd.f32 %v2574, %v2548
  %v2576 = vadd.f32 %v2575, %v2549
  %v2577 = vadd.f32 %v2576, %v2550
  %v2578 = vadd.f32 %v2577, %v2551
  %v2579 = vadd.f32 %v2578, %v2552
  %v2580 = vadd.f32 %v2579, %v2553
  %v2581 = vadd.f32 %v2580, %v2554
  %v2582 = vadd.f32 %v2581, %v2555
  %v2583 = vadd.f32 %v2582, %v2556
  %v2584 = vrot.slane %v2583, 4
  %v2585 = vadd.f32 %v2583, %v2584
  %v2586 = vrot.slane %v2585, 2
  %v2587 = vadd.f32 %v2585, %v2586
  %v2588 = vrot.slane %v2587, 1
  %v2589 = vadd.f32 %v2587, %v2588
  %v2590 = vmul.f32 %v2589, 0.0051020407
  %v2591 = vadd.f32 %v2590, 1e-05
  %v2592 = vrsqrt.pop %v2591
  %v2593 = vmul.f32 %v2592, %v2591
  %v2594 = vmul.f32 %v2593, %v2592
  %v2595 = vmul.f32 0.5, %v2594
  %v2596 = vsub.f32 1.5, %v2595
  %v2597 = vmul.f32 %v2592, %v2596
  %vm2598 = vweird.f32 %v2591
  %vm2599 = vweird.f32 %v2592
  %vm2600 = vmor %vm2598, %vm2599
  %v2601 = vsel %vm2600, %v2592, %v2597
  %v2602 = vmul.f32 %v2601, %v268
  %v2603 = vperm.slane %v2602, 0
  %v2604 = vmul.f32 %v2501, %v2603
  %v2605 = vmul.f32 %v2502, %v2603
  %v2606 = vmul.f32 %v2503, %v2603
  %v2607 = vmul.f32 %v2504, %v2603
  %v2608 = vmul.f32 %v2505, %v2603
  %v2609 = vmul.f32 %v2506, %v2603
  %v2610 = vmul.f32 %v2507, %v2603
  %v2611 = vmul.f32 %v2508, %v2603
  %v2612 = vmul.f32 %v2509, %v2603
  %v2613 = vmul.f32 %v2510, %v2603
  %v2614 = vmul.f32 %v2511, %v2603
  %v2615 = vmul.f32 %v2512, %v2603
  %v2616 = vmul.f32 %v2513, %v2603
  %v2617 = vmul.f32 %v2514, %v2603
  %v2618 = vmul.f32 %v2515, %v2603
  %v2619 = vmul.f32 %v2516, %v2603
  %v2620 = vmul.f32 %v2517, %v2603
  %v2621 = vmul.f32 %v2518, %v2603
  %v2622 = vmul.f32 %v2519, %v2603
  %v2623 = vmul.f32 %v2520, %v2603
  %v2624 = vmul.f32 %v2521, %v2603
  %v2625 = vmul.f32 %v2522, %v2603
  %v2626 = vmul.f32 %v2523, %v2603
  %v2627 = vmul.f32 %v2524, %v2603
  %v2628 = vmul.f32 %v2525, %v2603
  %v2629 = vmul.f32 %v2526, %v2603
  %v2630 = vmul.f32 %v2527, %v2603
  %v2631 = vmul.f32 %v2528, %v2603
  %v2633 = vperm.slane %v269, 0
  %v2635 = vadd.f32 %v2604, %v2633
  %v2636 = vadd.f32 %v2605, %v2633
  %v2637 = vadd.f32 %v2606, %v2633
  %v2638 = vadd.f32 %v2607, %v2633
  %v2639 = vadd.f32 %v2608, %v2633
  %v2640 = vadd.f32 %v2609, %v2633
  %v2641 = vadd.f32 %v2610, %v2633
  %v2642 = vadd.f32 %v2611, %v2633
  %v2643 = vadd.f32 %v2612, %v2633
  %v2644 = vadd.f32 %v2613, %v2633
  %v2645 = vadd.f32 %v2614, %v2633
  %v2646 = vadd.f32 %v2615, %v2633
  %v2647 = vadd.f32 %v2616, %v2633
  %v2648 = vadd.f32 %v2617, %v2633
  %v2649 = vadd.f32 %v2618, %v2633
  %v2650 = vadd.f32 %v2619, %v2633
  %v2651 = vadd.f32 %v2620, %v2633
  %v2652 = vadd.f32 %v2621, %v2633
  %v2653 = vadd.f32 %v2622, %v2633
  %v2654 = vadd.f32 %v2623, %v2633
  %v2655 = vadd.f32 %v2624, %v2633
  %v2656 = vadd.f32 %v2625, %v2633
  %v2657 = vadd.f32 %v2626, %v2633
  %v2658 = vadd.f32 %v2627, %v2633
  %v2659 = vadd.f32 %v2628, %v2633
  %v2660 = vadd.f32 %v2629, %v2633
  %v2661 = vadd.f32 %v2630, %v2633
  %v2662 = vadd.f32 %v2631, %v2633
  %v2663 = vmax.f32 %v2635, 0.0
  %v2664 = vmax.f32 %v2636, 0.0
  %v2665 = vmax.f32 %v2637, 0.0
  %v2666 = vmax.f32 %v2638, 0.0
  %v2667 = vmax.f32 %v2639, 0.0
  %v2668 = vmax.f32 %v2640, 0.0
  %v2669 = vmax.f32 %v2641, 0.0
  %v2670 = vmax.f32 %v2642, 0.0
  %v2671 = vmax.f32 %v2643, 0.0
  %v2672 = vmax.f32 %v2644, 0.0
  %v2673 = vmax.f32 %v2645, 0.0
  %v2674 = vmax.f32 %v2646, 0.0
  %v2675 = vmax.f32 %v2647, 0.0
  %v2676 = vmax.f32 %v2648, 0.0
  %v2677 = vmax.f32 %v2649, 0.0
  %v2678 = vmax.f32 %v2650, 0.0
  %v2679 = vmax.f32 %v2651, 0.0
  %v2680 = vmax.f32 %v2652, 0.0
  %v2681 = vmax.f32 %v2653, 0.0
  %v2682 = vmax.f32 %v2654, 0.0
  %v2683 = vmax.f32 %v2655, 0.0
  %v2684 = vmax.f32 %v2656, 0.0
  %v2685 = vmax.f32 %v2657, 0.0
  %v2686 = vmax.f32 %v2658, 0.0
  %v2687 = vmax.f32 %v2659, 0.0
  %v2688 = vmax.f32 %v2660, 0.0
  %v2689 = vmax.f32 %v2661, 0.0
  %v2690 = vmax.f32 %v2662, 0.0
  %v2691 = vmul.f32 %v2663, %v2274
  %v2692 = vmul.f32 %v2664, %v2279
  %v2693 = vmul.f32 %v2665, %v2284
  %v2694 = vmul.f32 %v2666, %v2289
  %v2695 = vmul.f32 %v2667, %v2294
  %v2696 = vmul.f32 %v2668, %v2299
  %v2697 = vmul.f32 %v2669, %v2304
  %v2698 = vmul.f32 %v2670, %v2309
  %v2699 = vmul.f32 %v2671, %v2314
  %v2700 = vmul.f32 %v2672, %v2319
  %v2701 = vmul.f32 %v2673, %v2324
  %v2702 = vmul.f32 %v2674, %v2329
  %v2703 = vmul.f32 %v2675, %v2334
  %v2704 = vmul.f32 %v2676, %v2339
  %v2705 = vmul.f32 %v2677, %v2344
  %v2706 = vmul.f32 %v2678, %v2349
  %v2707 = vmul.f32 %v2679, %v2354
  %v2708 = vmul.f32 %v2680, %v2359
  %v2709 = vmul.f32 %v2681, %v2364
  %v2710 = vmul.f32 %v2682, %v2369
  %v2711 = vmul.f32 %v2683, %v2374
  %v2712 = vmul.f32 %v2684, %v2379
  %v2713 = vmul.f32 %v2685, %v2384
  %v2714 = vmul.f32 %v2686, %v2389
  %v2715 = vmul.f32 %v2687, %v2394
  %v2716 = vmul.f32 %v2688, %v2399
  %v2717 = vmul.f32 %v2689, %v2404
  %v2718 = vmul.f32 %v2690, %v2409
  %v2719 = vpack.c.bf16 %v2691, %v2691
  %v2720 = vpack.c.bf16 %v2692, %v2692
  %v2721 = vpack.c.bf16 %v2693, %v2693
  %v2722 = vpack.c.bf16 %v2694, %v2694
  %v2723 = vpack.c.bf16 %v2695, %v2695
  %v2724 = vpack.c.bf16 %v2696, %v2696
  %v2725 = vpack.c.bf16 %v2697, %v2697
  %v2726 = vpack.c.bf16 %v2698, %v2698
  %v2727 = vpack.c.bf16 %v2699, %v2699
  %v2728 = vpack.c.bf16 %v2700, %v2700
  %v2729 = vpack.c.bf16 %v2701, %v2701
  %v2730 = vpack.c.bf16 %v2702, %v2702
  %v2731 = vpack.c.bf16 %v2703, %v2703
  %v2732 = vpack.c.bf16 %v2704, %v2704
  %v2733 = vpack.c.bf16 %v2705, %v2705
  %v2734 = vpack.c.bf16 %v2706, %v2706
  %v2735 = vpack.c.bf16 %v2707, %v2707
  %v2736 = vpack.c.bf16 %v2708, %v2708
  %v2737 = vpack.c.bf16 %v2709, %v2709
  %v2738 = vpack.c.bf16 %v2710, %v2710
  %v2739 = vpack.c.bf16 %v2711, %v2711
  %v2740 = vpack.c.bf16 %v2712, %v2712
  %v2741 = vpack.c.bf16 %v2713, %v2713
  %v2742 = vpack.c.bf16 %v2714, %v2714
  %v2743 = vpack.c.bf16 %v2715, %v2715
  %v2744 = vpack.c.bf16 %v2716, %v2716
  %v2745 = vpack.c.bf16 %v2717, %v2717
  %v2746 = vpack.c.bf16 %v2718, %v2718
  %2747 = vst [vmem:[%s314] sm:$0xf] %v2719
  %2748 = vst [vmem:[%s314 + $0x4] sm:$0xf] %v2720
  %2749 = vst [vmem:[%s314 + $0x8] sm:$0xf] %v2721
  %2750 = vst [vmem:[%s314 + $0xc] sm:$0xf] %v2722
  %2751 = vst [vmem:[%s314 + $0x10] sm:$0xf] %v2723
  %2752 = vst [vmem:[%s314 + $0x14] sm:$0xf] %v2724
  %2753 = vst [vmem:[%s314 + $0x18] sm:$0xf] %v2725
  %2754 = vst [vmem:[%s314 + $0x1c] sm:$0xf] %v2726
  %2755 = vst [vmem:[%s314 + $0x20] sm:$0xf] %v2727
  %2756 = vst [vmem:[%s314 + $0x24] sm:$0xf] %v2728
  %2757 = vst [vmem:[%s314 + $0x28] sm:$0xf] %v2729
  %2758 = vst [vmem:[%s314 + $0x2c] sm:$0xf] %v2730
  %2759 = vst [vmem:[%s314 + $0x30] sm:$0xf] %v2731
  %2760 = vst [vmem:[%s314 + $0x34] sm:$0xf] %v2732
  %2761 = vst [vmem:[%s314 + $0x38] sm:$0xf] %v2733
  %2762 = vst [vmem:[%s314 + $0x3c] sm:$0xf] %v2734
  %2763 = vst [vmem:[%s314 + $0x40] sm:$0xf] %v2735
  %2764 = vst [vmem:[%s314 + $0x44] sm:$0xf] %v2736
  %2765 = vst [vmem:[%s314 + $0x48] sm:$0xf] %v2737
  %2766 = vst [vmem:[%s314 + $0x4c] sm:$0xf] %v2738
  %2767 = vst [vmem:[%s314 + $0x50] sm:$0xf] %v2739
  %2768 = vst [vmem:[%s314 + $0x54] sm:$0xf] %v2740
  %2769 = vst [vmem:[%s314 + $0x58] sm:$0xf] %v2741
  %2770 = vst [vmem:[%s314 + $0x5c] sm:$0xf] %v2742
  %2771 = vst [vmem:[%s314 + $0x60] sm:$0xf] %v2743
  %2772 = vst [vmem:[%s314 + $0x64] sm:$0xf] %v2744
  %2773 = vst [vmem:[%s314 + $0x68] sm:$0xf] %v2745
  %2774 = vst [vmem:[%s314 + $0x6c] sm:$0xf] %v2746
  %s2775 = smul.u32 4, 3
  %s2776 = smul.u32 %s2775, 3
  %s2777 = smul.u32 %s2776, 16
  %s2778 = smul.u32 %s2777, 1
  %s2779 = sshll.u32 %s2778, 4
  %2780 = dma.done %s73, %s2779
  %v2781 = vld [vmem:[%s5] sm:$0x1]
  %v2782 = vld [vmem:[%s6] sm:$0x1]
  %v2783 = vld [vmem:[#allocation2] sm:$0xf]
  %v2784 = vld [vmem:[#allocation2 + $0x4] sm:$0xf]
  %v2785 = vld [vmem:[#allocation2 + $0x8] sm:$0xf]
  %v2786 = vld [vmem:[#allocation2 + $0xc] sm:$0xf]
  %v2787 = vld [vmem:[#allocation2 + $0x10] sm:$0xf]
  %v2788 = vld [vmem:[#allocation2 + $0x14] sm:$0xf]
  %v2789 = vld [vmem:[#allocation2 + $0x18] sm:$0xf]
  %v2790 = vld [vmem:[#allocation2 + $0x1c] sm:$0xf]
  %v2791 = vld [vmem:[#allocation2 + $0x20] sm:$0xf]
  %v2792 = vld [vmem:[#allocation2 + $0x24] sm:$0xf]
  %v2793 = vld [vmem:[#allocation2 + $0x28] sm:$0xf]
  %v2794 = vld [vmem:[#allocation2 + $0x2c] sm:$0xf]
  %v2795 = vld [vmem:[#allocation2 + $0x30] sm:$0xf]
  %v2796 = vld [vmem:[#allocation2 + $0x34] sm:$0xf]
  %v2797 = vld [vmem:[#allocation2 + $0x38] sm:$0xf]
  %v2798 = vld [vmem:[#allocation2 + $0x3c] sm:$0xf]
  %v2799 = vld [vmem:[#allocation2 + $0x40] sm:$0xf]
  %v2800 = vld [vmem:[#allocation2 + $0x44] sm:$0xf]
  %v2801 = vld [vmem:[#allocation2 + $0x48] sm:$0xf]
  %v2802 = vld [vmem:[#allocation2 + $0x4c] sm:$0xf]
  %v2803 = vld [vmem:[#allocation2 + $0x50] sm:$0xf]
  %v2804 = vld [vmem:[#allocation2 + $0x54] sm:$0xf]
  %v2805 = vld [vmem:[#allocation2 + $0x58] sm:$0xf]
  %v2806 = vld [vmem:[#allocation2 + $0x5c] sm:$0xf]
  %v2807 = vld [vmem:[#allocation2 + $0x60] sm:$0xf]
  %v2808 = vld [vmem:[#allocation2 + $0x64] sm:$0xf]
  %v2809 = vld [vmem:[#allocation2 + $0x68] sm:$0xf]
  %v2810 = vld [vmem:[#allocation2 + $0x6c] sm:$0xf]
  %v2811 = vld [vmem:[#allocation3] sm:$0xf]
  %v2812 = vld [vmem:[#allocation3 + $0x4] sm:$0xf]
  %v2813 = vld [vmem:[#allocation3 + $0x8] sm:$0xf]
  %v2814 = vld [vmem:[#allocation3 + $0xc] sm:$0xf]
  %v2815 = vld [vmem:[#allocation3 + $0x10] sm:$0xf]
  %v2816 = vld [vmem:[#allocation3 + $0x14] sm:$0xf]
  %v2817 = vld [vmem:[#allocation3 + $0x18] sm:$0xf]
  %v2818 = vld [vmem:[#allocation3 + $0x1c] sm:$0xf]
  %v2819 = vld [vmem:[#allocation3 + $0x20] sm:$0xf]
  %v2820 = vld [vmem:[#allocation3 + $0x24] sm:$0xf]
  %v2821 = vld [vmem:[#allocation3 + $0x28] sm:$0xf]
  %v2822 = vld [vmem:[#allocation3 + $0x2c] sm:$0xf]
  %v2823 = vld [vmem:[#allocation3 + $0x30] sm:$0xf]
  %v2824 = vld [vmem:[#allocation3 + $0x34] sm:$0xf]
  %v2825 = vld [vmem:[#allocation3 + $0x38] sm:$0xf]
  %v2826 = vld [vmem:[#allocation3 + $0x3c] sm:$0xf]
  %v2827 = vld [vmem:[%s314] sm:$0xf]
  %v2828 = vld [vmem:[%s314 + $0x4] sm:$0xf]
  %v2829 = vld [vmem:[%s314 + $0x8] sm:$0xf]
  %v2830 = vld [vmem:[%s314 + $0xc] sm:$0xf]
  %v2831 = vld [vmem:[%s314 + $0x10] sm:$0xf]
  %v2832 = vld [vmem:[%s314 + $0x14] sm:$0xf]
  %v2833 = vld [vmem:[%s314 + $0x18] sm:$0xf]
  %v2834 = vld [vmem:[%s314 + $0x1c] sm:$0xf]
  %v2835 = vld [vmem:[%s314 + $0x20] sm:$0xf]
  %v2836 = vld [vmem:[%s314 + $0x24] sm:$0xf]
  %v2837 = vld [vmem:[%s314 + $0x28] sm:$0xf]
  %v2838 = vld [vmem:[%s314 + $0x2c] sm:$0xf]
  %v2839 = vld [vmem:[%s314 + $0x30] sm:$0xf]
  %v2840 = vld [vmem:[%s314 + $0x34] sm:$0xf]
  %v2841 = vld [vmem:[%s314 + $0x38] sm:$0xf]
  %v2842 = vld [vmem:[%s314 + $0x3c] sm:$0xf]
  %v2843 = vld [vmem:[%s314 + $0x40] sm:$0xf]
  %v2844 = vld [vmem:[%s314 + $0x44] sm:$0xf]
  %v2845 = vld [vmem:[%s314 + $0x48] sm:$0xf]
  %v2846 = vld [vmem:[%s314 + $0x4c] sm:$0xf]
  %v2847 = vld [vmem:[%s314 + $0x50] sm:$0xf]
  %v2848 = vld [vmem:[%s314 + $0x54] sm:$0xf]
  %v2849 = vld [vmem:[%s314 + $0x58] sm:$0xf]
  %v2850 = vld [vmem:[%s314 + $0x5c] sm:$0xf]
  %v2851 = vld [vmem:[%s314 + $0x60] sm:$0xf]
  %v2852 = vld [vmem:[%s314 + $0x64] sm:$0xf]
  %v2853 = vld [vmem:[%s314 + $0x68] sm:$0xf]
  %v2854 = vld [vmem:[%s314 + $0x6c] sm:$0xf]
  %s2855 = scalar_lea.vmem [#allocation3], 192
  %v2856 = vld [vmem:[%s2855] sm:$0xf]
  %v2857 = vld [vmem:[%s2855 + $0x4] sm:$0xf]
  %v2858 = vld [vmem:[%s2855 + $0x8] sm:$0xf]
  %v2859 = vld [vmem:[%s2855 + $0xc] sm:$0xf]
  %v2860 = vld [vmem:[%s2855 + $0x10] sm:$0xf]
  %v2861 = vld [vmem:[%s2855 + $0x14] sm:$0xf]
  %v2862 = vld [vmem:[%s2855 + $0x18] sm:$0xf]
  %v2863 = vld [vmem:[%s2855 + $0x1c] sm:$0xf]
  %v2864 = vld [vmem:[%s2855 + $0x20] sm:$0xf]
  %v2865 = vld [vmem:[%s2855 + $0x24] sm:$0xf]
  %v2866 = vld [vmem:[%s2855 + $0x28] sm:$0xf]
  %v2867 = vld [vmem:[%s2855 + $0x2c] sm:$0xf]
  %v2868 = vld [vmem:[%s2855 + $0x30] sm:$0xf]
  %v2869 = vld [vmem:[%s2855 + $0x34] sm:$0xf]
  %v2870 = vld [vmem:[%s2855 + $0x38] sm:$0xf]
  %v2871 = vld [vmem:[%s2855 + $0x3c] sm:$0xf]
  %v2900 = vunpack.c.l.b16 %v2827
  %v2901 = vunpack.c.l.b16 %v2828
  %v2902 = vunpack.c.l.b16 %v2829
  %v2903 = vunpack.c.l.b16 %v2830
  %v2904 = vunpack.c.l.b16 %v2831
  %v2905 = vunpack.c.l.b16 %v2832
  %v2906 = vunpack.c.l.b16 %v2833
  %v2907 = vunpack.c.l.b16 %v2834
  %v2908 = vunpack.c.l.b16 %v2835
  %v2909 = vunpack.c.l.b16 %v2836
  %v2910 = vunpack.c.l.b16 %v2837
  %v2911 = vunpack.c.l.b16 %v2838
  %v2912 = vunpack.c.l.b16 %v2839
  %v2913 = vunpack.c.l.b16 %v2840
  %v2914 = vunpack.c.l.b16 %v2841
  %v2915 = vunpack.c.l.b16 %v2842
  %v2916 = vunpack.c.l.b16 %v2843
  %v2917 = vunpack.c.l.b16 %v2844
  %v2918 = vunpack.c.l.b16 %v2845
  %v2919 = vunpack.c.l.b16 %v2846
  %v2920 = vunpack.c.l.b16 %v2847
  %v2921 = vunpack.c.l.b16 %v2848
  %v2922 = vunpack.c.l.b16 %v2849
  %v2923 = vunpack.c.l.b16 %v2850
  %v2924 = vunpack.c.l.b16 %v2851
  %v2925 = vunpack.c.l.b16 %v2852
  %v2926 = vunpack.c.l.b16 %v2853
  %v2927 = vunpack.c.l.b16 %v2854
  %v2928 = vpack.c.b16 %v2901, %v2900
  %v2929 = vpack.c.b16 %v2903, %v2902
  %v2930 = vpack.c.b16 %v2905, %v2904
  %v2931 = vpack.c.b16 %v2907, %v2906
  %v2932 = vpack.c.b16 %v2909, %v2908
  %v2933 = vpack.c.b16 %v2911, %v2910
  %v2934 = vpack.c.b16 %v2913, %v2912
  %v2935 = vpack.c.b16 %v2915, %v2914
  %v2936 = vpack.c.b16 %v2917, %v2916
  %v2937 = vpack.c.b16 %v2919, %v2918
  %v2938 = vpack.c.b16 %v2921, %v2920
  %v2939 = vpack.c.b16 %v2923, %v2922
  %v2940 = vpack.c.b16 %v2925, %v2924
  %v2941 = vpack.c.b16 %v2927, %v2926
  %v2972 = vunpack.c.l.b16 %v2856
  %v2973 = vunpack.c.l.b16 %v2857
  %v2974 = vunpack.c.l.b16 %v2858
  %v2975 = vunpack.c.l.b16 %v2859
  %v2976 = vunpack.c.l.b16 %v2860
  %v2977 = vunpack.c.l.b16 %v2861
  %v2978 = vunpack.c.l.b16 %v2862
  %v2979 = vunpack.c.l.b16 %v2863
  %v2980 = vunpack.c.l.b16 %v2864
  %v2981 = vunpack.c.l.b16 %v2865
  %v2982 = vunpack.c.l.b16 %v2866
  %v2983 = vunpack.c.l.b16 %v2867
  %v2984 = vunpack.c.l.b16 %v2868
  %v2985 = vunpack.c.l.b16 %v2869
  %v2986 = vunpack.c.l.b16 %v2870
  %v2987 = vunpack.c.l.b16 %v2871
  %v2988 = vpack.c.b16 %v2973, %v2972
  %v2989 = vpack.c.b16 %v2975, %v2974
  %v2990 = vpack.c.b16 %v2977, %v2976
  %v2991 = vpack.c.b16 %v2979, %v2978
  %v2992 = vpack.c.b16 %v2981, %v2980
  %v2993 = vpack.c.b16 %v2983, %v2982
  %v2994 = vpack.c.b16 %v2985, %v2984
  %v2995 = vpack.c.b16 %v2987, %v2986
  %3004 = vmatpush.bf16.msra.mxu0 %v2995
  %3005 = vmatpush.bf16.msra.mxu0 %v2994
  %3006 = vmatpush.bf16.msra.mxu0 %v2993
  %3007 = vmatpush.bf16.msra.mxu0 %v2992
  %3008 = vmatpush.bf16.msra.mxu0 %v2991
  %3009 = vmatpush.bf16.msra.mxu0 %v2990
  %3010 = vmatpush.bf16.msra.mxu0 %v2989
  %3011 = vmatpush.bf16.msra.mxu0 %v2988
  %3012 = vmatmul.bf16.gmra.mxu0 %v2928
  %v3013 = vpop.f32.mrf.mxu0
  %v3014 = vadd.f32 0.0, %v3013
  %v3015 = vpop.f32.mrf.mxu0
  %v3016 = vadd.f32 0.0, %v3015
  %3017 = vmatmul.bf16.gmra.mxu0 %v2929
  %v3018 = vpop.f32.mrf.mxu0
  %v3019 = vadd.f32 0.0, %v3018
  %v3020 = vpop.f32.mrf.mxu0
  %v3021 = vadd.f32 0.0, %v3020
  %3022 = vmatmul.bf16.gmra.mxu0 %v2930
  %v3023 = vpop.f32.mrf.mxu0
  %v3024 = vadd.f32 0.0, %v3023
  %v3025 = vpop.f32.mrf.mxu0
  %v3026 = vadd.f32 0.0, %v3025
  %3027 = vmatmul.bf16.gmra.mxu0 %v2931
  %v3028 = vpop.f32.mrf.mxu0
  %v3029 = vadd.f32 0.0, %v3028
  %v3030 = vpop.f32.mrf.mxu0
  %v3031 = vadd.f32 0.0, %v3030
  %3032 = vmatmul.bf16.gmra.mxu0 %v2932
  %v3033 = vpop.f32.mrf.mxu0
  %v3034 = vadd.f32 0.0, %v3033
  %v3035 = vpop.f32.mrf.mxu0
  %v3036 = vadd.f32 0.0, %v3035
  %3037 = vmatmul.bf16.gmra.mxu0 %v2933
  %v3038 = vpop.f32.mrf.mxu0
  %v3039 = vadd.f32 0.0, %v3038
  %v3040 = vpop.f32.mrf.mxu0
  %v3041 = vadd.f32 0.0, %v3040
  %3042 = vmatmul.bf16.gmra.mxu0 %v2934
  %v3043 = vpop.f32.mrf.mxu0
  %v3044 = vadd.f32 0.0, %v3043
  %v3045 = vpop.f32.mrf.mxu0
  %v3046 = vadd.f32 0.0, %v3045
  %3047 = vmatmul.bf16.gmra.mxu0 %v2935
  %v3048 = vpop.f32.mrf.mxu0
  %v3049 = vadd.f32 0.0, %v3048
  %v3050 = vpop.f32.mrf.mxu0
  %v3051 = vadd.f32 0.0, %v3050
  %3052 = vmatmul.bf16.gmra.mxu0 %v2936
  %v3053 = vpop.f32.mrf.mxu0
  %v3054 = vadd.f32 0.0, %v3053
  %v3055 = vpop.f32.mrf.mxu0
  %v3056 = vadd.f32 0.0, %v3055
  %3057 = vmatmul.bf16.gmra.mxu0 %v2937
  %v3058 = vpop.f32.mrf.mxu0
  %v3059 = vadd.f32 0.0, %v3058
  %v3060 = vpop.f32.mrf.mxu0
  %v3061 = vadd.f32 0.0, %v3060
  %3062 = vmatmul.bf16.gmra.mxu0 %v2938
  %v3063 = vpop.f32.mrf.mxu0
  %v3064 = vadd.f32 0.0, %v3063
  %v3065 = vpop.f32.mrf.mxu0
  %v3066 = vadd.f32 0.0, %v3065
  %3067 = vmatmul.bf16.gmra.mxu0 %v2939
  %v3068 = vpop.f32.mrf.mxu0
  %v3069 = vadd.f32 0.0, %v3068
  %v3070 = vpop.f32.mrf.mxu0
  %v3071 = vadd.f32 0.0, %v3070
  %3072 = vmatmul.bf16.gmra.mxu0 %v2940
  %v3073 = vpop.f32.mrf.mxu0
  %v3074 = vadd.f32 0.0, %v3073
  %v3075 = vpop.f32.mrf.mxu0
  %v3076 = vadd.f32 0.0, %v3075
  %3077 = vmatmul.bf16.gmra.mxu0 %v2941
  %v3078 = vpop.f32.mrf.mxu0
  %v3079 = vadd.f32 0.0, %v3078
  %v3080 = vpop.f32.mrf.mxu0
  %v3081 = vadd.f32 0.0, %v3080
  %3082 = vdwg.mxu0
  %v3111 = vunpack.c.l.b16 %v2783
  %v3112 = vunpack.c.l.b16 %v2784
  %v3113 = vunpack.c.l.b16 %v2785
  %v3114 = vunpack.c.l.b16 %v2786
  %v3115 = vunpack.c.l.b16 %v2787
  %v3116 = vunpack.c.l.b16 %v2788
  %v3117 = vunpack.c.l.b16 %v2789
  %v3118 = vunpack.c.l.b16 %v2790
  %v3119 = vunpack.c.l.b16 %v2791
  %v3120 = vunpack.c.l.b16 %v2792
  %v3121 = vunpack.c.l.b16 %v2793
  %v3122 = vunpack.c.l.b16 %v2794
  %v3123 = vunpack.c.l.b16 %v2795
  %v3124 = vunpack.c.l.b16 %v2796
  %v3125 = vunpack.c.l.b16 %v2797
  %v3126 = vunpack.c.l.b16 %v2798
  %v3127 = vunpack.c.l.b16 %v2799
  %v3128 = vunpack.c.l.b16 %v2800
  %v3129 = vunpack.c.l.b16 %v2801
  %v3130 = vunpack.c.l.b16 %v2802
  %v3131 = vunpack.c.l.b16 %v2803
  %v3132 = vunpack.c.l.b16 %v2804
  %v3133 = vunpack.c.l.b16 %v2805
  %v3134 = vunpack.c.l.b16 %v2806
  %v3135 = vunpack.c.l.b16 %v2807
  %v3136 = vunpack.c.l.b16 %v2808
  %v3137 = vunpack.c.l.b16 %v2809
  %v3138 = vunpack.c.l.b16 %v2810
  %v3139 = vpack.c.b16 %v3112, %v3111
  %v3140 = vpack.c.b16 %v3114, %v3113
  %v3141 = vpack.c.b16 %v3116, %v3115
  %v3142 = vpack.c.b16 %v3118, %v3117
  %v3143 = vpack.c.b16 %v3120, %v3119
  %v3144 = vpack.c.b16 %v3122, %v3121
  %v3145 = vpack.c.b16 %v3124, %v3123
  %v3146 = vpack.c.b16 %v3126, %v3125
  %v3147 = vpack.c.b16 %v3128, %v3127
  %v3148 = vpack.c.b16 %v3130, %v3129
  %v3149 = vpack.c.b16 %v3132, %v3131
  %v3150 = vpack.c.b16 %v3134, %v3133
  %v3151 = vpack.c.b16 %v3136, %v3135
  %v3152 = vpack.c.b16 %v3138, %v3137
  %v3183 = vunpack.c.l.b16 %v2811
  %v3184 = vunpack.c.l.b16 %v2812
  %v3185 = vunpack.c.l.b16 %v2813
  %v3186 = vunpack.c.l.b16 %v2814
  %v3187 = vunpack.c.l.b16 %v2815
  %v3188 = vunpack.c.l.b16 %v2816
  %v3189 = vunpack.c.l.b16 %v2817
  %v3190 = vunpack.c.l.b16 %v2818
  %v3191 = vunpack.c.l.b16 %v2819
  %v3192 = vunpack.c.l.b16 %v2820
  %v3193 = vunpack.c.l.b16 %v2821
  %v3194 = vunpack.c.l.b16 %v2822
  %v3195 = vunpack.c.l.b16 %v2823
  %v3196 = vunpack.c.l.b16 %v2824
  %v3197 = vunpack.c.l.b16 %v2825
  %v3198 = vunpack.c.l.b16 %v2826
  %v3199 = vpack.c.b16 %v3184, %v3183
  %v3200 = vpack.c.b16 %v3186, %v3185
  %v3201 = vpack.c.b16 %v3188, %v3187
  %v3202 = vpack.c.b16 %v3190, %v3189
  %v3203 = vpack.c.b16 %v3192, %v3191
  %v3204 = vpack.c.b16 %v3194, %v3193
  %v3205 = vpack.c.b16 %v3196, %v3195
  %v3206 = vpack.c.b16 %v3198, %v3197
  %3215 = vmatpush.bf16.msra.mxu0 %v3206
  %3216 = vmatpush.bf16.msra.mxu0 %v3205
  %3217 = vmatpush.bf16.msra.mxu0 %v3204
  %3218 = vmatpush.bf16.msra.mxu0 %v3203
  %3219 = vmatpush.bf16.msra.mxu0 %v3202
  %3220 = vmatpush.bf16.msra.mxu0 %v3201
  %3221 = vmatpush.bf16.msra.mxu0 %v3200
  %3222 = vmatpush.bf16.msra.mxu0 %v3199
  %3223 = vmatmul.bf16.gmra.mxu0 %v3139
  %v3224 = vpop.f32.mrf.mxu0
  %v3225 = vadd.f32 %v3014, %v3224
  %v3226 = vpop.f32.mrf.mxu0
  %v3227 = vadd.f32 %v3016, %v3226
  %3228 = vmatmul.bf16.gmra.mxu0 %v3140
  %v3229 = vpop.f32.mrf.mxu0
  %v3230 = vadd.f32 %v3019, %v3229
  %v3231 = vpop.f32.mrf.mxu0
  %v3232 = vadd.f32 %v3021, %v3231
  %3233 = vmatmul.bf16.gmra.mxu0 %v3141
  %v3234 = vpop.f32.mrf.mxu0
  %v3235 = vadd.f32 %v3024, %v3234
  %v3236 = vpop.f32.mrf.mxu0
  %v3237 = vadd.f32 %v3026, %v3236
  %3238 = vmatmul.bf16.gmra.mxu0 %v3142
  %v3239 = vpop.f32.mrf.mxu0
  %v3240 = vadd.f32 %v3029, %v3239
  %v3241 = vpop.f32.mrf.mxu0
  %v3242 = vadd.f32 %v3031, %v3241
  %3243 = vmatmul.bf16.gmra.mxu0 %v3143
  %v3244 = vpop.f32.mrf.mxu0
  %v3245 = vadd.f32 %v3034, %v3244
  %v3246 = vpop.f32.mrf.mxu0
  %v3247 = vadd.f32 %v3036, %v3246
  %3248 = vmatmul.bf16.gmra.mxu0 %v3144
  %v3249 = vpop.f32.mrf.mxu0
  %v3250 = vadd.f32 %v3039, %v3249
  %v3251 = vpop.f32.mrf.mxu0
  %v3252 = vadd.f32 %v3041, %v3251
  %3253 = vmatmul.bf16.gmra.mxu0 %v3145
  %v3254 = vpop.f32.mrf.mxu0
  %v3255 = vadd.f32 %v3044, %v3254
  %v3256 = vpop.f32.mrf.mxu0
  %v3257 = vadd.f32 %v3046, %v3256
  %3258 = vmatmul.bf16.gmra.mxu0 %v3146
  %v3259 = vpop.f32.mrf.mxu0
  %v3260 = vadd.f32 %v3049, %v3259
  %v3261 = vpop.f32.mrf.mxu0
  %v3262 = vadd.f32 %v3051, %v3261
  %3263 = vmatmul.bf16.gmra.mxu0 %v3147
  %v3264 = vpop.f32.mrf.mxu0
  %v3265 = vadd.f32 %v3054, %v3264
  %v3266 = vpop.f32.mrf.mxu0
  %v3267 = vadd.f32 %v3056, %v3266
  %3268 = vmatmul.bf16.gmra.mxu0 %v3148
  %v3269 = vpop.f32.mrf.mxu0
  %v3270 = vadd.f32 %v3059, %v3269
  %v3271 = vpop.f32.mrf.mxu0
  %v3272 = vadd.f32 %v3061, %v3271
  %3273 = vmatmul.bf16.gmra.mxu0 %v3149
  %v3274 = vpop.f32.mrf.mxu0
  %v3275 = vadd.f32 %v3064, %v3274
  %v3276 = vpop.f32.mrf.mxu0
  %v3277 = vadd.f32 %v3066, %v3276
  %3278 = vmatmul.bf16.gmra.mxu0 %v3150
  %v3279 = vpop.f32.mrf.mxu0
  %v3280 = vadd.f32 %v3069, %v3279
  %v3281 = vpop.f32.mrf.mxu0
  %v3282 = vadd.f32 %v3071, %v3281
  %3283 = vmatmul.bf16.gmra.mxu0 %v3151
  %v3284 = vpop.f32.mrf.mxu0
  %v3285 = vadd.f32 %v3074, %v3284
  %v3286 = vpop.f32.mrf.mxu0
  %v3287 = vadd.f32 %v3076, %v3286
  %3288 = vmatmul.bf16.gmra.mxu0 %v3152
  %v3289 = vpop.f32.mrf.mxu0
  %v3290 = vadd.f32 %v3079, %v3289
  %v3291 = vpop.f32.mrf.mxu0
  %v3292 = vadd.f32 %v3081, %v3291
  %3293 = vdwg.mxu0
  %v3294 = vld [vmem:[%s782] sm:$0xf]
  %v3295 = vld [vmem:[%s782 + $0x4] sm:$0xf]
  %v3296 = vld [vmem:[%s782 + $0x8] sm:$0xf]
  %v3297 = vld [vmem:[%s782 + $0xc] sm:$0xf]
  %v3298 = vld [vmem:[%s782 + $0x10] sm:$0xf]
  %v3299 = vld [vmem:[%s782 + $0x14] sm:$0xf]
  %v3300 = vld [vmem:[%s782 + $0x18] sm:$0xf]
  %v3301 = vld [vmem:[%s782 + $0x1c] sm:$0xf]
  %v3302 = vld [vmem:[%s782 + $0x20] sm:$0xf]
  %v3303 = vld [vmem:[%s782 + $0x24] sm:$0xf]
  %v3304 = vld [vmem:[%s782 + $0x28] sm:$0xf]
  %v3305 = vld [vmem:[%s782 + $0x2c] sm:$0xf]
  %v3306 = vld [vmem:[%s782 + $0x30] sm:$0xf]
  %v3307 = vld [vmem:[%s782 + $0x34] sm:$0xf]
  %v3308 = vld [vmem:[%s782 + $0x38] sm:$0xf]
  %v3309 = vld [vmem:[%s782 + $0x3c] sm:$0xf]
  %v3310 = vld [vmem:[%s782 + $0x40] sm:$0xf]
  %v3311 = vld [vmem:[%s782 + $0x44] sm:$0xf]
  %v3312 = vld [vmem:[%s782 + $0x48] sm:$0xf]
  %v3313 = vld [vmem:[%s782 + $0x4c] sm:$0xf]
  %v3314 = vld [vmem:[%s782 + $0x50] sm:$0xf]
  %v3315 = vld [vmem:[%s782 + $0x54] sm:$0xf]
  %v3316 = vld [vmem:[%s782 + $0x58] sm:$0xf]
  %v3317 = vld [vmem:[%s782 + $0x5c] sm:$0xf]
  %v3318 = vld [vmem:[%s782 + $0x60] sm:$0xf]
  %v3319 = vld [vmem:[%s782 + $0x64] sm:$0xf]
  %v3320 = vld [vmem:[%s782 + $0x68] sm:$0xf]
  %v3321 = vld [vmem:[%s782 + $0x6c] sm:$0xf]
  %s3322 = scalar_lea.vmem [#allocation3], 384
  %v3323 = vld [vmem:[%s3322] sm:$0xf]
  %v3324 = vld [vmem:[%s3322 + $0x4] sm:$0xf]
  %v3325 = vld [vmem:[%s3322 + $0x8] sm:$0xf]
  %v3326 = vld [vmem:[%s3322 + $0xc] sm:$0xf]
  %v3327 = vld [vmem:[%s3322 + $0x10] sm:$0xf]
  %v3328 = vld [vmem:[%s3322 + $0x14] sm:$0xf]
  %v3329 = vld [vmem:[%s3322 + $0x18] sm:$0xf]
  %v3330 = vld [vmem:[%s3322 + $0x1c] sm:$0xf]
  %v3331 = vld [vmem:[%s3322 + $0x20] sm:$0xf]
  %v3332 = vld [vmem:[%s3322 + $0x24] sm:$0xf]
  %v3333 = vld [vmem:[%s3322 + $0x28] sm:$0xf]
  %v3334 = vld [vmem:[%s3322 + $0x2c] sm:$0xf]
  %v3335 = vld [vmem:[%s3322 + $0x30] sm:$0xf]
  %v3336 = vld [vmem:[%s3322 + $0x34] sm:$0xf]
  %v3337 = vld [vmem:[%s3322 + $0x38] sm:$0xf]
  %v3338 = vld [vmem:[%s3322 + $0x3c] sm:$0xf]
  %v3367 = vunpack.c.l.b16 %v3294
  %v3368 = vunpack.c.l.b16 %v3295
  %v3369 = vunpack.c.l.b16 %v3296
  %v3370 = vunpack.c.l.b16 %v3297
  %v3371 = vunpack.c.l.b16 %v3298
  %v3372 = vunpack.c.l.b16 %v3299
  %v3373 = vunpack.c.l.b16 %v3300
  %v3374 = vunpack.c.l.b16 %v3301
  %v3375 = vunpack.c.l.b16 %v3302
  %v3376 = vunpack.c.l.b16 %v3303
  %v3377 = vunpack.c.l.b16 %v3304
  %v3378 = vunpack.c.l.b16 %v3305
  %v3379 = vunpack.c.l.b16 %v3306
  %v3380 = vunpack.c.l.b16 %v3307
  %v3381 = vunpack.c.l.b16 %v3308
  %v3382 = vunpack.c.l.b16 %v3309
  %v3383 = vunpack.c.l.b16 %v3310
  %v3384 = vunpack.c.l.b16 %v3311
  %v3385 = vunpack.c.l.b16 %v3312
  %v3386 = vunpack.c.l.b16 %v3313
  %v3387 = vunpack.c.l.b16 %v3314
  %v3388 = vunpack.c.l.b16 %v3315
  %v3389 = vunpack.c.l.b16 %v3316
  %v3390 = vunpack.c.l.b16 %v3317
  %v3391 = vunpack.c.l.b16 %v3318
  %v3392 = vunpack.c.l.b16 %v3319
  %v3393 = vunpack.c.l.b16 %v3320
  %v3394 = vunpack.c.l.b16 %v3321
  %v3395 = vpack.c.b16 %v3368, %v3367
  %v3396 = vpack.c.b16 %v3370, %v3369
  %v3397 = vpack.c.b16 %v3372, %v3371
  %v3398 = vpack.c.b16 %v3374, %v3373
  %v3399 = vpack.c.b16 %v3376, %v3375
  %v3400 = vpack.c.b16 %v3378, %v3377
  %v3401 = vpack.c.b16 %v3380, %v3379
  %v3402 = vpack.c.b16 %v3382, %v3381
  %v3403 = vpack.c.b16 %v3384, %v3383
  %v3404 = vpack.c.b16 %v3386, %v3385
  %v3405 = vpack.c.b16 %v3388, %v3387
  %v3406 = vpack.c.b16 %v3390, %v3389
  %v3407 = vpack.c.b16 %v3392, %v3391
  %v3408 = vpack.c.b16 %v3394, %v3393
  %v3439 = vunpack.c.l.b16 %v3323
  %v3440 = vunpack.c.l.b16 %v3324
  %v3441 = vunpack.c.l.b16 %v3325
  %v3442 = vunpack.c.l.b16 %v3326
  %v3443 = vunpack.c.l.b16 %v3327
  %v3444 = vunpack.c.l.b16 %v3328
  %v3445 = vunpack.c.l.b16 %v3329
  %v3446 = vunpack.c.l.b16 %v3330
  %v3447 = vunpack.c.l.b16 %v3331
  %v3448 = vunpack.c.l.b16 %v3332
  %v3449 = vunpack.c.l.b16 %v3333
  %v3450 = vunpack.c.l.b16 %v3334
  %v3451 = vunpack.c.l.b16 %v3335
  %v3452 = vunpack.c.l.b16 %v3336
  %v3453 = vunpack.c.l.b16 %v3337
  %v3454 = vunpack.c.l.b16 %v3338
  %v3455 = vpack.c.b16 %v3440, %v3439
  %v3456 = vpack.c.b16 %v3442, %v3441
  %v3457 = vpack.c.b16 %v3444, %v3443
  %v3458 = vpack.c.b16 %v3446, %v3445
  %v3459 = vpack.c.b16 %v3448, %v3447
  %v3460 = vpack.c.b16 %v3450, %v3449
  %v3461 = vpack.c.b16 %v3452, %v3451
  %v3462 = vpack.c.b16 %v3454, %v3453
  %3471 = vmatpush.bf16.msra.mxu0 %v3462
  %3472 = vmatpush.bf16.msra.mxu0 %v3461
  %3473 = vmatpush.bf16.msra.mxu0 %v3460
  %3474 = vmatpush.bf16.msra.mxu0 %v3459
  %3475 = vmatpush.bf16.msra.mxu0 %v3458
  %3476 = vmatpush.bf16.msra.mxu0 %v3457
  %3477 = vmatpush.bf16.msra.mxu0 %v3456
  %3478 = vmatpush.bf16.msra.mxu0 %v3455
  %3479 = vmatmul.bf16.gmra.mxu0 %v3395
  %v3480 = vpop.f32.mrf.mxu0
  %v3481 = vadd.f32 0.0, %v3480
  %v3482 = vpop.f32.mrf.mxu0
  %v3483 = vadd.f32 0.0, %v3482
  %3484 = vmatmul.bf16.gmra.mxu0 %v3396
  %v3485 = vpop.f32.mrf.mxu0
  %v3486 = vadd.f32 0.0, %v3485
  %v3487 = vpop.f32.mrf.mxu0
  %v3488 = vadd.f32 0.0, %v3487
  %3489 = vmatmul.bf16.gmra.mxu0 %v3397
  %v3490 = vpop.f32.mrf.mxu0
  %v3491 = vadd.f32 0.0, %v3490
  %v3492 = vpop.f32.mrf.mxu0
  %v3493 = vadd.f32 0.0, %v3492
  %3494 = vmatmul.bf16.gmra.mxu0 %v3398
  %v3495 = vpop.f32.mrf.mxu0
  %v3496 = vadd.f32 0.0, %v3495
  %v3497 = vpop.f32.mrf.mxu0
  %v3498 = vadd.f32 0.0, %v3497
  %3499 = vmatmul.bf16.gmra.mxu0 %v3399
  %v3500 = vpop.f32.mrf.mxu0
  %v3501 = vadd.f32 0.0, %v3500
  %v3502 = vpop.f32.mrf.mxu0
  %v3503 = vadd.f32 0.0, %v3502
  %3504 = vmatmul.bf16.gmra.mxu0 %v3400
  %v3505 = vpop.f32.mrf.mxu0
  %v3506 = vadd.f32 0.0, %v3505
  %v3507 = vpop.f32.mrf.mxu0
  %v3508 = vadd.f32 0.0, %v3507
  %3509 = vmatmul.bf16.gmra.mxu0 %v3401
  %v3510 = vpop.f32.mrf.mxu0
  %v3511 = vadd.f32 0.0, %v3510
  %v3512 = vpop.f32.mrf.mxu0
  %v3513 = vadd.f32 0.0, %v3512
  %3514 = vmatmul.bf16.gmra.mxu0 %v3402
  %v3515 = vpop.f32.mrf.mxu0
  %v3516 = vadd.f32 0.0, %v3515
  %v3517 = vpop.f32.mrf.mxu0
  %v3518 = vadd.f32 0.0, %v3517
  %3519 = vmatmul.bf16.gmra.mxu0 %v3403
  %v3520 = vpop.f32.mrf.mxu0
  %v3521 = vadd.f32 0.0, %v3520
  %v3522 = vpop.f32.mrf.mxu0
  %v3523 = vadd.f32 0.0, %v3522
  %3524 = vmatmul.bf16.gmra.mxu0 %v3404
  %v3525 = vpop.f32.mrf.mxu0
  %v3526 = vadd.f32 0.0, %v3525
  %v3527 = vpop.f32.mrf.mxu0
  %v3528 = vadd.f32 0.0, %v3527
  %3529 = vmatmul.bf16.gmra.mxu0 %v3405
  %v3530 = vpop.f32.mrf.mxu0
  %v3531 = vadd.f32 0.0, %v3530
  %v3532 = vpop.f32.mrf.mxu0
  %v3533 = vadd.f32 0.0, %v3532
  %3534 = vmatmul.bf16.gmra.mxu0 %v3406
  %v3535 = vpop.f32.mrf.mxu0
  %v3536 = vadd.f32 0.0, %v3535
  %v3537 = vpop.f32.mrf.mxu0
  %v3538 = vadd.f32 0.0, %v3537
  %3539 = vmatmul.bf16.gmra.mxu0 %v3407
  %v3540 = vpop.f32.mrf.mxu0
  %v3541 = vadd.f32 0.0, %v3540
  %v3542 = vpop.f32.mrf.mxu0
  %v3543 = vadd.f32 0.0, %v3542
  %3544 = vmatmul.bf16.gmra.mxu0 %v3408
  %v3545 = vpop.f32.mrf.mxu0
  %v3546 = vadd.f32 0.0, %v3545
  %v3547 = vpop.f32.mrf.mxu0
  %v3548 = vadd.f32 0.0, %v3547
  %3549 = vdwg.mxu0
  %v3550 = vadd.f32 %v3225, %v3481
  %v3551 = vadd.f32 %v3227, %v3483
  %v3552 = vadd.f32 %v3230, %v3486
  %v3553 = vadd.f32 %v3232, %v3488
  %v3554 = vadd.f32 %v3235, %v3491
  %v3555 = vadd.f32 %v3237, %v3493
  %v3556 = vadd.f32 %v3240, %v3496
  %v3557 = vadd.f32 %v3242, %v3498
  %v3558 = vadd.f32 %v3245, %v3501
  %v3559 = vadd.f32 %v3247, %v3503
  %v3560 = vadd.f32 %v3250, %v3506
  %v3561 = vadd.f32 %v3252, %v3508
  %v3562 = vadd.f32 %v3255, %v3511
  %v3563 = vadd.f32 %v3257, %v3513
  %v3564 = vadd.f32 %v3260, %v3516
  %v3565 = vadd.f32 %v3262, %v3518
  %v3566 = vadd.f32 %v3265, %v3521
  %v3567 = vadd.f32 %v3267, %v3523
  %v3568 = vadd.f32 %v3270, %v3526
  %v3569 = vadd.f32 %v3272, %v3528
  %v3570 = vadd.f32 %v3275, %v3531
  %v3571 = vadd.f32 %v3277, %v3533
  %v3572 = vadd.f32 %v3280, %v3536
  %v3573 = vadd.f32 %v3282, %v3538
  %v3574 = vadd.f32 %v3285, %v3541
  %v3575 = vadd.f32 %v3287, %v3543
  %v3576 = vadd.f32 %v3290, %v3546
  %v3577 = vadd.f32 %v3292, %v3548
  %v3579 = vrot.slane %v3577, 7
  %v3608 = vrot.slane %v3550, 7
  %v3609 = vrot.slane %v3551, 7
  %v3610 = vsel %vm1097, %v3608, %v3609
  %v3611 = vrot.slane %v3552, 7
  %v3612 = vsel %vm1097, %v3609, %v3611
  %v3613 = vrot.slane %v3553, 7
  %v3614 = vsel %vm1097, %v3611, %v3613
  %v3615 = vrot.slane %v3554, 7
  %v3616 = vsel %vm1097, %v3613, %v3615
  %v3617 = vrot.slane %v3555, 7
  %v3618 = vsel %vm1097, %v3615, %v3617
  %v3619 = vrot.slane %v3556, 7
  %v3620 = vsel %vm1097, %v3617, %v3619
  %v3621 = vrot.slane %v3557, 7
  %v3622 = vsel %vm1097, %v3619, %v3621
  %v3623 = vrot.slane %v3558, 7
  %v3624 = vsel %vm1097, %v3621, %v3623
  %v3625 = vrot.slane %v3559, 7
  %v3626 = vsel %vm1097, %v3623, %v3625
  %v3627 = vrot.slane %v3560, 7
  %v3628 = vsel %vm1097, %v3625, %v3627
  %v3629 = vrot.slane %v3561, 7
  %v3630 = vsel %vm1097, %v3627, %v3629
  %v3631 = vrot.slane %v3562, 7
  %v3632 = vsel %vm1097, %v3629, %v3631
  %v3633 = vrot.slane %v3563, 7
  %v3634 = vsel %vm1097, %v3631, %v3633
  %v3635 = vrot.slane %v3564, 7
  %v3636 = vsel %vm1097, %v3633, %v3635
  %v3637 = vrot.slane %v3565, 7
  %v3638 = vsel %vm1097, %v3635, %v3637
  %v3639 = vrot.slane %v3566, 7
  %v3640 = vsel %vm1097, %v3637, %v3639
  %v3641 = vrot.slane %v3567, 7
  %v3642 = vsel %vm1097, %v3639, %v3641
  %v3643 = vrot.slane %v3568, 7
  %v3644 = vsel %vm1097, %v3641, %v3643
  %v3645 = vrot.slane %v3569, 7
  %v3646 = vsel %vm1097, %v3643, %v3645
  %v3647 = vrot.slane %v3570, 7
  %v3648 = vsel %vm1097, %v3645, %v3647
  %v3649 = vrot.slane %v3571, 7
  %v3650 = vsel %vm1097, %v3647, %v3649
  %v3651 = vrot.slane %v3572, 7
  %v3652 = vsel %vm1097, %v3649, %v3651
  %v3653 = vrot.slane %v3573, 7
  %v3654 = vsel %vm1097, %v3651, %v3653
  %v3655 = vrot.slane %v3574, 7
  %v3656 = vsel %vm1097, %v3653, %v3655
  %v3657 = vrot.slane %v3575, 7
  %v3658 = vsel %vm1097, %v3655, %v3657
  %v3659 = vrot.slane %v3576, 7
  %v3660 = vsel %vm1097, %v3657, %v3659
  %v3661 = vsel %vm1097, %v3659, %v3579
  %v3690 = vsel %vm1097, %v3579, %v3608
  %s3691 = scalar_lea.vmem [#allocation3], 64
  %v3692 = vld [vmem:[%s3691] sm:$0xf]
  %v3693 = vld [vmem:[%s3691 + $0x4] sm:$0xf]
  %v3694 = vld [vmem:[%s3691 + $0x8] sm:$0xf]
  %v3695 = vld [vmem:[%s3691 + $0xc] sm:$0xf]
  %v3696 = vld [vmem:[%s3691 + $0x10] sm:$0xf]
  %v3697 = vld [vmem:[%s3691 + $0x14] sm:$0xf]
  %v3698 = vld [vmem:[%s3691 + $0x18] sm:$0xf]
  %v3699 = vld [vmem:[%s3691 + $0x1c] sm:$0xf]
  %v3700 = vld [vmem:[%s3691 + $0x20] sm:$0xf]
  %v3701 = vld [vmem:[%s3691 + $0x24] sm:$0xf]
  %v3702 = vld [vmem:[%s3691 + $0x28] sm:$0xf]
  %v3703 = vld [vmem:[%s3691 + $0x2c] sm:$0xf]
  %v3704 = vld [vmem:[%s3691 + $0x30] sm:$0xf]
  %v3705 = vld [vmem:[%s3691 + $0x34] sm:$0xf]
  %v3706 = vld [vmem:[%s3691 + $0x38] sm:$0xf]
  %v3707 = vld [vmem:[%s3691 + $0x3c] sm:$0xf]
  %s3708 = scalar_lea.vmem [#allocation3], 256
  %v3709 = vld [vmem:[%s3708] sm:$0xf]
  %v3710 = vld [vmem:[%s3708 + $0x4] sm:$0xf]
  %v3711 = vld [vmem:[%s3708 + $0x8] sm:$0xf]
  %v3712 = vld [vmem:[%s3708 + $0xc] sm:$0xf]
  %v3713 = vld [vmem:[%s3708 + $0x10] sm:$0xf]
  %v3714 = vld [vmem:[%s3708 + $0x14] sm:$0xf]
  %v3715 = vld [vmem:[%s3708 + $0x18] sm:$0xf]
  %v3716 = vld [vmem:[%s3708 + $0x1c] sm:$0xf]
  %v3717 = vld [vmem:[%s3708 + $0x20] sm:$0xf]
  %v3718 = vld [vmem:[%s3708 + $0x24] sm:$0xf]
  %v3719 = vld [vmem:[%s3708 + $0x28] sm:$0xf]
  %v3720 = vld [vmem:[%s3708 + $0x2c] sm:$0xf]
  %v3721 = vld [vmem:[%s3708 + $0x30] sm:$0xf]
  %v3722 = vld [vmem:[%s3708 + $0x34] sm:$0xf]
  %v3723 = vld [vmem:[%s3708 + $0x38] sm:$0xf]
  %v3724 = vld [vmem:[%s3708 + $0x3c] sm:$0xf]
  %v3741 = vunpack.c.l.b16 %v3709
  %v3742 = vunpack.c.l.b16 %v3710
  %v3743 = vunpack.c.l.b16 %v3711
  %v3744 = vunpack.c.l.b16 %v3712
  %v3745 = vunpack.c.l.b16 %v3713
  %v3746 = vunpack.c.l.b16 %v3714
  %v3747 = vunpack.c.l.b16 %v3715
  %v3748 = vunpack.c.l.b16 %v3716
  %v3749 = vunpack.c.l.b16 %v3717
  %v3750 = vunpack.c.l.b16 %v3718
  %v3751 = vunpack.c.l.b16 %v3719
  %v3752 = vunpack.c.l.b16 %v3720
  %v3753 = vunpack.c.l.b16 %v3721
  %v3754 = vunpack.c.l.b16 %v3722
  %v3755 = vunpack.c.l.b16 %v3723
  %v3756 = vunpack.c.l.b16 %v3724
  %v3757 = vpack.c.b16 %v3742, %v3741
  %v3758 = vpack.c.b16 %v3744, %v3743
  %v3759 = vpack.c.b16 %v3746, %v3745
  %v3760 = vpack.c.b16 %v3748, %v3747
  %v3761 = vpack.c.b16 %v3750, %v3749
  %v3762 = vpack.c.b16 %v3752, %v3751
  %v3763 = vpack.c.b16 %v3754, %v3753
  %v3764 = vpack.c.b16 %v3756, %v3755
  %3773 = vmatpush.bf16.msra.mxu0 %v3764
  %3774 = vmatpush.bf16.msra.mxu0 %v3763
  %3775 = vmatpush.bf16.msra.mxu0 %v3762
  %3776 = vmatpush.bf16.msra.mxu0 %v3761
  %3777 = vmatpush.bf16.msra.mxu0 %v3760
  %3778 = vmatpush.bf16.msra.mxu0 %v3759
  %3779 = vmatpush.bf16.msra.mxu0 %v3758
  %3780 = vmatpush.bf16.msra.mxu0 %v3757
  %3781 = vmatmul.bf16.gmra.mxu0 %v2928
  %v3782 = vpop.f32.mrf.mxu0
  %v3783 = vadd.f32 0.0, %v3782
  %v3784 = vpop.f32.mrf.mxu0
  %v3785 = vadd.f32 0.0, %v3784
  %3786 = vmatmul.bf16.gmra.mxu0 %v2929
  %v3787 = vpop.f32.mrf.mxu0
  %v3788 = vadd.f32 0.0, %v3787
  %v3789 = vpop.f32.mrf.mxu0
  %v3790 = vadd.f32 0.0, %v3789
  %3791 = vmatmul.bf16.gmra.mxu0 %v2930
  %v3792 = vpop.f32.mrf.mxu0
  %v3793 = vadd.f32 0.0, %v3792
  %v3794 = vpop.f32.mrf.mxu0
  %v3795 = vadd.f32 0.0, %v3794
  %3796 = vmatmul.bf16.gmra.mxu0 %v2931
  %v3797 = vpop.f32.mrf.mxu0
  %v3798 = vadd.f32 0.0, %v3797
  %v3799 = vpop.f32.mrf.mxu0
  %v3800 = vadd.f32 0.0, %v3799
  %3801 = vmatmul.bf16.gmra.mxu0 %v2932
  %v3802 = vpop.f32.mrf.mxu0
  %v3803 = vadd.f32 0.0, %v3802
  %v3804 = vpop.f32.mrf.mxu0
  %v3805 = vadd.f32 0.0, %v3804
  %3806 = vmatmul.bf16.gmra.mxu0 %v2933
  %v3807 = vpop.f32.mrf.mxu0
  %v3808 = vadd.f32 0.0, %v3807
  %v3809 = vpop.f32.mrf.mxu0
  %v3810 = vadd.f32 0.0, %v3809
  %3811 = vmatmul.bf16.gmra.mxu0 %v2934
  %v3812 = vpop.f32.mrf.mxu0
  %v3813 = vadd.f32 0.0, %v3812
  %v3814 = vpop.f32.mrf.mxu0
  %v3815 = vadd.f32 0.0, %v3814
  %3816 = vmatmul.bf16.gmra.mxu0 %v2935
  %v3817 = vpop.f32.mrf.mxu0
  %v3818 = vadd.f32 0.0, %v3817
  %v3819 = vpop.f32.mrf.mxu0
  %v3820 = vadd.f32 0.0, %v3819
  %3821 = vmatmul.bf16.gmra.mxu0 %v2936
  %v3822 = vpop.f32.mrf.mxu0
  %v3823 = vadd.f32 0.0, %v3822
  %v3824 = vpop.f32.mrf.mxu0
  %v3825 = vadd.f32 0.0, %v3824
  %3826 = vmatmul.bf16.gmra.mxu0 %v2937
  %v3827 = vpop.f32.mrf.mxu0
  %v3828 = vadd.f32 0.0, %v3827
  %v3829 = vpop.f32.mrf.mxu0
  %v3830 = vadd.f32 0.0, %v3829
  %3831 = vmatmul.bf16.gmra.mxu0 %v2938
  %v3832 = vpop.f32.mrf.mxu0
  %v3833 = vadd.f32 0.0, %v3832
  %v3834 = vpop.f32.mrf.mxu0
  %v3835 = vadd.f32 0.0, %v3834
  %3836 = vmatmul.bf16.gmra.mxu0 %v2939
  %v3837 = vpop.f32.mrf.mxu0
  %v3838 = vadd.f32 0.0, %v3837
  %v3839 = vpop.f32.mrf.mxu0
  %v3840 = vadd.f32 0.0, %v3839
  %3841 = vmatmul.bf16.gmra.mxu0 %v2940
  %v3842 = vpop.f32.mrf.mxu0
  %v3843 = vadd.f32 0.0, %v3842
  %v3844 = vpop.f32.mrf.mxu0
  %v3845 = vadd.f32 0.0, %v3844
  %3846 = vmatmul.bf16.gmra.mxu0 %v2941
  %v3847 = vpop.f32.mrf.mxu0
  %v3848 = vadd.f32 0.0, %v3847
  %v3849 = vpop.f32.mrf.mxu0
  %v3850 = vadd.f32 0.0, %v3849
  %3851 = vdwg.mxu0
  %v3868 = vunpack.c.l.b16 %v3692
  %v3869 = vunpack.c.l.b16 %v3693
  %v3870 = vunpack.c.l.b16 %v3694
  %v3871 = vunpack.c.l.b16 %v3695
  %v3872 = vunpack.c.l.b16 %v3696
  %v3873 = vunpack.c.l.b16 %v3697
  %v3874 = vunpack.c.l.b16 %v3698
  %v3875 = vunpack.c.l.b16 %v3699
  %v3876 = vunpack.c.l.b16 %v3700
  %v3877 = vunpack.c.l.b16 %v3701
  %v3878 = vunpack.c.l.b16 %v3702
  %v3879 = vunpack.c.l.b16 %v3703
  %v3880 = vunpack.c.l.b16 %v3704
  %v3881 = vunpack.c.l.b16 %v3705
  %v3882 = vunpack.c.l.b16 %v3706
  %v3883 = vunpack.c.l.b16 %v3707
  %v3884 = vpack.c.b16 %v3869, %v3868
  %v3885 = vpack.c.b16 %v3871, %v3870
  %v3886 = vpack.c.b16 %v3873, %v3872
  %v3887 = vpack.c.b16 %v3875, %v3874
  %v3888 = vpack.c.b16 %v3877, %v3876
  %v3889 = vpack.c.b16 %v3879, %v3878
  %v3890 = vpack.c.b16 %v3881, %v3880
  %v3891 = vpack.c.b16 %v3883, %v3882
  %3900 = vmatpush.bf16.msra.mxu0 %v3891
  %3901 = vmatpush.bf16.msra.mxu0 %v3890
  %3902 = vmatpush.bf16.msra.mxu0 %v3889
  %3903 = vmatpush.bf16.msra.mxu0 %v3888
  %3904 = vmatpush.bf16.msra.mxu0 %v3887
  %3905 = vmatpush.bf16.msra.mxu0 %v3886
  %3906 = vmatpush.bf16.msra.mxu0 %v3885
  %3907 = vmatpush.bf16.msra.mxu0 %v3884
  %3908 = vmatmul.bf16.gmra.mxu0 %v3139
  %v3909 = vpop.f32.mrf.mxu0
  %v3910 = vadd.f32 %v3783, %v3909
  %v3911 = vpop.f32.mrf.mxu0
  %v3912 = vadd.f32 %v3785, %v3911
  %3913 = vmatmul.bf16.gmra.mxu0 %v3140
  %v3914 = vpop.f32.mrf.mxu0
  %v3915 = vadd.f32 %v3788, %v3914
  %v3916 = vpop.f32.mrf.mxu0
  %v3917 = vadd.f32 %v3790, %v3916
  %3918 = vmatmul.bf16.gmra.mxu0 %v3141
  %v3919 = vpop.f32.mrf.mxu0
  %v3920 = vadd.f32 %v3793, %v3919
  %v3921 = vpop.f32.mrf.mxu0
  %v3922 = vadd.f32 %v3795, %v3921
  %3923 = vmatmul.bf16.gmra.mxu0 %v3142
  %v3924 = vpop.f32.mrf.mxu0
  %v3925 = vadd.f32 %v3798, %v3924
  %v3926 = vpop.f32.mrf.mxu0
  %v3927 = vadd.f32 %v3800, %v3926
  %3928 = vmatmul.bf16.gmra.mxu0 %v3143
  %v3929 = vpop.f32.mrf.mxu0
  %v3930 = vadd.f32 %v3803, %v3929
  %v3931 = vpop.f32.mrf.mxu0
  %v3932 = vadd.f32 %v3805, %v3931
  %3933 = vmatmul.bf16.gmra.mxu0 %v3144
  %v3934 = vpop.f32.mrf.mxu0
  %v3935 = vadd.f32 %v3808, %v3934
  %v3936 = vpop.f32.mrf.mxu0
  %v3937 = vadd.f32 %v3810, %v3936
  %3938 = vmatmul.bf16.gmra.mxu0 %v3145
  %v3939 = vpop.f32.mrf.mxu0
  %v3940 = vadd.f32 %v3813, %v3939
  %v3941 = vpop.f32.mrf.mxu0
  %v3942 = vadd.f32 %v3815, %v3941
  %3943 = vmatmul.bf16.gmra.mxu0 %v3146
  %v3944 = vpop.f32.mrf.mxu0
  %v3945 = vadd.f32 %v3818, %v3944
  %v3946 = vpop.f32.mrf.mxu0
  %v3947 = vadd.f32 %v3820, %v3946
  %3948 = vmatmul.bf16.gmra.mxu0 %v3147
  %v3949 = vpop.f32.mrf.mxu0
  %v3950 = vadd.f32 %v3823, %v3949
  %v3951 = vpop.f32.mrf.mxu0
  %v3952 = vadd.f32 %v3825, %v3951
  %3953 = vmatmul.bf16.gmra.mxu0 %v3148
  %v3954 = vpop.f32.mrf.mxu0
  %v3955 = vadd.f32 %v3828, %v3954
  %v3956 = vpop.f32.mrf.mxu0
  %v3957 = vadd.f32 %v3830, %v3956
  %3958 = vmatmul.bf16.gmra.mxu0 %v3149
  %v3959 = vpop.f32.mrf.mxu0
  %v3960 = vadd.f32 %v3833, %v3959
  %v3961 = vpop.f32.mrf.mxu0
  %v3962 = vadd.f32 %v3835, %v3961
  %3963 = vmatmul.bf16.gmra.mxu0 %v3150
  %v3964 = vpop.f32.mrf.mxu0
  %v3965 = vadd.f32 %v3838, %v3964
  %v3966 = vpop.f32.mrf.mxu0
  %v3967 = vadd.f32 %v3840, %v3966
  %3968 = vmatmul.bf16.gmra.mxu0 %v3151
  %v3969 = vpop.f32.mrf.mxu0
  %v3970 = vadd.f32 %v3843, %v3969
  %v3971 = vpop.f32.mrf.mxu0
  %v3972 = vadd.f32 %v3845, %v3971
  %3973 = vmatmul.bf16.gmra.mxu0 %v3152
  %v3974 = vpop.f32.mrf.mxu0
  %v3975 = vadd.f32 %v3848, %v3974
  %v3976 = vpop.f32.mrf.mxu0
  %v3977 = vadd.f32 %v3850, %v3976
  %3978 = vdwg.mxu0
  %s3979 = scalar_lea.vmem [#allocation3], 448
  %v3980 = vld [vmem:[%s3979] sm:$0xf]
  %v3981 = vld [vmem:[%s3979 + $0x4] sm:$0xf]
  %v3982 = vld [vmem:[%s3979 + $0x8] sm:$0xf]
  %v3983 = vld [vmem:[%s3979 + $0xc] sm:$0xf]
  %v3984 = vld [vmem:[%s3979 + $0x10] sm:$0xf]
  %v3985 = vld [vmem:[%s3979 + $0x14] sm:$0xf]
  %v3986 = vld [vmem:[%s3979 + $0x18] sm:$0xf]
  %v3987 = vld [vmem:[%s3979 + $0x1c] sm:$0xf]
  %v3988 = vld [vmem:[%s3979 + $0x20] sm:$0xf]
  %v3989 = vld [vmem:[%s3979 + $0x24] sm:$0xf]
  %v3990 = vld [vmem:[%s3979 + $0x28] sm:$0xf]
  %v3991 = vld [vmem:[%s3979 + $0x2c] sm:$0xf]
  %v3992 = vld [vmem:[%s3979 + $0x30] sm:$0xf]
  %v3993 = vld [vmem:[%s3979 + $0x34] sm:$0xf]
  %v3994 = vld [vmem:[%s3979 + $0x38] sm:$0xf]
  %v3995 = vld [vmem:[%s3979 + $0x3c] sm:$0xf]
  %v4012 = vunpack.c.l.b16 %v3980
  %v4013 = vunpack.c.l.b16 %v3981
  %v4014 = vunpack.c.l.b16 %v3982
  %v4015 = vunpack.c.l.b16 %v3983
  %v4016 = vunpack.c.l.b16 %v3984
  %v4017 = vunpack.c.l.b16 %v3985
  %v4018 = vunpack.c.l.b16 %v3986
  %v4019 = vunpack.c.l.b16 %v3987
  %v4020 = vunpack.c.l.b16 %v3988
  %v4021 = vunpack.c.l.b16 %v3989
  %v4022 = vunpack.c.l.b16 %v3990
  %v4023 = vunpack.c.l.b16 %v3991
  %v4024 = vunpack.c.l.b16 %v3992
  %v4025 = vunpack.c.l.b16 %v3993
  %v4026 = vunpack.c.l.b16 %v3994
  %v4027 = vunpack.c.l.b16 %v3995
  %v4028 = vpack.c.b16 %v4013, %v4012
  %v4029 = vpack.c.b16 %v4015, %v4014
  %v4030 = vpack.c.b16 %v4017, %v4016
  %v4031 = vpack.c.b16 %v4019, %v4018
  %v4032 = vpack.c.b16 %v4021, %v4020
  %v4033 = vpack.c.b16 %v4023, %v4022
  %v4034 = vpack.c.b16 %v4025, %v4024
  %v4035 = vpack.c.b16 %v4027, %v4026
  %4044 = vmatpush.bf16.msra.mxu0 %v4035
  %4045 = vmatpush.bf16.msra.mxu0 %v4034
  %4046 = vmatpush.bf16.msra.mxu0 %v4033
  %4047 = vmatpush.bf16.msra.mxu0 %v4032
  %4048 = vmatpush.bf16.msra.mxu0 %v4031
  %4049 = vmatpush.bf16.msra.mxu0 %v4030
  %4050 = vmatpush.bf16.msra.mxu0 %v4029
  %4051 = vmatpush.bf16.msra.mxu0 %v4028
  %4052 = vmatmul.bf16.gmra.mxu0 %v3395
  %v4053 = vpop.f32.mrf.mxu0
  %v4054 = vadd.f32 0.0, %v4053
  %v4055 = vpop.f32.mrf.mxu0
  %v4056 = vadd.f32 0.0, %v4055
  %4057 = vmatmul.bf16.gmra.mxu0 %v3396
  %v4058 = vpop.f32.mrf.mxu0
  %v4059 = vadd.f32 0.0, %v4058
  %v4060 = vpop.f32.mrf.mxu0
  %v4061 = vadd.f32 0.0, %v4060
  %4062 = vmatmul.bf16.gmra.mxu0 %v3397
  %v4063 = vpop.f32.mrf.mxu0
  %v4064 = vadd.f32 0.0, %v4063
  %v4065 = vpop.f32.mrf.mxu0
  %v4066 = vadd.f32 0.0, %v4065
  %4067 = vmatmul.bf16.gmra.mxu0 %v3398
  %v4068 = vpop.f32.mrf.mxu0
  %v4069 = vadd.f32 0.0, %v4068
  %v4070 = vpop.f32.mrf.mxu0
  %v4071 = vadd.f32 0.0, %v4070
  %4072 = vmatmul.bf16.gmra.mxu0 %v3399
  %v4073 = vpop.f32.mrf.mxu0
  %v4074 = vadd.f32 0.0, %v4073
  %v4075 = vpop.f32.mrf.mxu0
  %v4076 = vadd.f32 0.0, %v4075
  %4077 = vmatmul.bf16.gmra.mxu0 %v3400
  %v4078 = vpop.f32.mrf.mxu0
  %v4079 = vadd.f32 0.0, %v4078
  %v4080 = vpop.f32.mrf.mxu0
  %v4081 = vadd.f32 0.0, %v4080
  %4082 = vmatmul.bf16.gmra.mxu0 %v3401
  %v4083 = vpop.f32.mrf.mxu0
  %v4084 = vadd.f32 0.0, %v4083
  %v4085 = vpop.f32.mrf.mxu0
  %v4086 = vadd.f32 0.0, %v4085
  %4087 = vmatmul.bf16.gmra.mxu0 %v3402
  %v4088 = vpop.f32.mrf.mxu0
  %v4089 = vadd.f32 0.0, %v4088
  %v4090 = vpop.f32.mrf.mxu0
  %v4091 = vadd.f32 0.0, %v4090
  %4092 = vmatmul.bf16.gmra.mxu0 %v3403
  %v4093 = vpop.f32.mrf.mxu0
  %v4094 = vadd.f32 0.0, %v4093
  %v4095 = vpop.f32.mrf.mxu0
  %v4096 = vadd.f32 0.0, %v4095
  %4097 = vmatmul.bf16.gmra.mxu0 %v3404
  %v4098 = vpop.f32.mrf.mxu0
  %v4099 = vadd.f32 0.0, %v4098
  %v4100 = vpop.f32.mrf.mxu0
  %v4101 = vadd.f32 0.0, %v4100
  %4102 = vmatmul.bf16.gmra.mxu0 %v3405
  %v4103 = vpop.f32.mrf.mxu0
  %v4104 = vadd.f32 0.0, %v4103
  %v4105 = vpop.f32.mrf.mxu0
  %v4106 = vadd.f32 0.0, %v4105
  %4107 = vmatmul.bf16.gmra.mxu0 %v3406
  %v4108 = vpop.f32.mrf.mxu0
  %v4109 = vadd.f32 0.0, %v4108
  %v4110 = vpop.f32.mrf.mxu0
  %v4111 = vadd.f32 0.0, %v4110
  %4112 = vmatmul.bf16.gmra.mxu0 %v3407
  %v4113 = vpop.f32.mrf.mxu0
  %v4114 = vadd.f32 0.0, %v4113
  %v4115 = vpop.f32.mrf.mxu0
  %v4116 = vadd.f32 0.0, %v4115
  %4117 = vmatmul.bf16.gmra.mxu0 %v3408
  %v4118 = vpop.f32.mrf.mxu0
  %v4119 = vadd.f32 0.0, %v4118
  %v4120 = vpop.f32.mrf.mxu0
  %v4121 = vadd.f32 0.0, %v4120
  %4122 = vdwg.mxu0
  %v4123 = vadd.f32 %v3910, %v4054
  %v4124 = vadd.f32 %v3912, %v4056
  %v4125 = vadd.f32 %v3915, %v4059
  %v4126 = vadd.f32 %v3917, %v4061
  %v4127 = vadd.f32 %v3920, %v4064
  %v4128 = vadd.f32 %v3922, %v4066
  %v4129 = vadd.f32 %v3925, %v4069
  %v4130 = vadd.f32 %v3927, %v4071
  %v4131 = vadd.f32 %v3930, %v4074
  %v4132 = vadd.f32 %v3932, %v4076
  %v4133 = vadd.f32 %v3935, %v4079
  %v4134 = vadd.f32 %v3937, %v4081
  %v4135 = vadd.f32 %v3940, %v4084
  %v4136 = vadd.f32 %v3942, %v4086
  %v4137 = vadd.f32 %v3945, %v4089
  %v4138 = vadd.f32 %v3947, %v4091
  %v4139 = vadd.f32 %v3950, %v4094
  %v4140 = vadd.f32 %v3952, %v4096
  %v4141 = vadd.f32 %v3955, %v4099
  %v4142 = vadd.f32 %v3957, %v4101
  %v4143 = vadd.f32 %v3960, %v4104
  %v4144 = vadd.f32 %v3962, %v4106
  %v4145 = vadd.f32 %v3965, %v4109
  %v4146 = vadd.f32 %v3967, %v4111
  %v4147 = vadd.f32 %v3970, %v4114
  %v4148 = vadd.f32 %v3972, %v4116
  %v4149 = vadd.f32 %v3975, %v4119
  %v4150 = vadd.f32 %v3977, %v4121
  %v4151 = vadd.f32 %v3690, %v4123
  %v4152 = vadd.f32 %v3610, %v4124
  %v4153 = vadd.f32 %v3612, %v4125
  %v4154 = vadd.f32 %v3614, %v4126
  %v4155 = vadd.f32 %v3616, %v4127
  %v4156 = vadd.f32 %v3618, %v4128
  %v4157 = vadd.f32 %v3620, %v4129
  %v4158 = vadd.f32 %v3622, %v4130
  %v4159 = vadd.f32 %v3624, %v4131
  %v4160 = vadd.f32 %v3626, %v4132
  %v4161 = vadd.f32 %v3628, %v4133
  %v4162 = vadd.f32 %v3630, %v4134
  %v4163 = vadd.f32 %v3632, %v4135
  %v4164 = vadd.f32 %v3634, %v4136
  %v4165 = vadd.f32 %v3636, %v4137
  %v4166 = vadd.f32 %v3638, %v4138
  %v4167 = vadd.f32 %v3640, %v4139
  %v4168 = vadd.f32 %v3642, %v4140
  %v4169 = vadd.f32 %v3644, %v4141
  %v4170 = vadd.f32 %v3646, %v4142
  %v4171 = vadd.f32 %v3648, %v4143
  %v4172 = vadd.f32 %v3650, %v4144
  %v4173 = vadd.f32 %v3652, %v4145
  %v4174 = vadd.f32 %v3654, %v4146
  %v4175 = vadd.f32 %v3656, %v4147
  %v4176 = vadd.f32 %v3658, %v4148
  %v4177 = vadd.f32 %v3660, %v4149
  %v4178 = vadd.f32 %v3661, %v4150
  %s4179 = scalar_lea.vmem [#allocation3], 128
  %v4180 = vld [vmem:[%s4179] sm:$0xf]
  %v4181 = vld [vmem:[%s4179 + $0x4] sm:$0xf]
  %v4182 = vld [vmem:[%s4179 + $0x8] sm:$0xf]
  %v4183 = vld [vmem:[%s4179 + $0xc] sm:$0xf]
  %v4184 = vld [vmem:[%s4179 + $0x10] sm:$0xf]
  %v4185 = vld [vmem:[%s4179 + $0x14] sm:$0xf]
  %v4186 = vld [vmem:[%s4179 + $0x18] sm:$0xf]
  %v4187 = vld [vmem:[%s4179 + $0x1c] sm:$0xf]
  %v4188 = vld [vmem:[%s4179 + $0x20] sm:$0xf]
  %v4189 = vld [vmem:[%s4179 + $0x24] sm:$0xf]
  %v4190 = vld [vmem:[%s4179 + $0x28] sm:$0xf]
  %v4191 = vld [vmem:[%s4179 + $0x2c] sm:$0xf]
  %v4192 = vld [vmem:[%s4179 + $0x30] sm:$0xf]
  %v4193 = vld [vmem:[%s4179 + $0x34] sm:$0xf]
  %v4194 = vld [vmem:[%s4179 + $0x38] sm:$0xf]
  %v4195 = vld [vmem:[%s4179 + $0x3c] sm:$0xf]
  %s4196 = scalar_lea.vmem [#allocation3], 320
  %v4197 = vld [vmem:[%s4196] sm:$0xf]
  %v4198 = vld [vmem:[%s4196 + $0x4] sm:$0xf]
  %v4199 = vld [vmem:[%s4196 + $0x8] sm:$0xf]
  %v4200 = vld [vmem:[%s4196 + $0xc] sm:$0xf]
  %v4201 = vld [vmem:[%s4196 + $0x10] sm:$0xf]
  %v4202 = vld [vmem:[%s4196 + $0x14] sm:$0xf]
  %v4203 = vld [vmem:[%s4196 + $0x18] sm:$0xf]
  %v4204 = vld [vmem:[%s4196 + $0x1c] sm:$0xf]
  %v4205 = vld [vmem:[%s4196 + $0x20] sm:$0xf]
  %v4206 = vld [vmem:[%s4196 + $0x24] sm:$0xf]
  %v4207 = vld [vmem:[%s4196 + $0x28] sm:$0xf]
  %v4208 = vld [vmem:[%s4196 + $0x2c] sm:$0xf]
  %v4209 = vld [vmem:[%s4196 + $0x30] sm:$0xf]
  %v4210 = vld [vmem:[%s4196 + $0x34] sm:$0xf]
  %v4211 = vld [vmem:[%s4196 + $0x38] sm:$0xf]
  %v4212 = vld [vmem:[%s4196 + $0x3c] sm:$0xf]
  %v4229 = vunpack.c.l.b16 %v4197
  %v4230 = vunpack.c.l.b16 %v4198
  %v4231 = vunpack.c.l.b16 %v4199
  %v4232 = vunpack.c.l.b16 %v4200
  %v4233 = vunpack.c.l.b16 %v4201
  %v4234 = vunpack.c.l.b16 %v4202
  %v4235 = vunpack.c.l.b16 %v4203
  %v4236 = vunpack.c.l.b16 %v4204
  %v4237 = vunpack.c.l.b16 %v4205
  %v4238 = vunpack.c.l.b16 %v4206
  %v4239 = vunpack.c.l.b16 %v4207
  %v4240 = vunpack.c.l.b16 %v4208
  %v4241 = vunpack.c.l.b16 %v4209
  %v4242 = vunpack.c.l.b16 %v4210
  %v4243 = vunpack.c.l.b16 %v4211
  %v4244 = vunpack.c.l.b16 %v4212
  %v4245 = vpack.c.b16 %v4230, %v4229
  %v4246 = vpack.c.b16 %v4232, %v4231
  %v4247 = vpack.c.b16 %v4234, %v4233
  %v4248 = vpack.c.b16 %v4236, %v4235
  %v4249 = vpack.c.b16 %v4238, %v4237
  %v4250 = vpack.c.b16 %v4240, %v4239
  %v4251 = vpack.c.b16 %v4242, %v4241
  %v4252 = vpack.c.b16 %v4244, %v4243
  %4261 = vmatpush.bf16.msra.mxu0 %v4252
  %4262 = vmatpush.bf16.msra.mxu0 %v4251
  %4263 = vmatpush.bf16.msra.mxu0 %v4250
  %4264 = vmatpush.bf16.msra.mxu0 %v4249
  %4265 = vmatpush.bf16.msra.mxu0 %v4248
  %4266 = vmatpush.bf16.msra.mxu0 %v4247
  %4267 = vmatpush.bf16.msra.mxu0 %v4246
  %4268 = vmatpush.bf16.msra.mxu0 %v4245
  %4269 = vmatmul.bf16.gmra.mxu0 %v2928
  %v4270 = vpop.f32.mrf.mxu0
  %v4271 = vadd.f32 0.0, %v4270
  %v4272 = vpop.f32.mrf.mxu0
  %v4273 = vadd.f32 0.0, %v4272
  %4274 = vmatmul.bf16.gmra.mxu0 %v2929
  %v4275 = vpop.f32.mrf.mxu0
  %v4276 = vadd.f32 0.0, %v4275
  %v4277 = vpop.f32.mrf.mxu0
  %v4278 = vadd.f32 0.0, %v4277
  %4279 = vmatmul.bf16.gmra.mxu0 %v2930
  %v4280 = vpop.f32.mrf.mxu0
  %v4281 = vadd.f32 0.0, %v4280
  %v4282 = vpop.f32.mrf.mxu0
  %v4283 = vadd.f32 0.0, %v4282
  %4284 = vmatmul.bf16.gmra.mxu0 %v2931
  %v4285 = vpop.f32.mrf.mxu0
  %v4286 = vadd.f32 0.0, %v4285
  %v4287 = vpop.f32.mrf.mxu0
  %v4288 = vadd.f32 0.0, %v4287
  %4289 = vmatmul.bf16.gmra.mxu0 %v2932
  %v4290 = vpop.f32.mrf.mxu0
  %v4291 = vadd.f32 0.0, %v4290
  %v4292 = vpop.f32.mrf.mxu0
  %v4293 = vadd.f32 0.0, %v4292
  %4294 = vmatmul.bf16.gmra.mxu0 %v2933
  %v4295 = vpop.f32.mrf.mxu0
  %v4296 = vadd.f32 0.0, %v4295
  %v4297 = vpop.f32.mrf.mxu0
  %v4298 = vadd.f32 0.0, %v4297
  %4299 = vmatmul.bf16.gmra.mxu0 %v2934
  %v4300 = vpop.f32.mrf.mxu0
  %v4301 = vadd.f32 0.0, %v4300
  %v4302 = vpop.f32.mrf.mxu0
  %v4303 = vadd.f32 0.0, %v4302
  %4304 = vmatmul.bf16.gmra.mxu0 %v2935
  %v4305 = vpop.f32.mrf.mxu0
  %v4306 = vadd.f32 0.0, %v4305
  %v4307 = vpop.f32.mrf.mxu0
  %v4308 = vadd.f32 0.0, %v4307
  %4309 = vmatmul.bf16.gmra.mxu0 %v2936
  %v4310 = vpop.f32.mrf.mxu0
  %v4311 = vadd.f32 0.0, %v4310
  %v4312 = vpop.f32.mrf.mxu0
  %v4313 = vadd.f32 0.0, %v4312
  %4314 = vmatmul.bf16.gmra.mxu0 %v2937
  %v4315 = vpop.f32.mrf.mxu0
  %v4316 = vadd.f32 0.0, %v4315
  %v4317 = vpop.f32.mrf.mxu0
  %v4318 = vadd.f32 0.0, %v4317
  %4319 = vmatmul.bf16.gmra.mxu0 %v2938
  %v4320 = vpop.f32.mrf.mxu0
  %v4321 = vadd.f32 0.0, %v4320
  %v4322 = vpop.f32.mrf.mxu0
  %v4323 = vadd.f32 0.0, %v4322
  %4324 = vmatmul.bf16.gmra.mxu0 %v2939
  %v4325 = vpop.f32.mrf.mxu0
  %v4326 = vadd.f32 0.0, %v4325
  %v4327 = vpop.f32.mrf.mxu0
  %v4328 = vadd.f32 0.0, %v4327
  %4329 = vmatmul.bf16.gmra.mxu0 %v2940
  %v4330 = vpop.f32.mrf.mxu0
  %v4331 = vadd.f32 0.0, %v4330
  %v4332 = vpop.f32.mrf.mxu0
  %v4333 = vadd.f32 0.0, %v4332
  %4334 = vmatmul.bf16.gmra.mxu0 %v2941
  %v4335 = vpop.f32.mrf.mxu0
  %v4336 = vadd.f32 0.0, %v4335
  %v4337 = vpop.f32.mrf.mxu0
  %v4338 = vadd.f32 0.0, %v4337
  %4339 = vdwg.mxu0
  %v4356 = vunpack.c.l.b16 %v4180
  %v4357 = vunpack.c.l.b16 %v4181
  %v4358 = vunpack.c.l.b16 %v4182
  %v4359 = vunpack.c.l.b16 %v4183
  %v4360 = vunpack.c.l.b16 %v4184
  %v4361 = vunpack.c.l.b16 %v4185
  %v4362 = vunpack.c.l.b16 %v4186
  %v4363 = vunpack.c.l.b16 %v4187
  %v4364 = vunpack.c.l.b16 %v4188
  %v4365 = vunpack.c.l.b16 %v4189
  %v4366 = vunpack.c.l.b16 %v4190
  %v4367 = vunpack.c.l.b16 %v4191
  %v4368 = vunpack.c.l.b16 %v4192
  %v4369 = vunpack.c.l.b16 %v4193
  %v4370 = vunpack.c.l.b16 %v4194
  %v4371 = vunpack.c.l.b16 %v4195
  %v4372 = vpack.c.b16 %v4357, %v4356
  %v4373 = vpack.c.b16 %v4359, %v4358
  %v4374 = vpack.c.b16 %v4361, %v4360
  %v4375 = vpack.c.b16 %v4363, %v4362
  %v4376 = vpack.c.b16 %v4365, %v4364
  %v4377 = vpack.c.b16 %v4367, %v4366
  %v4378 = vpack.c.b16 %v4369, %v4368
  %v4379 = vpack.c.b16 %v4371, %v4370
  %4388 = vmatpush.bf16.msra.mxu0 %v4379
  %4389 = vmatpush.bf16.msra.mxu0 %v4378
  %4390 = vmatpush.bf16.msra.mxu0 %v4377
  %4391 = vmatpush.bf16.msra.mxu0 %v4376
  %4392 = vmatpush.bf16.msra.mxu0 %v4375
  %4393 = vmatpush.bf16.msra.mxu0 %v4374
  %4394 = vmatpush.bf16.msra.mxu0 %v4373
  %4395 = vmatpush.bf16.msra.mxu0 %v4372
  %4396 = vmatmul.bf16.gmra.mxu0 %v3139
  %v4397 = vpop.f32.mrf.mxu0
  %v4398 = vadd.f32 %v4271, %v4397
  %v4399 = vpop.f32.mrf.mxu0
  %v4400 = vadd.f32 %v4273, %v4399
  %4401 = vmatmul.bf16.gmra.mxu0 %v3140
  %v4402 = vpop.f32.mrf.mxu0
  %v4403 = vadd.f32 %v4276, %v4402
  %v4404 = vpop.f32.mrf.mxu0
  %v4405 = vadd.f32 %v4278, %v4404
  %4406 = vmatmul.bf16.gmra.mxu0 %v3141
  %v4407 = vpop.f32.mrf.mxu0
  %v4408 = vadd.f32 %v4281, %v4407
  %v4409 = vpop.f32.mrf.mxu0
  %v4410 = vadd.f32 %v4283, %v4409
  %4411 = vmatmul.bf16.gmra.mxu0 %v3142
  %v4412 = vpop.f32.mrf.mxu0
  %v4413 = vadd.f32 %v4286, %v4412
  %v4414 = vpop.f32.mrf.mxu0
  %v4415 = vadd.f32 %v4288, %v4414
  %4416 = vmatmul.bf16.gmra.mxu0 %v3143
  %v4417 = vpop.f32.mrf.mxu0
  %v4418 = vadd.f32 %v4291, %v4417
  %v4419 = vpop.f32.mrf.mxu0
  %v4420 = vadd.f32 %v4293, %v4419
  %4421 = vmatmul.bf16.gmra.mxu0 %v3144
  %v4422 = vpop.f32.mrf.mxu0
  %v4423 = vadd.f32 %v4296, %v4422
  %v4424 = vpop.f32.mrf.mxu0
  %v4425 = vadd.f32 %v4298, %v4424
  %4426 = vmatmul.bf16.gmra.mxu0 %v3145
  %v4427 = vpop.f32.mrf.mxu0
  %v4428 = vadd.f32 %v4301, %v4427
  %v4429 = vpop.f32.mrf.mxu0
  %v4430 = vadd.f32 %v4303, %v4429
  %4431 = vmatmul.bf16.gmra.mxu0 %v3146
  %v4432 = vpop.f32.mrf.mxu0
  %v4433 = vadd.f32 %v4306, %v4432
  %v4434 = vpop.f32.mrf.mxu0
  %v4435 = vadd.f32 %v4308, %v4434
  %4436 = vmatmul.bf16.gmra.mxu0 %v3147
  %v4437 = vpop.f32.mrf.mxu0
  %v4438 = vadd.f32 %v4311, %v4437
  %v4439 = vpop.f32.mrf.mxu0
  %v4440 = vadd.f32 %v4313, %v4439
  %4441 = vmatmul.bf16.gmra.mxu0 %v3148
  %v4442 = vpop.f32.mrf.mxu0
  %v4443 = vadd.f32 %v4316, %v4442
  %v4444 = vpop.f32.mrf.mxu0
  %v4445 = vadd.f32 %v4318, %v4444
  %4446 = vmatmul.bf16.gmra.mxu0 %v3149
  %v4447 = vpop.f32.mrf.mxu0
  %v4448 = vadd.f32 %v4321, %v4447
  %v4449 = vpop.f32.mrf.mxu0
  %v4450 = vadd.f32 %v4323, %v4449
  %4451 = vmatmul.bf16.gmra.mxu0 %v3150
  %v4452 = vpop.f32.mrf.mxu0
  %v4453 = vadd.f32 %v4326, %v4452
  %v4454 = vpop.f32.mrf.mxu0
  %v4455 = vadd.f32 %v4328, %v4454
  %4456 = vmatmul.bf16.gmra.mxu0 %v3151
  %v4457 = vpop.f32.mrf.mxu0
  %v4458 = vadd.f32 %v4331, %v4457
  %v4459 = vpop.f32.mrf.mxu0
  %v4460 = vadd.f32 %v4333, %v4459
  %4461 = vmatmul.bf16.gmra.mxu0 %v3152
  %v4462 = vpop.f32.mrf.mxu0
  %v4463 = vadd.f32 %v4336, %v4462
  %v4464 = vpop.f32.mrf.mxu0
  %v4465 = vadd.f32 %v4338, %v4464
  %4466 = vdwg.mxu0
  %s4467 = scalar_lea.vmem [#allocation3], 512
  %v4468 = vld [vmem:[%s4467] sm:$0xf]
  %v4469 = vld [vmem:[%s4467 + $0x4] sm:$0xf]
  %v4470 = vld [vmem:[%s4467 + $0x8] sm:$0xf]
  %v4471 = vld [vmem:[%s4467 + $0xc] sm:$0xf]
  %v4472 = vld [vmem:[%s4467 + $0x10] sm:$0xf]
  %v4473 = vld [vmem:[%s4467 + $0x14] sm:$0xf]
  %v4474 = vld [vmem:[%s4467 + $0x18] sm:$0xf]
  %v4475 = vld [vmem:[%s4467 + $0x1c] sm:$0xf]
  %v4476 = vld [vmem:[%s4467 + $0x20] sm:$0xf]
  %v4477 = vld [vmem:[%s4467 + $0x24] sm:$0xf]
  %v4478 = vld [vmem:[%s4467 + $0x28] sm:$0xf]
  %v4479 = vld [vmem:[%s4467 + $0x2c] sm:$0xf]
  %v4480 = vld [vmem:[%s4467 + $0x30] sm:$0xf]
  %v4481 = vld [vmem:[%s4467 + $0x34] sm:$0xf]
  %v4482 = vld [vmem:[%s4467 + $0x38] sm:$0xf]
  %v4483 = vld [vmem:[%s4467 + $0x3c] sm:$0xf]
  %v4500 = vunpack.c.l.b16 %v4468
  %v4501 = vunpack.c.l.b16 %v4469
  %v4502 = vunpack.c.l.b16 %v4470
  %v4503 = vunpack.c.l.b16 %v4471
  %v4504 = vunpack.c.l.b16 %v4472
  %v4505 = vunpack.c.l.b16 %v4473
  %v4506 = vunpack.c.l.b16 %v4474
  %v4507 = vunpack.c.l.b16 %v4475
  %v4508 = vunpack.c.l.b16 %v4476
  %v4509 = vunpack.c.l.b16 %v4477
  %v4510 = vunpack.c.l.b16 %v4478
  %v4511 = vunpack.c.l.b16 %v4479
  %v4512 = vunpack.c.l.b16 %v4480
  %v4513 = vunpack.c.l.b16 %v4481
  %v4514 = vunpack.c.l.b16 %v4482
  %v4515 = vunpack.c.l.b16 %v4483
  %v4516 = vpack.c.b16 %v4501, %v4500
  %v4517 = vpack.c.b16 %v4503, %v4502
  %v4518 = vpack.c.b16 %v4505, %v4504
  %v4519 = vpack.c.b16 %v4507, %v4506
  %v4520 = vpack.c.b16 %v4509, %v4508
  %v4521 = vpack.c.b16 %v4511, %v4510
  %v4522 = vpack.c.b16 %v4513, %v4512
  %v4523 = vpack.c.b16 %v4515, %v4514
  %4532 = vmatpush.bf16.msra.mxu0 %v4523
  %4533 = vmatpush.bf16.msra.mxu0 %v4522
  %4534 = vmatpush.bf16.msra.mxu0 %v4521
  %4535 = vmatpush.bf16.msra.mxu0 %v4520
  %4536 = vmatpush.bf16.msra.mxu0 %v4519
  %4537 = vmatpush.bf16.msra.mxu0 %v4518
  %4538 = vmatpush.bf16.msra.mxu0 %v4517
  %4539 = vmatpush.bf16.msra.mxu0 %v4516
  %4540 = vmatmul.bf16.gmra.mxu0 %v3395
  %v4541 = vpop.f32.mrf.mxu0
  %v4542 = vadd.f32 0.0, %v4541
  %v4543 = vpop.f32.mrf.mxu0
  %v4544 = vadd.f32 0.0, %v4543
  %4545 = vmatmul.bf16.gmra.mxu0 %v3396
  %v4546 = vpop.f32.mrf.mxu0
  %v4547 = vadd.f32 0.0, %v4546
  %v4548 = vpop.f32.mrf.mxu0
  %v4549 = vadd.f32 0.0, %v4548
  %4550 = vmatmul.bf16.gmra.mxu0 %v3397
  %v4551 = vpop.f32.mrf.mxu0
  %v4552 = vadd.f32 0.0, %v4551
  %v4553 = vpop.f32.mrf.mxu0
  %v4554 = vadd.f32 0.0, %v4553
  %4555 = vmatmul.bf16.gmra.mxu0 %v3398
  %v4556 = vpop.f32.mrf.mxu0
  %v4557 = vadd.f32 0.0, %v4556
  %v4558 = vpop.f32.mrf.mxu0
  %v4559 = vadd.f32 0.0, %v4558
  %4560 = vmatmul.bf16.gmra.mxu0 %v3399
  %v4561 = vpop.f32.mrf.mxu0
  %v4562 = vadd.f32 0.0, %v4561
  %v4563 = vpop.f32.mrf.mxu0
  %v4564 = vadd.f32 0.0, %v4563
  %4565 = vmatmul.bf16.gmra.mxu0 %v3400
  %v4566 = vpop.f32.mrf.mxu0
  %v4567 = vadd.f32 0.0, %v4566
  %v4568 = vpop.f32.mrf.mxu0
  %v4569 = vadd.f32 0.0, %v4568
  %4570 = vmatmul.bf16.gmra.mxu0 %v3401
  %v4571 = vpop.f32.mrf.mxu0
  %v4572 = vadd.f32 0.0, %v4571
  %v4573 = vpop.f32.mrf.mxu0
  %v4574 = vadd.f32 0.0, %v4573
  %4575 = vmatmul.bf16.gmra.mxu0 %v3402
  %v4576 = vpop.f32.mrf.mxu0
  %v4577 = vadd.f32 0.0, %v4576
  %v4578 = vpop.f32.mrf.mxu0
  %v4579 = vadd.f32 0.0, %v4578
  %4580 = vmatmul.bf16.gmra.mxu0 %v3403
  %v4581 = vpop.f32.mrf.mxu0
  %v4582 = vadd.f32 0.0, %v4581
  %v4583 = vpop.f32.mrf.mxu0
  %v4584 = vadd.f32 0.0, %v4583
  %4585 = vmatmul.bf16.gmra.mxu0 %v3404
  %v4586 = vpop.f32.mrf.mxu0
  %v4587 = vadd.f32 0.0, %v4586
  %v4588 = vpop.f32.mrf.mxu0
  %v4589 = vadd.f32 0.0, %v4588
  %4590 = vmatmul.bf16.gmra.mxu0 %v3405
  %v4591 = vpop.f32.mrf.mxu0
  %v4592 = vadd.f32 0.0, %v4591
  %v4593 = vpop.f32.mrf.mxu0
  %v4594 = vadd.f32 0.0, %v4593
  %4595 = vmatmul.bf16.gmra.mxu0 %v3406
  %v4596 = vpop.f32.mrf.mxu0
  %v4597 = vadd.f32 0.0, %v4596
  %v4598 = vpop.f32.mrf.mxu0
  %v4599 = vadd.f32 0.0, %v4598
  %4600 = vmatmul.bf16.gmra.mxu0 %v3407
  %v4601 = vpop.f32.mrf.mxu0
  %v4602 = vadd.f32 0.0, %v4601
  %v4603 = vpop.f32.mrf.mxu0
  %v4604 = vadd.f32 0.0, %v4603
  %4605 = vmatmul.bf16.gmra.mxu0 %v3408
  %v4606 = vpop.f32.mrf.mxu0
  %v4607 = vadd.f32 0.0, %v4606
  %v4608 = vpop.f32.mrf.mxu0
  %v4609 = vadd.f32 0.0, %v4608
  %4610 = vdwg.mxu0
  %v4611 = vadd.f32 %v4398, %v4542
  %v4612 = vadd.f32 %v4400, %v4544
  %v4613 = vadd.f32 %v4403, %v4547
  %v4614 = vadd.f32 %v4405, %v4549
  %v4615 = vadd.f32 %v4408, %v4552
  %v4616 = vadd.f32 %v4410, %v4554
  %v4617 = vadd.f32 %v4413, %v4557
  %v4618 = vadd.f32 %v4415, %v4559
  %v4619 = vadd.f32 %v4418, %v4562
  %v4620 = vadd.f32 %v4420, %v4564
  %v4621 = vadd.f32 %v4423, %v4567
  %v4622 = vadd.f32 %v4425, %v4569
  %v4623 = vadd.f32 %v4428, %v4572
  %v4624 = vadd.f32 %v4430, %v4574
  %v4625 = vadd.f32 %v4433, %v4577
  %v4626 = vadd.f32 %v4435, %v4579
  %v4627 = vadd.f32 %v4438, %v4582
  %v4628 = vadd.f32 %v4440, %v4584
  %v4629 = vadd.f32 %v4443, %v4587
  %v4630 = vadd.f32 %v4445, %v4589
  %v4631 = vadd.f32 %v4448, %v4592
  %v4632 = vadd.f32 %v4450, %v4594
  %v4633 = vadd.f32 %v4453, %v4597
  %v4634 = vadd.f32 %v4455, %v4599
  %v4635 = vadd.f32 %v4458, %v4602
  %v4636 = vadd.f32 %v4460, %v4604
  %v4637 = vadd.f32 %v4463, %v4607
  %v4638 = vadd.f32 %v4465, %v4609
  %v4667 = vrot.slane %v4611, 1
  %v4668 = vrot.slane %v4612, 1
  %v4669 = vsel %vm2157, %v4667, %v4668
  %v4670 = vrot.slane %v4613, 1
  %v4671 = vsel %vm2157, %v4668, %v4670
  %v4672 = vrot.slane %v4614, 1
  %v4673 = vsel %vm2157, %v4670, %v4672
  %v4674 = vrot.slane %v4615, 1
  %v4675 = vsel %vm2157, %v4672, %v4674
  %v4676 = vrot.slane %v4616, 1
  %v4677 = vsel %vm2157, %v4674, %v4676
  %v4678 = vrot.slane %v4617, 1
  %v4679 = vsel %vm2157, %v4676, %v4678
  %v4680 = vrot.slane %v4618, 1
  %v4681 = vsel %vm2157, %v4678, %v4680
  %v4682 = vrot.slane %v4619, 1
  %v4683 = vsel %vm2157, %v4680, %v4682
  %v4684 = vrot.slane %v4620, 1
  %v4685 = vsel %vm2157, %v4682, %v4684
  %v4686 = vrot.slane %v4621, 1
  %v4687 = vsel %vm2157, %v4684, %v4686
  %v4688 = vrot.slane %v4622, 1
  %v4689 = vsel %vm2157, %v4686, %v4688
  %v4690 = vrot.slane %v4623, 1
  %v4691 = vsel %vm2157, %v4688, %v4690
  %v4692 = vrot.slane %v4624, 1
  %v4693 = vsel %vm2157, %v4690, %v4692
  %v4694 = vrot.slane %v4625, 1
  %v4695 = vsel %vm2157, %v4692, %v4694
  %v4696 = vrot.slane %v4626, 1
  %v4697 = vsel %vm2157, %v4694, %v4696
  %v4698 = vrot.slane %v4627, 1
  %v4699 = vsel %vm2157, %v4696, %v4698
  %v4700 = vrot.slane %v4628, 1
  %v4701 = vsel %vm2157, %v4698, %v4700
  %v4702 = vrot.slane %v4629, 1
  %v4703 = vsel %vm2157, %v4700, %v4702
  %v4704 = vrot.slane %v4630, 1
  %v4705 = vsel %vm2157, %v4702, %v4704
  %v4706 = vrot.slane %v4631, 1
  %v4707 = vsel %vm2157, %v4704, %v4706
  %v4708 = vrot.slane %v4632, 1
  %v4709 = vsel %vm2157, %v4706, %v4708
  %v4710 = vrot.slane %v4633, 1
  %v4711 = vsel %vm2157, %v4708, %v4710
  %v4712 = vrot.slane %v4634, 1
  %v4713 = vsel %vm2157, %v4710, %v4712
  %v4714 = vrot.slane %v4635, 1
  %v4715 = vsel %vm2157, %v4712, %v4714
  %v4716 = vrot.slane %v4636, 1
  %v4717 = vsel %vm2157, %v4714, %v4716
  %v4718 = vrot.slane %v4637, 1
  %v4719 = vsel %vm2157, %v4716, %v4718
  %v4720 = vrot.slane %v4638, 1
  %v4721 = vsel %vm2157, %v4718, %v4720
  %v4751 = vsel %vm2157, %v4720, %v4667
  %v4752 = vadd.f32 %v4151, %v4669
  %v4753 = vadd.f32 %v4152, %v4671
  %v4754 = vadd.f32 %v4153, %v4673
  %v4755 = vadd.f32 %v4154, %v4675
  %v4756 = vadd.f32 %v4155, %v4677
  %v4757 = vadd.f32 %v4156, %v4679
  %v4758 = vadd.f32 %v4157, %v4681
  %v4759 = vadd.f32 %v4158, %v4683
  %v4760 = vadd.f32 %v4159, %v4685
  %v4761 = vadd.f32 %v4160, %v4687
  %v4762 = vadd.f32 %v4161, %v4689
  %v4763 = vadd.f32 %v4162, %v4691
  %v4764 = vadd.f32 %v4163, %v4693
  %v4765 = vadd.f32 %v4164, %v4695
  %v4766 = vadd.f32 %v4165, %v4697
  %v4767 = vadd.f32 %v4166, %v4699
  %v4768 = vadd.f32 %v4167, %v4701
  %v4769 = vadd.f32 %v4168, %v4703
  %v4770 = vadd.f32 %v4169, %v4705
  %v4771 = vadd.f32 %v4170, %v4707
  %v4772 = vadd.f32 %v4171, %v4709
  %v4773 = vadd.f32 %v4172, %v4711
  %v4774 = vadd.f32 %v4173, %v4713
  %v4775 = vadd.f32 %v4174, %v4715
  %v4776 = vadd.f32 %v4175, %v4717
  %v4777 = vadd.f32 %v4176, %v4719
  %v4778 = vadd.f32 %v4177, %v4721
  %v4779 = vadd.f32 %v4178, %v4751
  %v4780 = vmul.f32 %v4752, %v2274
  %v4781 = vmul.f32 %v4753, %v2279
  %v4782 = vmul.f32 %v4754, %v2284
  %v4783 = vmul.f32 %v4755, %v2289
  %v4784 = vmul.f32 %v4756, %v2294
  %v4785 = vmul.f32 %v4757, %v2299
  %v4786 = vmul.f32 %v4758, %v2304
  %v4787 = vmul.f32 %v4759, %v2309
  %v4788 = vmul.f32 %v4760, %v2314
  %v4789 = vmul.f32 %v4761, %v2319
  %v4790 = vmul.f32 %v4762, %v2324
  %v4791 = vmul.f32 %v4763, %v2329
  %v4792 = vmul.f32 %v4764, %v2334
  %v4793 = vmul.f32 %v4765, %v2339
  %v4794 = vmul.f32 %v4766, %v2344
  %v4795 = vmul.f32 %v4767, %v2349
  %v4796 = vmul.f32 %v4768, %v2354
  %v4797 = vmul.f32 %v4769, %v2359
  %v4798 = vmul.f32 %v4770, %v2364
  %v4799 = vmul.f32 %v4771, %v2369
  %v4800 = vmul.f32 %v4772, %v2374
  %v4801 = vmul.f32 %v4773, %v2379
  %v4802 = vmul.f32 %v4774, %v2384
  %v4803 = vmul.f32 %v4775, %v2389
  %v4804 = vmul.f32 %v4776, %v2394
  %v4805 = vmul.f32 %v4777, %v2399
  %v4806 = vmul.f32 %v4778, %v2404
  %v4807 = vmul.f32 %v4779, %v2409
  %v4808 = vadd.f32 %v4780, %v4781
  %v4809 = vadd.f32 %v4808, %v4782
  %v4810 = vadd.f32 %v4809, %v4783
  %v4811 = vadd.f32 %v4810, %v4784
  %v4812 = vadd.f32 %v4811, %v4785
  %v4813 = vadd.f32 %v4812, %v4786
  %v4814 = vadd.f32 %v4813, %v4787
  %v4815 = vadd.f32 %v4814, %v4788
  %v4816 = vadd.f32 %v4815, %v4789
  %v4817 = vadd.f32 %v4816, %v4790
  %v4818 = vadd.f32 %v4817, %v4791
  %v4819 = vadd.f32 %v4818, %v4792
  %v4820 = vadd.f32 %v4819, %v4793
  %v4821 = vadd.f32 %v4820, %v4794
  %v4822 = vadd.f32 %v4821, %v4795
  %v4823 = vadd.f32 %v4822, %v4796
  %v4824 = vadd.f32 %v4823, %v4797
  %v4825 = vadd.f32 %v4824, %v4798
  %v4826 = vadd.f32 %v4825, %v4799
  %v4827 = vadd.f32 %v4826, %v4800
  %v4828 = vadd.f32 %v4827, %v4801
  %v4829 = vadd.f32 %v4828, %v4802
  %v4830 = vadd.f32 %v4829, %v4803
  %v4831 = vadd.f32 %v4830, %v4804
  %v4832 = vadd.f32 %v4831, %v4805
  %v4833 = vadd.f32 %v4832, %v4806
  %v4834 = vadd.f32 %v4833, %v4807
  %v4835 = vrot.slane %v4834, 4
  %v4836 = vadd.f32 %v4834, %v4835
  %v4837 = vrot.slane %v4836, 2
  %v4838 = vadd.f32 %v4836, %v4837
  %v4839 = vrot.slane %v4838, 1
  %v4840 = vadd.f32 %v4838, %v4839
  %v4841 = vmul.f32 %v4840, 0.0051020407
  %v4842 = vsub.f32 %v4752, %v4841
  %v4843 = vsub.f32 %v4753, %v4841
  %v4844 = vsub.f32 %v4754, %v4841
  %v4845 = vsub.f32 %v4755, %v4841
  %v4846 = vsub.f32 %v4756, %v4841
  %v4847 = vsub.f32 %v4757, %v4841
  %v4848 = vsub.f32 %v4758, %v4841
  %v4849 = vsub.f32 %v4759, %v4841
  %v4850 = vsub.f32 %v4760, %v4841
  %v4851 = vsub.f32 %v4761, %v4841
  %v4852 = vsub.f32 %v4762, %v4841
  %v4853 = vsub.f32 %v4763, %v4841
  %v4854 = vsub.f32 %v4764, %v4841
  %v4855 = vsub.f32 %v4765, %v4841
  %v4856 = vsub.f32 %v4766, %v4841
  %v4857 = vsub.f32 %v4767, %v4841
  %v4858 = vsub.f32 %v4768, %v4841
  %v4859 = vsub.f32 %v4769, %v4841
  %v4860 = vsub.f32 %v4770, %v4841
  %v4861 = vsub.f32 %v4771, %v4841
  %v4862 = vsub.f32 %v4772, %v4841
  %v4863 = vsub.f32 %v4773, %v4841
  %v4864 = vsub.f32 %v4774, %v4841
  %v4865 = vsub.f32 %v4775, %v4841
  %v4866 = vsub.f32 %v4776, %v4841
  %v4867 = vsub.f32 %v4777, %v4841
  %v4868 = vsub.f32 %v4778, %v4841
  %v4869 = vsub.f32 %v4779, %v4841
  %v4870 = vmul.f32 %v4842, %v2274
  %v4871 = vmul.f32 %v4843, %v2279
  %v4872 = vmul.f32 %v4844, %v2284
  %v4873 = vmul.f32 %v4845, %v2289
  %v4874 = vmul.f32 %v4846, %v2294
  %v4875 = vmul.f32 %v4847, %v2299
  %v4876 = vmul.f32 %v4848, %v2304
  %v4877 = vmul.f32 %v4849, %v2309
  %v4878 = vmul.f32 %v4850, %v2314
  %v4879 = vmul.f32 %v4851, %v2319
  %v4880 = vmul.f32 %v4852, %v2324
  %v4881 = vmul.f32 %v4853, %v2329
  %v4882 = vmul.f32 %v4854, %v2334
  %v4883 = vmul.f32 %v4855, %v2339
  %v4884 = vmul.f32 %v4856, %v2344
  %v4885 = vmul.f32 %v4857, %v2349
  %v4886 = vmul.f32 %v4858, %v2354
  %v4887 = vmul.f32 %v4859, %v2359
  %v4888 = vmul.f32 %v4860, %v2364
  %v4889 = vmul.f32 %v4861, %v2369
  %v4890 = vmul.f32 %v4862, %v2374
  %v4891 = vmul.f32 %v4863, %v2379
  %v4892 = vmul.f32 %v4864, %v2384
  %v4893 = vmul.f32 %v4865, %v2389
  %v4894 = vmul.f32 %v4866, %v2394
  %v4895 = vmul.f32 %v4867, %v2399
  %v4896 = vmul.f32 %v4868, %v2404
  %v4897 = vmul.f32 %v4869, %v2409
  %v4898 = vmul.f32 %v4870, %v4870
  %v4899 = vmul.f32 %v4871, %v4871
  %v4900 = vmul.f32 %v4872, %v4872
  %v4901 = vmul.f32 %v4873, %v4873
  %v4902 = vmul.f32 %v4874, %v4874
  %v4903 = vmul.f32 %v4875, %v4875
  %v4904 = vmul.f32 %v4876, %v4876
  %v4905 = vmul.f32 %v4877, %v4877
  %v4906 = vmul.f32 %v4878, %v4878
  %v4907 = vmul.f32 %v4879, %v4879
  %v4908 = vmul.f32 %v4880, %v4880
  %v4909 = vmul.f32 %v4881, %v4881
  %v4910 = vmul.f32 %v4882, %v4882
  %v4911 = vmul.f32 %v4883, %v4883
  %v4912 = vmul.f32 %v4884, %v4884
  %v4913 = vmul.f32 %v4885, %v4885
  %v4914 = vmul.f32 %v4886, %v4886
  %v4915 = vmul.f32 %v4887, %v4887
  %v4916 = vmul.f32 %v4888, %v4888
  %v4917 = vmul.f32 %v4889, %v4889
  %v4918 = vmul.f32 %v4890, %v4890
  %v4919 = vmul.f32 %v4891, %v4891
  %v4920 = vmul.f32 %v4892, %v4892
  %v4921 = vmul.f32 %v4893, %v4893
  %v4922 = vmul.f32 %v4894, %v4894
  %v4923 = vmul.f32 %v4895, %v4895
  %v4924 = vmul.f32 %v4896, %v4896
  %v4925 = vmul.f32 %v4897, %v4897
  %v4926 = vadd.f32 %v4898, %v4899
  %v4927 = vadd.f32 %v4926, %v4900
  %v4928 = vadd.f32 %v4927, %v4901
  %v4929 = vadd.f32 %v4928, %v4902
  %v4930 = vadd.f32 %v4929, %v4903
  %v4931 = vadd.f32 %v4930, %v4904
  %v4932 = vadd.f32 %v4931, %v4905
  %v4933 = vadd.f32 %v4932, %v4906
  %v4934 = vadd.f32 %v4933, %v4907
  %v4935 = vadd.f32 %v4934, %v4908
  %v4936 = vadd.f32 %v4935, %v4909
  %v4937 = vadd.f32 %v4936, %v4910
  %v4938 = vadd.f32 %v4937, %v4911
  %v4939 = vadd.f32 %v4938, %v4912
  %v4940 = vadd.f32 %v4939, %v4913
  %v4941 = vadd.f32 %v4940, %v4914
  %v4942 = vadd.f32 %v4941, %v4915
  %v4943 = vadd.f32 %v4942, %v4916
  %v4944 = vadd.f32 %v4943, %v4917
  %v4945 = vadd.f32 %v4944, %v4918
  %v4946 = vadd.f32 %v4945, %v4919
  %v4947 = vadd.f32 %v4946, %v4920
  %v4948 = vadd.f32 %v4947, %v4921
  %v4949 = vadd.f32 %v4948, %v4922
  %v4950 = vadd.f32 %v4949, %v4923
  %v4951 = vadd.f32 %v4950, %v4924
  %v4952 = vadd.f32 %v4951, %v4925
  %v4953 = vrot.slane %v4952, 4
  %v4954 = vadd.f32 %v4952, %v4953
  %v4955 = vrot.slane %v4954, 2
  %v4956 = vadd.f32 %v4954, %v4955
  %v4957 = vrot.slane %v4956, 1
  %v4958 = vadd.f32 %v4956, %v4957
  %v4959 = vmul.f32 %v4958, 0.0051020407
  %v4960 = vadd.f32 %v4959, 1e-05
  %v4961 = vrsqrt.pop %v4960
  %v4962 = vmul.f32 %v4961, %v4960
  %v4963 = vmul.f32 %v4962, %v4961
  %v4964 = vmul.f32 0.5, %v4963
  %v4965 = vsub.f32 1.5, %v4964
  %v4966 = vmul.f32 %v4961, %v4965
  %vm4967 = vweird.f32 %v4960
  %vm4968 = vweird.f32 %v4961
  %vm4969 = vmor %vm4967, %vm4968
  %v4970 = vsel %vm4969, %v4961, %v4966
  %v4971 = vmul.f32 %v4970, %v2781
  %v4972 = vperm.slane %v4971, 0
  %v4973 = vmul.f32 %v4870, %v4972
  %v4974 = vmul.f32 %v4871, %v4972
  %v4975 = vmul.f32 %v4872, %v4972
  %v4976 = vmul.f32 %v4873, %v4972
  %v4977 = vmul.f32 %v4874, %v4972
  %v4978 = vmul.f32 %v4875, %v4972
  %v4979 = vmul.f32 %v4876, %v4972
  %v4980 = vmul.f32 %v4877, %v4972
  %v4981 = vmul.f32 %v4878, %v4972
  %v4982 = vmul.f32 %v4879, %v4972
  %v4983 = vmul.f32 %v4880, %v4972
  %v4984 = vmul.f32 %v4881, %v4972
  %v4985 = vmul.f32 %v4882, %v4972
  %v4986 = vmul.f32 %v4883, %v4972
  %v4987 = vmul.f32 %v4884, %v4972
  %v4988 = vmul.f32 %v4885, %v4972
  %v4989 = vmul.f32 %v4886, %v4972
  %v4990 = vmul.f32 %v4887, %v4972
  %v4991 = vmul.f32 %v4888, %v4972
  %v4992 = vmul.f32 %v4889, %v4972
  %v4993 = vmul.f32 %v4890, %v4972
  %v4994 = vmul.f32 %v4891, %v4972
  %v4995 = vmul.f32 %v4892, %v4972
  %v4996 = vmul.f32 %v4893, %v4972
  %v4997 = vmul.f32 %v4894, %v4972
  %v4998 = vmul.f32 %v4895, %v4972
  %v4999 = vmul.f32 %v4896, %v4972
  %v5000 = vmul.f32 %v4897, %v4972
  %v5002 = vperm.slane %v2782, 0
  %v5004 = vadd.f32 %v4973, %v5002
  %v5005 = vadd.f32 %v4974, %v5002
  %v5006 = vadd.f32 %v4975, %v5002
  %v5007 = vadd.f32 %v4976, %v5002
  %v5008 = vadd.f32 %v4977, %v5002
  %v5009 = vadd.f32 %v4978, %v5002
  %v5010 = vadd.f32 %v4979, %v5002
  %v5011 = vadd.f32 %v4980, %v5002
  %v5012 = vadd.f32 %v4981, %v5002
  %v5013 = vadd.f32 %v4982, %v5002
  %v5014 = vadd.f32 %v4983, %v5002
  %v5015 = vadd.f32 %v4984, %v5002
  %v5016 = vadd.f32 %v4985, %v5002
  %v5017 = vadd.f32 %v4986, %v5002
  %v5018 = vadd.f32 %v4987, %v5002
  %v5019 = vadd.f32 %v4988, %v5002
  %v5020 = vadd.f32 %v4989, %v5002
  %v5021 = vadd.f32 %v4990, %v5002
  %v5022 = vadd.f32 %v4991, %v5002
  %v5023 = vadd.f32 %v4992, %v5002
  %v5024 = vadd.f32 %v4993, %v5002
  %v5025 = vadd.f32 %v4994, %v5002
  %v5026 = vadd.f32 %v4995, %v5002
  %v5027 = vadd.f32 %v4996, %v5002
  %v5028 = vadd.f32 %v4997, %v5002
  %v5029 = vadd.f32 %v4998, %v5002
  %v5030 = vadd.f32 %v4999, %v5002
  %v5031 = vadd.f32 %v5000, %v5002
  %v5032 = vmax.f32 %v5004, 0.0
  %v5033 = vmax.f32 %v5005, 0.0
  %v5034 = vmax.f32 %v5006, 0.0
  %v5035 = vmax.f32 %v5007, 0.0
  %v5036 = vmax.f32 %v5008, 0.0
  %v5037 = vmax.f32 %v5009, 0.0
  %v5038 = vmax.f32 %v5010, 0.0
  %v5039 = vmax.f32 %v5011, 0.0
  %v5040 = vmax.f32 %v5012, 0.0
  %v5041 = vmax.f32 %v5013, 0.0
  %v5042 = vmax.f32 %v5014, 0.0
  %v5043 = vmax.f32 %v5015, 0.0
  %v5044 = vmax.f32 %v5016, 0.0
  %v5045 = vmax.f32 %v5017, 0.0
  %v5046 = vmax.f32 %v5018, 0.0
  %v5047 = vmax.f32 %v5019, 0.0
  %v5048 = vmax.f32 %v5020, 0.0
  %v5049 = vmax.f32 %v5021, 0.0
  %v5050 = vmax.f32 %v5022, 0.0
  %v5051 = vmax.f32 %v5023, 0.0
  %v5052 = vmax.f32 %v5024, 0.0
  %v5053 = vmax.f32 %v5025, 0.0
  %v5054 = vmax.f32 %v5026, 0.0
  %v5055 = vmax.f32 %v5027, 0.0
  %v5056 = vmax.f32 %v5028, 0.0
  %v5057 = vmax.f32 %v5029, 0.0
  %v5058 = vmax.f32 %v5030, 0.0
  %v5059 = vmax.f32 %v5031, 0.0
  %v5060 = vmul.f32 %v5032, %v2274
  %v5061 = vmul.f32 %v5033, %v2279
  %v5062 = vmul.f32 %v5034, %v2284
  %v5063 = vmul.f32 %v5035, %v2289
  %v5064 = vmul.f32 %v5036, %v2294
  %v5065 = vmul.f32 %v5037, %v2299
  %v5066 = vmul.f32 %v5038, %v2304
  %v5067 = vmul.f32 %v5039, %v2309
  %v5068 = vmul.f32 %v5040, %v2314
  %v5069 = vmul.f32 %v5041, %v2319
  %v5070 = vmul.f32 %v5042, %v2324
  %v5071 = vmul.f32 %v5043, %v2329
  %v5072 = vmul.f32 %v5044, %v2334
  %v5073 = vmul.f32 %v5045, %v2339
  %v5074 = vmul.f32 %v5046, %v2344
  %v5075 = vmul.f32 %v5047, %v2349
  %v5076 = vmul.f32 %v5048, %v2354
  %v5077 = vmul.f32 %v5049, %v2359
  %v5078 = vmul.f32 %v5050, %v2364
  %v5079 = vmul.f32 %v5051, %v2369
  %v5080 = vmul.f32 %v5052, %v2374
  %v5081 = vmul.f32 %v5053, %v2379
  %v5082 = vmul.f32 %v5054, %v2384
  %v5083 = vmul.f32 %v5055, %v2389
  %v5084 = vmul.f32 %v5056, %v2394
  %v5085 = vmul.f32 %v5057, %v2399
  %v5086 = vmul.f32 %v5058, %v2404
  %v5087 = vmul.f32 %v5059, %v2409
  %5088 = vst [vmem:[%s8] sm:$0xff] %v5060
  %5089 = vst [vmem:[%s8 + $0x8] sm:$0xff] %v5061
  %5090 = vst [vmem:[%s8 + $0x10] sm:$0xff] %v5062
  %5091 = vst [vmem:[%s8 + $0x18] sm:$0xff] %v5063
  %5092 = vst [vmem:[%s8 + $0x20] sm:$0xff] %v5064
  %5093 = vst [vmem:[%s8 + $0x28] sm:$0xff] %v5065
  %5094 = vst [vmem:[%s8 + $0x30] sm:$0xff] %v5066
  %5095 = vst [vmem:[%s8 + $0x38] sm:$0xff] %v5067
  %5096 = vst [vmem:[%s8 + $0x40] sm:$0xff] %v5068
  %5097 = vst [vmem:[%s8 + $0x48] sm:$0xff] %v5069
  %5098 = vst [vmem:[%s8 + $0x50] sm:$0xff] %v5070
  %5099 = vst [vmem:[%s8 + $0x58] sm:$0xff] %v5071
  %5100 = vst [vmem:[%s8 + $0x60] sm:$0xff] %v5072
  %5101 = vst [vmem:[%s8 + $0x68] sm:$0xff] %v5073
  %5102 = vst [vmem:[%s8 + $0x70] sm:$0xff] %v5074
  %5103 = vst [vmem:[%s8 + $0x78] sm:$0xff] %v5075
  %5104 = vst [vmem:[%s8 + $0x80] sm:$0xff] %v5076
  %5105 = vst [vmem:[%s8 + $0x88] sm:$0xff] %v5077
  %5106 = vst [vmem:[%s8 + $0x90] sm:$0xff] %v5078
  %5107 = vst [vmem:[%s8 + $0x98] sm:$0xff] %v5079
  %5108 = vst [vmem:[%s8 + $0xa0] sm:$0xff] %v5080
  %5109 = vst [vmem:[%s8 + $0xa8] sm:$0xff] %v5081
  %5110 = vst [vmem:[%s8 + $0xb0] sm:$0xff] %v5082
  %5111 = vst [vmem:[%s8 + $0xb8] sm:$0xff] %v5083
  %5112 = vst [vmem:[%s8 + $0xc0] sm:$0xff] %v5084
  %5113 = vst [vmem:[%s8 + $0xc8] sm:$0xff] %v5085
  %5114 = vst [vmem:[%s8 + $0xd0] sm:$0xff] %v5086
  %5115 = vst [vmem:[%s8 + $0xd8] sm:$0xff] %v5087
  // Predicated region
  $region64: #{forward.1} parent=0 // pred_check
    _
  $region65: #{forward.1} parent=0 // pred_check_branch
    %5117 = sbr.rel (0) target = $region67
  $region66: #{forward.1} parent=0 // pred_region
    _
  $region67: #{forward.1} parent=0 // pred_fallthru
    _
  // Predicated region
  $region68: #{forward.1} parent=0 // pred_check
    _
  $region69: #{forward.1} parent=0 // pred_check_branch
    %5119 = sbr.rel (0) target = $region71
  $region70: #{forward.1} parent=0 // pred_region
    _
  $region71: #{forward.1} parent=0 // pred_fallthru
    _
  %5120 = vsyncmov [#allocation4]
  %s5121 = vpop.sfrf %5120
  %p5122 = scmp.eq.s32.totalorder %s5121, 0
  %p5123 = pneg %p5122
  %5125 = shalt.err (%p5123)
  %s5126 = scalar_lea.sflag [#allocation4], 1
  %5127 = vsyncmov %s5126
  %s5128 = vpop.sfrf %5127
  %p5129 = scmp.eq.s32.totalorder %s5128, 0
  %p5130 = pneg %p5129
  %5132 = shalt.err (%p5130)

</llo_original>
